<compile_context>
chip_gen: v7x
topology: tpu7x:2x2x1
jax: 0.10.0
libtpu: 0.0.40
codegen_flags: <defaults>
</compile_context>

<pallas_src>
import functools
import math

import jax
import jax.numpy as jnp
from jax.experimental import pallas as pl
from jax.experimental.pallas import tpu as pltpu

# ----------------------------- model config ---------------------------------
EMBED_DIM = 32          # config.hidden_size
NUM_HEADS = 4           # config.num_attention_heads
HEAD_DIM = EMBED_DIM // NUM_HEADS
SCALE = HEAD_DIM ** -0.5
LN_EPS = 1e-5
T = 8                   # temporal length
NUM_CLS = 1
QKV_PAD = ((3 * EMBED_DIM + 127) // 128) * 128   # pad fused QKV width to 128 lanes


# ------------------------------- kernel -------------------------------------
def _clip_attn_time_kernel(x_ref, lnw_ref, lnb_ref, wqkv_ref, bqkv_ref,
                           wot_ref, bot_ref, out_ref):
    # x_ref block: (Gb*T, M) -- Gb temporal groups stacked along the rows.
    x = x_ref[...]                                            # residual rows
    rows = x.shape[0]
    gb = rows // T

    lnw = lnw_ref[...]                                        # (1, M)
    lnb = lnb_ref[...]                                        # (1, M)

    # --- LayerNorm over the embedding axis (f32) ---
    mu = jnp.mean(x, axis=-1, keepdims=True)
    xc = x - mu
    var = jnp.mean(xc * xc, axis=-1, keepdims=True)
    xn = xc * jax.lax.rsqrt(var + LN_EPS) * lnw + lnb         # (rows, M)

    # --- Fused Q|K|V projection (single big matmul, lane-dense 128-wide out) ---
    qkv = jnp.dot(xn, wqkv_ref[...],
                  preferred_element_type=jnp.float32) + bqkv_ref[...]
    q = qkv[:, :EMBED_DIM] * SCALE
    k = qkv[:, EMBED_DIM:2 * EMBED_DIM]
    v = qkv[:, 2 * EMBED_DIM:3 * EMBED_DIM]

    # --- Per-head attention, batched over all Gb groups in this block ---
    head_outs = []
    for h in range(NUM_HEADS):
        lo = h * HEAD_DIM
        qh = q[:, lo:lo + HEAD_DIM].reshape(gb, T, HEAD_DIM)
        kh = k[:, lo:lo + HEAD_DIM].reshape(gb, T, HEAD_DIM)
        vh = v[:, lo:lo + HEAD_DIM].reshape(gb, T, HEAD_DIM)
        s = jnp.einsum('gtd,gsd->gts', qh, kh,
                       preferred_element_type=jnp.float32)    # (gb, T, T)
        s = s - jnp.max(s, axis=-1, keepdims=True)
        p = jnp.exp(s)
        p = p / jnp.sum(p, axis=-1, keepdims=True)
        oh = jnp.einsum('gts,gsd->gtd', p, vh,
                        preferred_element_type=jnp.float32)   # (gb, T, hd)
        head_outs.append(oh.reshape(rows, HEAD_DIM))
    attn = jnp.concatenate(head_outs, axis=-1)                # (rows, M)

    # --- Fused out_proj . temporal_fc, then residual add ---
    y = jnp.dot(attn, wot_ref[...],
                preferred_element_type=jnp.float32) + bot_ref[...]
    out_ref[...] = x + y


# ------------------------------- wrapper -------------------------------------
def _fuse_params(params):
    """Fold the 12 raw parameters into 6 fused ones used by the kernel."""
    (lnw, lnb, wq, bq, wk, bk, wv, bv, wo, bo, wt, bt) = params
    M = wq.shape[0]
    wqkv = jnp.concatenate([wq, wk, wv], axis=1)              # (M, 3M)
    bqkv = jnp.concatenate([bq, bk, bv], axis=1)              # (1, 3M)
    pad = QKV_PAD - 3 * M
    wqkv = jnp.pad(wqkv, ((0, 0), (0, pad)))                  # lane-dense 128-wide
    bqkv = jnp.pad(bqkv, ((0, 0), (0, pad)))
    wot = wo @ wt                                             # (M, M)
    bot = bo @ wt + bt                                        # (1, M)
    return lnw, lnb, wqkv, bqkv, wot, bot


@functools.partial(jax.jit, static_argnames=("t", "num_cls", "groups_per_block"))
def clip_layer_attn_time(x, params, *, t, num_cls, groups_per_block=128):
    """x: [B, num_cls + P*t, M] float32.  params: raw 12-tuple (see make_params)."""
    B, S, M = x.shape
    PT = S - num_cls
    P = PT // t
    BP = B * P

    cls_tok = x[:, :num_cls, :]
    tokens = x[:, num_cls:, :]                                # [B, P*t, M]
    # 'b (p t) m -> (b p) t m', then flatten groups*time into rows.
    xg = tokens.reshape(BP, t, M)

    lnw, lnb, wqkv, bqkv, wot, bot = _fuse_params(params)

    gp = max(1, min(groups_per_block, BP))                    # groups per block
    nblk = math.ceil(BP / gp)
    BP_pad = nblk * gp
    if BP_pad != BP:
        # zero-pad the group axis so the grid divides exactly (padded rows are
        # numerically benign and dropped afterwards)
        xg = jnp.concatenate(
            [xg, jnp.zeros((BP_pad - BP, t, M), xg.dtype)], axis=0)

    rows_per_block = gp * t
    xf = xg.reshape(BP_pad * t, M)

    mat_qkv_spec = pl.BlockSpec((M, QKV_PAD), lambda i: (0, 0))
    vec_qkv_spec = pl.BlockSpec((1, QKV_PAD), lambda i: (0, 0))
    mat_spec = pl.BlockSpec((M, M), lambda i: (0, 0))
    vec_spec = pl.BlockSpec((1, M), lambda i: (0, 0))

    out_f = pl.pallas_call(
        _clip_attn_time_kernel,
        out_shape=jax.ShapeDtypeStruct((BP_pad * t, M), jnp.float32),
        grid_spec=pltpu.PrefetchScalarGridSpec(
            num_scalar_prefetch=0,
            grid=(nblk,),
            in_specs=[
                pl.BlockSpec((rows_per_block, M), lambda i: (i, 0)),   # x slab
                vec_spec, vec_spec,                                     # ln w, b
                mat_qkv_spec, vec_qkv_spec,                             # fused qkv
                mat_spec, vec_spec,                                     # fused out.temporal
            ],
            out_specs=pl.BlockSpec((rows_per_block, M), lambda i: (i, 0)),
        ),
        compiler_params=pltpu.CompilerParams(
            dimension_semantics=("parallel",)),
    )(xf, lnw, lnb, wqkv, bqkv, wot, bot)

    # '(b p) t m -> b (p t) m', drop any group padding.
    out_tokens = out_f[:BP * t].reshape(B, PT, M)
    # TODO(synk): the final cls concat is a wrapper-level HBM pass; an aliased /
    # Element-offset in-kernel write could remove it but is not done here.
    return jnp.concatenate([cls_tok, out_tokens], axis=1)


# --------------------------- plain-JAX reference ------------------------------
def reference(x, params, *, t, num_cls):
    B, S, M = x.shape
    PT = S - num_cls
    P = PT // t
    (lnw, lnb, wq, bq, wk, bk, wv, bv, wo, bo, wt, bt) = params

    cls_tok = x[:, :num_cls, :]
    tokens = x[:, num_cls:, :]
    y = tokens.reshape(B, P, t, M).reshape(B * P, t, M)

    mu = jnp.mean(y, axis=-1, keepdims=True)
    var = jnp.mean((y - mu) ** 2, axis=-1, keepdims=True)
    yn = (y - mu) / jnp.sqrt(var + LN_EPS) * lnw[0] + lnb[0]

    q = (yn @ wq + bq[0]) * SCALE
    k = yn @ wk + bk[0]
    v = yn @ wv + bv[0]

    def split(z):  # [G, t, M] -> [G, H, t, hd]
        G = z.shape[0]
        return z.reshape(G, t, NUM_HEADS, HEAD_DIM).transpose(0, 2, 1, 3)

    qh, kh, vh = split(q), split(k), split(v)
    s = jnp.einsum('ghtd,ghsd->ghts', qh, kh)
    p = jax.nn.softmax(s, axis=-1)
    o = jnp.einsum('ghts,ghsd->ghtd', p, vh)
    o = o.transpose(0, 2, 1, 3).reshape(-1, t, M)

    o = o @ wo + bo[0]
    o = o @ wt + bt[0]

    out_tokens = tokens + o.reshape(B, P, t, M).reshape(B, PT, M)
    return jnp.concatenate([cls_tok, out_tokens], axis=1)


# --------------------------------- main ---------------------------------------
def make_params(key, M):
    keys = jax.random.split(key, 12)

    def lin(kw, kb):  # torch Linear [out,in] -> pass transposed [in,out]
        w = 0.02 * jax.random.normal(kw, (M, M), jnp.float32)
        b = 0.02 * jax.random.normal(kb, (1, M), jnp.float32)
        return w.T, b

    lnw = 1.0 + 0.1 * jax.random.normal(keys[0], (1, M), jnp.float32)
    lnb = 0.01 * jax.random.normal(keys[1], (1, M), jnp.float32)
    wq, bq = lin(keys[2], keys[3])
    wk, bk = lin(keys[4], keys[5])
    wv, bv = lin(keys[6], keys[7])
    wo, bo = lin(keys[8], keys[9])
    wt, bt = lin(keys[10], keys[11])
    return (lnw, lnb, wq, bq, wk, bk, wv, bv, wo, bo, wt, bt)


def _check(B, P, groups_per_block, key):
    k_x, k_p = jax.random.split(key)
    S = NUM_CLS + P * T
    x = jax.random.normal(k_x, (B, S, EMBED_DIM), jnp.float32)
    params = make_params(k_p, EMBED_DIM)

    out = clip_layer_attn_time(x, params, t=T, num_cls=NUM_CLS,
                               groups_per_block=groups_per_block)
    out = jax.block_until_ready(out)
    ref = reference(x, params, t=T, num_cls=NUM_CLS)

    assert out.shape == (B, S, EMBED_DIM)
    err = jnp.max(jnp.abs(out - ref))
    assert jnp.allclose(out, ref, atol=1e-4, rtol=1e-4), f"max abs err {err}"


if __name__ == "__main__":
    key = jax.random.PRNGKey(0)
    k1, k2 = jax.random.split(key)

    # Base config: B=2, P=2 -> 4 groups, single grid step.
    _check(B=2, P=2, groups_per_block=128, key=k1)
    # Exercise group padding + multi-step ("parallel") grid: 6 groups, 4/block.
    _check(B=2, P=3, groups_per_block=4, key=k2)

    # TODO(synk): dropout_layer / proj_drop are identity here (eval mode / p=0);
    # stochastic drop-path training behavior is not implemented.
    print("KERNEL_OK")
</pallas_src>

<mosaic_0001>
module attributes {stable_mosaic.version = 11 : i64} {
  func.func @_clip_attn_time_kernel(%arg0: i32, %arg1: memref<32x32xf32, #tpu.memory_space<vmem>>, %arg2: memref<1x32xf32, #tpu.memory_space<vmem>>, %arg3: memref<1x32xf32, #tpu.memory_space<vmem>>, %arg4: memref<32x128xf32, #tpu.memory_space<vmem>>, %arg5: memref<1x128xf32, #tpu.memory_space<vmem>>, %arg6: memref<32x32xf32, #tpu.memory_space<vmem>>, %arg7: memref<1x32xf32, #tpu.memory_space<vmem>>, %arg8: memref<32x32xf32, #tpu.memory_space<vmem>>) attributes {dimension_semantics = [#tpu.dimension_semantics<parallel>], iteration_bounds = array<i64: 1>, scalar_prefetch = 0 : i64, scratch_operands = 0 : i64, tpu.core_type = #tpu.core_type<tc>, window_params = [{transform_indices = @transform_0, window_bounds = array<i64: 32, 32>}, {pipeline_mode = #tpu.pipeline_mode<synchronous>, transform_indices = @transform_1, window_bounds = array<i64: 1, 32>}, {pipeline_mode = #tpu.pipeline_mode<synchronous>, transform_indices = @transform_2, window_bounds = array<i64: 1, 32>}, {pipeline_mode = #tpu.pipeline_mode<synchronous>, transform_indices = @transform_3, window_bounds = array<i64: 32, 128>}, {pipeline_mode = #tpu.pipeline_mode<synchronous>, transform_indices = @transform_4, window_bounds = array<i64: 1, 128>}, {pipeline_mode = #tpu.pipeline_mode<synchronous>, transform_indices = @transform_5, window_bounds = array<i64: 32, 32>}, {pipeline_mode = #tpu.pipeline_mode<synchronous>, transform_indices = @transform_6, window_bounds = array<i64: 1, 32>}, {transform_indices = @transform_7, window_bounds = array<i64: 32, 32>}]} {
    %c0 = arith.constant 0 : index
    %c0_0 = arith.constant 0 : index
    %0 = vector.load %arg1[%c0, %c0_0] : memref<32x32xf32, #tpu.memory_space<vmem>>, vector<32x32xf32>
    %c0_1 = arith.constant 0 : index
    %c0_2 = arith.constant 0 : index
    %1 = vector.load %arg2[%c0_1, %c0_2] : memref<1x32xf32, #tpu.memory_space<vmem>>, vector<1x32xf32>
    %c0_3 = arith.constant 0 : index
    %c0_4 = arith.constant 0 : index
    %2 = vector.load %arg3[%c0_3, %c0_4] : memref<1x32xf32, #tpu.memory_space<vmem>>, vector<1x32xf32>
    %cst = arith.constant dense<0.000000e+00> : vector<32xf32>
    %3 = vector.multi_reduction <add>, %0, %cst [1] : vector<32x32xf32> to vector<32xf32>
    %4 = vector.shape_cast %3 : vector<32xf32> to vector<32x1xf32>
    %cst_5 = arith.constant 3.200000e+01 : f32
    %5 = vector.broadcast %cst_5 : f32 to vector<32x1xf32>
    %6 = arith.divf %4, %5 : vector<32x1xf32>
    %7 = vector.broadcast %6 : vector<32x1xf32> to vector<32x32xf32>
    %8 = arith.subf %0, %7 : vector<32x32xf32>
    %9 = arith.mulf %8, %8 : vector<32x32xf32>
    %cst_6 = arith.constant dense<0.000000e+00> : vector<32xf32>
    %10 = vector.multi_reduction <add>, %9, %cst_6 [1] : vector<32x32xf32> to vector<32xf32>
    %11 = vector.shape_cast %10 : vector<32xf32> to vector<32x1xf32>
    %cst_7 = arith.constant 3.200000e+01 : f32
    %12 = vector.broadcast %cst_7 : f32 to vector<32x1xf32>
    %13 = arith.divf %11, %12 : vector<32x1xf32>
    %cst_8 = arith.constant 9.99999974E-6 : f32
    %14 = vector.broadcast %cst_8 : f32 to vector<32x1xf32>
    %15 = arith.addf %13, %14 : vector<32x1xf32>
    %16 = math.rsqrt %15 : vector<32x1xf32>
    %17 = vector.broadcast %16 : vector<32x1xf32> to vector<32x32xf32>
    %18 = arith.mulf %8, %17 : vector<32x32xf32>
    %19 = vector.broadcast %1 : vector<1x32xf32> to vector<32x32xf32>
    %20 = arith.mulf %18, %19 : vector<32x32xf32>
    %21 = vector.broadcast %2 : vector<1x32xf32> to vector<32x32xf32>
    %22 = arith.addf %20, %21 : vector<32x32xf32>
    %c0_9 = arith.constant 0 : index
    %c0_10 = arith.constant 0 : index
    %23 = vector.load %arg4[%c0_9, %c0_10] : memref<32x128xf32, #tpu.memory_space<vmem>>, vector<32x128xf32>
    %cst_11 = arith.constant dense<0.000000e+00> : vector<32x128xf32>
    %24 = tpu.matmul %22, %23, %cst_11 {dimension_numbers = #tpu.dot_dimension_numbers<[1], [0], [0], [1], [0, 0, 1, 1], [], []>} : vector<32x32xf32>, vector<32x128xf32>, vector<32x128xf32> -> vector<32x128xf32>
    %c0_12 = arith.constant 0 : index
    %c0_13 = arith.constant 0 : index
    %25 = vector.load %arg5[%c0_12, %c0_13] : memref<1x128xf32, #tpu.memory_space<vmem>>, vector<1x128xf32>
    %26 = vector.broadcast %25 : vector<1x128xf32> to vector<32x128xf32>
    %27 = arith.addf %24, %26 : vector<32x128xf32>
    %28 = vector.extract_strided_slice %27 {offsets = [0, 0], sizes = [32, 32], strides = [1, 1]} : vector<32x128xf32> to vector<32x32xf32>
    %cst_14 = arith.constant 0.353553385 : f32
    %29 = vector.broadcast %cst_14 : f32 to vector<32x32xf32>
    %30 = arith.mulf %28, %29 : vector<32x32xf32>
    %31 = vector.extract_strided_slice %27 {offsets = [0, 32], sizes = [32, 32], strides = [1, 1]} : vector<32x128xf32> to vector<32x32xf32>
    %32 = vector.extract_strided_slice %27 {offsets = [0, 64], sizes = [32, 32], strides = [1, 1]} : vector<32x128xf32> to vector<32x32xf32>
    %33 = vector.extract_strided_slice %30 {offsets = [0, 0], sizes = [32, 8], strides = [1, 1]} : vector<32x32xf32> to vector<32x8xf32>
    %34 = vector.shape_cast %33 : vector<32x8xf32> to vector<4x8x8xf32>
    %35 = vector.extract_strided_slice %31 {offsets = [0, 0], sizes = [32, 8], strides = [1, 1]} : vector<32x32xf32> to vector<32x8xf32>
    %36 = vector.shape_cast %35 : vector<32x8xf32> to vector<4x8x8xf32>
    %37 = vector.extract_strided_slice %32 {offsets = [0, 0], sizes = [32, 8], strides = [1, 1]} : vector<32x32xf32> to vector<32x8xf32>
    %38 = vector.shape_cast %37 : vector<32x8xf32> to vector<4x8x8xf32>
    "tpu.trace_start"() <{level = 10 : i32, message = "gtd,gsd->gts"}> : () -> ()
    %cst_15 = arith.constant dense<0.000000e+00> : vector<4x8x8xf32>
    %39 = tpu.matmul %34, %36, %cst_15 {dimension_numbers = #tpu.dot_dimension_numbers<[2], [2], [1], [1], [0, 0, 0, 1, 1, 1], [0], [0]>} : vector<4x8x8xf32>, vector<4x8x8xf32>, vector<4x8x8xf32> -> vector<4x8x8xf32>
    "tpu.trace_stop"() : () -> ()
    %cst_16 = arith.constant dense<0xFF800000> : vector<4x8xf32>
    %40 = vector.multi_reduction <maximumf>, %39, %cst_16 [2] : vector<4x8x8xf32> to vector<4x8xf32>
    %41 = vector.shape_cast %40 : vector<4x8xf32> to vector<4x8x1xf32>
    %42 = vector.broadcast %41 : vector<4x8x1xf32> to vector<4x8x8xf32>
    %43 = arith.subf %39, %42 : vector<4x8x8xf32>
    %44 = math.exp %43 : vector<4x8x8xf32>
    %cst_17 = arith.constant dense<0.000000e+00> : vector<4x8xf32>
    %45 = vector.multi_reduction <add>, %44, %cst_17 [2] : vector<4x8x8xf32> to vector<4x8xf32>
    %46 = vector.shape_cast %45 : vector<4x8xf32> to vector<4x8x1xf32>
    %47 = vector.broadcast %46 : vector<4x8x1xf32> to vector<4x8x8xf32>
    %48 = arith.divf %44, %47 : vector<4x8x8xf32>
    "tpu.trace_start"() <{level = 10 : i32, message = "gts,gsd->gtd"}> : () -> ()
    %cst_18 = arith.constant dense<0.000000e+00> : vector<4x8x8xf32>
    %49 = tpu.matmul %48, %38, %cst_18 {dimension_numbers = #tpu.dot_dimension_numbers<[2], [1], [1], [2], [0, 0, 0, 1, 1, 2], [0], [0]>} : vector<4x8x8xf32>, vector<4x8x8xf32>, vector<4x8x8xf32> -> vector<4x8x8xf32>
    "tpu.trace_stop"() : () -> ()
    %50 = vector.shape_cast %49 : vector<4x8x8xf32> to vector<32x8xf32>
    %51 = vector.extract_strided_slice %30 {offsets = [0, 8], sizes = [32, 8], strides = [1, 1]} : vector<32x32xf32> to vector<32x8xf32>
    %52 = vector.shape_cast %51 : vector<32x8xf32> to vector<4x8x8xf32>
    %53 = vector.extract_strided_slice %31 {offsets = [0, 8], sizes = [32, 8], strides = [1, 1]} : vector<32x32xf32> to vector<32x8xf32>
    %54 = vector.shape_cast %53 : vector<32x8xf32> to vector<4x8x8xf32>
    %55 = vector.extract_strided_slice %32 {offsets = [0, 8], sizes = [32, 8], strides = [1, 1]} : vector<32x32xf32> to vector<32x8xf32>
    %56 = vector.shape_cast %55 : vector<32x8xf32> to vector<4x8x8xf32>
    "tpu.trace_start"() <{level = 10 : i32, message = "gtd,gsd->gts"}> : () -> ()
    %cst_19 = arith.constant dense<0.000000e+00> : vector<4x8x8xf32>
    %57 = tpu.matmul %52, %54, %cst_19 {dimension_numbers = #tpu.dot_dimension_numbers<[2], [2], [1], [1], [0, 0, 0, 1, 1, 1], [0], [0]>} : vector<4x8x8xf32>, vector<4x8x8xf32>, vector<4x8x8xf32> -> vector<4x8x8xf32>
    "tpu.trace_stop"() : () -> ()
    %cst_20 = arith.constant dense<0xFF800000> : vector<4x8xf32>
    %58 = vector.multi_reduction <maximumf>, %57, %cst_20 [2] : vector<4x8x8xf32> to vector<4x8xf32>
    %59 = vector.shape_cast %58 : vector<4x8xf32> to vector<4x8x1xf32>
    %60 = vector.broadcast %59 : vector<4x8x1xf32> to vector<4x8x8xf32>
    %61 = arith.subf %57, %60 : vector<4x8x8xf32>
    %62 = math.exp %61 : vector<4x8x8xf32>
    %cst_21 = arith.constant dense<0.000000e+00> : vector<4x8xf32>
    %63 = vector.multi_reduction <add>, %62, %cst_21 [2] : vector<4x8x8xf32> to vector<4x8xf32>
    %64 = vector.shape_cast %63 : vector<4x8xf32> to vector<4x8x1xf32>
    %65 = vector.broadcast %64 : vector<4x8x1xf32> to vector<4x8x8xf32>
    %66 = arith.divf %62, %65 : vector<4x8x8xf32>
    "tpu.trace_start"() <{level = 10 : i32, message = "gts,gsd->gtd"}> : () -> ()
    %cst_22 = arith.constant dense<0.000000e+00> : vector<4x8x8xf32>
    %67 = tpu.matmul %66, %56, %cst_22 {dimension_numbers = #tpu.dot_dimension_numbers<[2], [1], [1], [2], [0, 0, 0, 1, 1, 2], [0], [0]>} : vector<4x8x8xf32>, vector<4x8x8xf32>, vector<4x8x8xf32> -> vector<4x8x8xf32>
    "tpu.trace_stop"() : () -> ()
    %68 = vector.shape_cast %67 : vector<4x8x8xf32> to vector<32x8xf32>
    %69 = vector.extract_strided_slice %30 {offsets = [0, 16], sizes = [32, 8], strides = [1, 1]} : vector<32x32xf32> to vector<32x8xf32>
    %70 = vector.shape_cast %69 : vector<32x8xf32> to vector<4x8x8xf32>
    %71 = vector.extract_strided_slice %31 {offsets = [0, 16], sizes = [32, 8], strides = [1, 1]} : vector<32x32xf32> to vector<32x8xf32>
    %72 = vector.shape_cast %71 : vector<32x8xf32> to vector<4x8x8xf32>
    %73 = vector.extract_strided_slice %32 {offsets = [0, 16], sizes = [32, 8], strides = [1, 1]} : vector<32x32xf32> to vector<32x8xf32>
    %74 = vector.shape_cast %73 : vector<32x8xf32> to vector<4x8x8xf32>
    "tpu.trace_start"() <{level = 10 : i32, message = "gtd,gsd->gts"}> : () -> ()
    %cst_23 = arith.constant dense<0.000000e+00> : vector<4x8x8xf32>
    %75 = tpu.matmul %70, %72, %cst_23 {dimension_numbers = #tpu.dot_dimension_numbers<[2], [2], [1], [1], [0, 0, 0, 1, 1, 1], [0], [0]>} : vector<4x8x8xf32>, vector<4x8x8xf32>, vector<4x8x8xf32> -> vector<4x8x8xf32>
    "tpu.trace_stop"() : () -> ()
    %cst_24 = arith.constant dense<0xFF800000> : vector<4x8xf32>
    %76 = vector.multi_reduction <maximumf>, %75, %cst_24 [2] : vector<4x8x8xf32> to vector<4x8xf32>
    %77 = vector.shape_cast %76 : vector<4x8xf32> to vector<4x8x1xf32>
    %78 = vector.broadcast %77 : vector<4x8x1xf32> to vector<4x8x8xf32>
    %79 = arith.subf %75, %78 : vector<4x8x8xf32>
    %80 = math.exp %79 : vector<4x8x8xf32>
    %cst_25 = arith.constant dense<0.000000e+00> : vector<4x8xf32>
    %81 = vector.multi_reduction <add>, %80, %cst_25 [2] : vector<4x8x8xf32> to vector<4x8xf32>
    %82 = vector.shape_cast %81 : vector<4x8xf32> to vector<4x8x1xf32>
    %83 = vector.broadcast %82 : vector<4x8x1xf32> to vector<4x8x8xf32>
    %84 = arith.divf %80, %83 : vector<4x8x8xf32>
    "tpu.trace_start"() <{level = 10 : i32, message = "gts,gsd->gtd"}> : () -> ()
    %cst_26 = arith.constant dense<0.000000e+00> : vector<4x8x8xf32>
    %85 = tpu.matmul %84, %74, %cst_26 {dimension_numbers = #tpu.dot_dimension_numbers<[2], [1], [1], [2], [0, 0, 0, 1, 1, 2], [0], [0]>} : vector<4x8x8xf32>, vector<4x8x8xf32>, vector<4x8x8xf32> -> vector<4x8x8xf32>
    "tpu.trace_stop"() : () -> ()
    %86 = vector.shape_cast %85 : vector<4x8x8xf32> to vector<32x8xf32>
    %87 = vector.extract_strided_slice %30 {offsets = [0, 24], sizes = [32, 8], strides = [1, 1]} : vector<32x32xf32> to vector<32x8xf32>
    %88 = vector.shape_cast %87 : vector<32x8xf32> to vector<4x8x8xf32>
    %89 = vector.extract_strided_slice %31 {offsets = [0, 24], sizes = [32, 8], strides = [1, 1]} : vector<32x32xf32> to vector<32x8xf32>
    %90 = vector.shape_cast %89 : vector<32x8xf32> to vector<4x8x8xf32>
    %91 = vector.extract_strided_slice %32 {offsets = [0, 24], sizes = [32, 8], strides = [1, 1]} : vector<32x32xf32> to vector<32x8xf32>
    %92 = vector.shape_cast %91 : vector<32x8xf32> to vector<4x8x8xf32>
    "tpu.trace_start"() <{level = 10 : i32, message = "gtd,gsd->gts"}> : () -> ()
    %cst_27 = arith.constant dense<0.000000e+00> : vector<4x8x8xf32>
    %93 = tpu.matmul %88, %90, %cst_27 {dimension_numbers = #tpu.dot_dimension_numbers<[2], [2], [1], [1], [0, 0, 0, 1, 1, 1], [0], [0]>} : vector<4x8x8xf32>, vector<4x8x8xf32>, vector<4x8x8xf32> -> vector<4x8x8xf32>
    "tpu.trace_stop"() : () -> ()
    %cst_28 = arith.constant dense<0xFF800000> : vector<4x8xf32>
    %94 = vector.multi_reduction <maximumf>, %93, %cst_28 [2] : vector<4x8x8xf32> to vector<4x8xf32>
    %95 = vector.shape_cast %94 : vector<4x8xf32> to vector<4x8x1xf32>
    %96 = vector.broadcast %95 : vector<4x8x1xf32> to vector<4x8x8xf32>
    %97 = arith.subf %93, %96 : vector<4x8x8xf32>
    %98 = math.exp %97 : vector<4x8x8xf32>
    %cst_29 = arith.constant dense<0.000000e+00> : vector<4x8xf32>
    %99 = vector.multi_reduction <add>, %98, %cst_29 [2] : vector<4x8x8xf32> to vector<4x8xf32>
    %100 = vector.shape_cast %99 : vector<4x8xf32> to vector<4x8x1xf32>
    %101 = vector.broadcast %100 : vector<4x8x1xf32> to vector<4x8x8xf32>
    %102 = arith.divf %98, %101 : vector<4x8x8xf32>
    "tpu.trace_start"() <{level = 10 : i32, message = "gts,gsd->gtd"}> : () -> ()
    %cst_30 = arith.constant dense<0.000000e+00> : vector<4x8x8xf32>
    %103 = tpu.matmul %102, %92, %cst_30 {dimension_numbers = #tpu.dot_dimension_numbers<[2], [1], [1], [2], [0, 0, 0, 1, 1, 2], [0], [0]>} : vector<4x8x8xf32>, vector<4x8x8xf32>, vector<4x8x8xf32> -> vector<4x8x8xf32>
    "tpu.trace_stop"() : () -> ()
    %104 = vector.shape_cast %103 : vector<4x8x8xf32> to vector<32x8xf32>
    %105 = tpu.concatenate %50, %68, %86, %104 in 1 : vector<32x8xf32>, vector<32x8xf32>, vector<32x8xf32>, vector<32x8xf32> -> vector<32x32xf32>
    %c0_31 = arith.constant 0 : index
    %c0_32 = arith.constant 0 : index
    %106 = vector.load %arg6[%c0_31, %c0_32] : memref<32x32xf32, #tpu.memory_space<vmem>>, vector<32x32xf32>
    %cst_33 = arith.constant dense<0.000000e+00> : vector<32x32xf32>
    %107 = tpu.matmul %105, %106, %cst_33 {dimension_numbers = #tpu.dot_dimension_numbers<[1], [0], [0], [1], [0, 0, 1, 1], [], []>} : vector<32x32xf32>, vector<32x32xf32>, vector<32x32xf32> -> vector<32x32xf32>
    %c0_34 = arith.constant 0 : index
    %c0_35 = arith.constant 0 : index
    %108 = vector.load %arg7[%c0_34, %c0_35] : memref<1x32xf32, #tpu.memory_space<vmem>>, vector<1x32xf32>
    %109 = vector.broadcast %108 : vector<1x32xf32> to vector<32x32xf32>
    %110 = arith.addf %107, %109 : vector<32x32xf32>
    %111 = arith.addf %0, %110 : vector<32x32xf32>
    %c0_36 = arith.constant 0 : index
    %c0_37 = arith.constant 0 : index
    %112 = vector.load %arg8[%c0_36, %c0_37] : memref<32x32xf32, #tpu.memory_space<vmem>>, vector<32x32xf32>
    tpu.vector_store %arg8[%c0_36, %c0_37], %111 {strides = array<i32>} : memref<32x32xf32, #tpu.memory_space<vmem>>, vector<32x32xf32>,
    return
  }
  func.func @transform_0(%arg0: i32) -> (i32, i32) {
    %c0_i32 = arith.constant 0 : i32
    %c0_i32_0 = arith.constant 0 : i32
    return %arg0, %c0_i32 : i32, i32
  }
  func.func @transform_1(%arg0: i32) -> (i32, i32) {
    %c0_i32 = arith.constant 0 : i32
    %c0_i32_0 = arith.constant 0 : i32
    %c0_i32_1 = arith.constant 0 : i32
    return %c0_i32, %c0_i32_0 : i32, i32
  }
  func.func @transform_2(%arg0: i32) -> (i32, i32) {
    %c0_i32 = arith.constant 0 : i32
    %c0_i32_0 = arith.constant 0 : i32
    %c0_i32_1 = arith.constant 0 : i32
    return %c0_i32, %c0_i32_0 : i32, i32
  }
  func.func @transform_3(%arg0: i32) -> (i32, i32) {
    %c0_i32 = arith.constant 0 : i32
    %c0_i32_0 = arith.constant 0 : i32
    %c0_i32_1 = arith.constant 0 : i32
    return %c0_i32, %c0_i32_0 : i32, i32
  }
  func.func @transform_4(%arg0: i32) -> (i32, i32) {
    %c0_i32 = arith.constant 0 : i32
    %c0_i32_0 = arith.constant 0 : i32
    %c0_i32_1 = arith.constant 0 : i32
    return %c0_i32, %c0_i32_0 : i32, i32
  }
  func.func @transform_5(%arg0: i32) -> (i32, i32) {
    %c0_i32 = arith.constant 0 : i32
    %c0_i32_0 = arith.constant 0 : i32
    %c0_i32_1 = arith.constant 0 : i32
    return %c0_i32, %c0_i32_0 : i32, i32
  }
  func.func @transform_6(%arg0: i32) -> (i32, i32) {
    %c0_i32 = arith.constant 0 : i32
    %c0_i32_0 = arith.constant 0 : i32
    %c0_i32_1 = arith.constant 0 : i32
    return %c0_i32, %c0_i32_0 : i32, i32
  }
  func.func @transform_7(%arg0: i32) -> (i32, i32) {
    %c0_i32 = arith.constant 0 : i32
    %c0_i32_0 = arith.constant 0 : i32
    return %arg0, %c0_i32 : i32, i32
  }
}

</mosaic_0001>

<llo_original>
// kernel: clip_layer_attn_time.1
$region0: #{clip_layer_attn_time.1}
  #allocation0 [shape = 'u32[]', space=smem, size = 0x4, offset = 0x4, fixed_abs, tag = 'smem constant byte address 0x4 - core index']
  #allocation1 [shape = 'u32[144,128]{1,0:T(1,128)}', space=vmem, size = 0x12000, scoped, tag = 'internal scratch']
  %s0 = inlined_call_operand.vmem [shape: f32[32,32], index: 0, kind: input, shape index: {}]
  %s1 = inlined_call_operand.vmem [shape: f32[1,32], index: 1, kind: input, shape index: {}]
  %s2 = inlined_call_operand.vmem [shape: f32[1,32], index: 2, kind: input, shape index: {}]
  %s3 = inlined_call_operand.vmem [shape: f32[32,128], index: 3, kind: input, shape index: {}]
  %s4 = inlined_call_operand.vmem [shape: f32[1,128], index: 4, kind: input, shape index: {}]
  %s5 = inlined_call_operand.vmem [shape: f32[32,32], index: 5, kind: input, shape index: {}]
  %s6 = inlined_call_operand.vmem [shape: f32[1,32], index: 6, kind: input, shape index: {}]
  %s7 = inlined_call_operand.vmem [shape: f32[32,32], index: 7, kind: output, shape index: {}]
  %s8 = sld [smem:[#allocation0]]
  $region38: #{clip_layer_attn_time.1} parent=0
    _
  %s10 = ssub.s32 1, %s8
  %s11 = scalar_select 0, %s10, %s8
  // Predicated region
  $region2: #{clip_layer_attn_time.1} parent=0 // pred_check
    _
  $region3: #{clip_layer_attn_time.1} parent=0 // pred_check_branch
    %13 = sbr.rel (0) target = $region5
  $region4: #{clip_layer_attn_time.1} parent=0 // pred_region
    _
  $region5: #{clip_layer_attn_time.1} parent=0 // pred_fallthru
    _
  // Predicated region
  $region6: #{clip_layer_attn_time.1} parent=0 // pred_check
    _
  $region7: #{clip_layer_attn_time.1} parent=0 // pred_check_branch
    %15 = sbr.rel (0) target = $region9
  $region8: #{clip_layer_attn_time.1} parent=0 // pred_region
    _
  $region9: #{clip_layer_attn_time.1} parent=0 // pred_fallthru
    _
  // Predicated region
  $region10: #{clip_layer_attn_time.1} parent=0 // pred_check
    _
  $region11: #{clip_layer_attn_time.1} parent=0 // pred_check_branch
    %17 = sbr.rel (0) target = $region13
  $region12: #{clip_layer_attn_time.1} parent=0 // pred_region
    _
  $region13: #{clip_layer_attn_time.1} parent=0 // pred_fallthru
    _
  // Predicated region
  $region14: #{clip_layer_attn_time.1} parent=0 // pred_check
    _
  $region15: #{clip_layer_attn_time.1} parent=0 // pred_check_branch
    %19 = sbr.rel (0) target = $region17
  $region16: #{clip_layer_attn_time.1} parent=0 // pred_region
    _
  $region17: #{clip_layer_attn_time.1} parent=0 // pred_fallthru
    _
  // Predicated region
  $region18: #{clip_layer_attn_time.1} parent=0 // pred_check
    _
  $region19: #{clip_layer_attn_time.1} parent=0 // pred_check_branch
    %21 = sbr.rel (0) target = $region21
  $region20: #{clip_layer_attn_time.1} parent=0 // pred_region
    _
  $region21: #{clip_layer_attn_time.1} parent=0 // pred_fallthru
    _
  // Predicated region
  $region22: #{clip_layer_attn_time.1} parent=0 // pred_check
    _
  $region23: #{clip_layer_attn_time.1} parent=0 // pred_check_branch
    %23 = sbr.rel (0) target = $region25
  $region24: #{clip_layer_attn_time.1} parent=0 // pred_region
    _
  $region25: #{clip_layer_attn_time.1} parent=0 // pred_fallthru
    _
  // Predicated region
  $region26: #{clip_layer_attn_time.1} parent=0 // pred_check
    _
  $region27: #{clip_layer_attn_time.1} parent=0 // pred_check_branch
    %25 = sbr.rel (0) target = $region29
  $region28: #{clip_layer_attn_time.1} parent=0 // pred_region
    _
  $region29: #{clip_layer_attn_time.1} parent=0 // pred_fallthru
    _
  %v26 = vld [vmem:[%s0] sm:$0xff]
  %v27 = vld [vmem:[%s0 + $0x8] sm:$0xff]
  %v28 = vld [vmem:[%s0 + $0x10] sm:$0xff]
  %v29 = vld [vmem:[%s0 + $0x18] sm:$0xff]
  %v30 = vld [vmem:[%s1] sm:$0x1]
  %v31 = vld [vmem:[%s2] sm:$0x1]
  %vm32 = vcmask 261120
  %v33 = vsel %vm32, %v26, 0.0
  %34 = vadd.xlane.f32.xlu0 %v33
  %v35 = vpop.xlane.xlu0 %34
  %v36 = vsel %vm32, %v27, 0.0
  %37 = vadd.xlane.f32.xlu0 %v36
  %v38 = vpop.xlane.xlu0 %37
  %v39 = vsel %vm32, %v28, 0.0
  %40 = vadd.xlane.f32.xlu0 %v39
  %v41 = vpop.xlane.xlu0 %40
  %v42 = vsel %vm32, %v29, 0.0
  %43 = vadd.xlane.f32.xlu0 %v42
  %v44 = vpop.xlane.xlu0 %43
  %v45 = vrcp.pop 32.0
  %v46 = vmul.f32 %v35, %v45
  %v47 = vmul.f32 %v38, %v45
  %v48 = vmul.f32 %v41, %v45
  %v49 = vmul.f32 %v44, %v45
  %v50 = vsub.f32 %v26, %v46
  %v51 = vsub.f32 %v27, %v47
  %v52 = vsub.f32 %v28, %v48
  %v53 = vsub.f32 %v29, %v49
  %v54 = vmul.f32 %v50, %v50
  %v55 = vmul.f32 %v51, %v51
  %v56 = vmul.f32 %v52, %v52
  %v57 = vmul.f32 %v53, %v53
  %v58 = vsel %vm32, %v54, 0.0
  %59 = vadd.xlane.f32.xlu0 %v58
  %v60 = vpop.xlane.xlu0 %59
  %v61 = vsel %vm32, %v55, 0.0
  %62 = vadd.xlane.f32.xlu0 %v61
  %v63 = vpop.xlane.xlu0 %62
  %v64 = vsel %vm32, %v56, 0.0
  %65 = vadd.xlane.f32.xlu0 %v64
  %v66 = vpop.xlane.xlu0 %65
  %v67 = vsel %vm32, %v57, 0.0
  %68 = vadd.xlane.f32.xlu0 %v67
  %v69 = vpop.xlane.xlu0 %68
  %v70 = vmul.f32 %v60, %v45
  %v71 = vmul.f32 %v63, %v45
  %v72 = vmul.f32 %v66, %v45
  %v73 = vmul.f32 %v69, %v45
  %v74 = vadd.f32 %v70, 1e-05
  %v75 = vadd.f32 %v71, 1e-05
  %v76 = vadd.f32 %v72, 1e-05
  %v77 = vadd.f32 %v73, 1e-05
  %v78 = vrsqrt.pop %v74
  %v79 = vrsqrt.pop %v75
  %v80 = vrsqrt.pop %v76
  %v81 = vrsqrt.pop %v77
  %v82 = vmul.f32 %v50, %v78
  %v83 = vmul.f32 %v51, %v79
  %v84 = vmul.f32 %v52, %v80
  %v85 = vmul.f32 %v53, %v81
  %v87 = vlaneseq
  %v88 = vshrl.u32 %v87, 7
  %v89 = vsub.s32 0, %v88
  %v90 = vrot.slane %v30, %v89
  %v92 = vmul.f32 %v82, %v90
  %v93 = vmul.f32 %v83, %v90
  %v94 = vmul.f32 %v84, %v90
  %v95 = vmul.f32 %v85, %v90
  %v97 = vlaneseq
  %v98 = vshrl.u32 %v97, 7
  %v99 = vsub.s32 0, %v98
  %v100 = vrot.slane %v31, %v99
  %v102 = vadd.f32 %v92, %v100
  %v103 = vadd.f32 %v93, %v100
  %v104 = vadd.f32 %v94, %v100
  %v105 = vadd.f32 %v95, %v100
  %v106 = vld [vmem:[%s3] sm:$0xff]
  %v107 = vld [vmem:[%s3 + $0x8] sm:$0xff]
  %v108 = vld [vmem:[%s3 + $0x10] sm:$0xff]
  %v109 = vld [vmem:[%s3 + $0x18] sm:$0xff]
  %v110 = vld [vmem:[%s4] sm:$0x1]
  %v112 = vlaneseq
  %v113 = vshrl.u32 %v112, 7
  %v114 = vsub.s32 0, %v113
  %v115 = vrot.slane %v110, %v114
  %v118 = vsel %vm32, %v102, 0
  %v121 = vsel %vm32, %v103, 0
  %v124 = vsel %vm32, %v104, 0
  %v127 = vsel %vm32, %v105, 0
  %129 = vmatprep.subr.mxu0 0.0
  %130 = vmatpush1.msra.mxu0 %v106
  %131 = vmatprep.subr.mxu0 0.0
  %132 = vmatpush1.msra.mxu0 %v107
  %133 = vmatprep.subr.mxu0 0.0
  %134 = vmatpush1.msra.mxu0 %v108
  %135 = vmatprep.subr.mxu0 0.0
  %136 = vmatpush1.msra.mxu0 %v109
  %137 = vmatprep.subr.mxu0 0.0
  %138 = vmatpush1.msra.mxu0 0.0
  %139 = vmatprep.subr.mxu0 0.0
  %140 = vmatpush1.msra.mxu0 0.0
  %141 = vmatprep.subr.mxu0 0.0
  %142 = vmatpush1.msra.mxu0 0.0
  %143 = vmatprep.subr.mxu0 0.0
  %144 = vmatpush1.msra.mxu0 0.0
  %145 = vmatprep.subr.mxu0 0.0
  %146 = vmatpush1.msra.mxu0 0.0
  %147 = vmatprep.subr.mxu0 0.0
  %148 = vmatpush1.msra.mxu0 0.0
  %149 = vmatprep.subr.mxu0 0.0
  %150 = vmatpush1.msra.mxu0 0.0
  %151 = vmatprep.subr.mxu0 0.0
  %152 = vmatpush1.msra.mxu0 0.0
  %153 = vmatprep.subr.mxu0 0.0
  %154 = vmatpush1.msra.mxu0 0.0
  %155 = vmatprep.subr.mxu0 0.0
  %156 = vmatpush1.msra.mxu0 0.0
  %157 = vmatprep.subr.mxu0 0.0
  %158 = vmatpush1.msra.mxu0 0.0
  %159 = vmatprep.subr.mxu0 0.0
  %160 = vmatpush1.msra.mxu0 0.0
  %161 = vmatprep.subr.mxu0 0.0
  %162 = vmatpush1.msra.mxu0 0.0
  %163 = vmatprep.subr.mxu0 0.0
  %164 = vmatpush1.msra.mxu0 0.0
  %165 = vmatprep.subr.mxu0 0.0
  %166 = vmatpush1.msra.mxu0 0.0
  %167 = vmatprep.subr.mxu0 0.0
  %168 = vmatpush1.msra.mxu0 0.0
  %169 = vmatprep.subr.mxu0 0.0
  %170 = vmatpush1.msra.mxu0 0.0
  %171 = vmatprep.subr.mxu0 0.0
  %172 = vmatpush1.msra.mxu0 0.0
  %173 = vmatprep.subr.mxu0 0.0
  %174 = vmatpush1.msra.mxu0 0.0
  %175 = vmatprep.subr.mxu0 0.0
  %176 = vmatpush1.msra.mxu0 0.0
  %177 = vmatprep.subr.mxu0 0.0
  %178 = vmatpush1.msra.mxu0 0.0
  %179 = vmatprep.subr.mxu0 0.0
  %180 = vmatpush1.msra.mxu0 0.0
  %181 = vmatprep.subr.mxu0 0.0
  %182 = vmatpush1.msra.mxu0 0.0
  %183 = vmatprep.subr.mxu0 0.0
  %184 = vmatpush1.msra.mxu0 0.0
  %185 = vmatprep.subr.mxu0 0.0
  %186 = vmatpush1.msra.mxu0 0.0
  %187 = vmatprep.subr.mxu0 0.0
  %188 = vmatpush1.msra.mxu0 0.0
  %189 = vmatprep.subr.mxu0 0.0
  %190 = vmatpush1.msra.mxu0 0.0
  %191 = vmatprep.subr.mxu0 0.0
  %192 = vmatpush1.msra.mxu0 0.0
  %193 = vmatprep.mubr.f32.mxu0 0.0
  %194 = vmatmul.mubr.f32.gmra.mrb[0].mxu0 %v118
  %v195 = vpop.f32.mrb[0].mxu0
  %v196 = vadd.f32 %v115, %v195
  %v197 = vpop.f32.mrb[0].mxu0
  %198 = vmatprep.mubr.f32.mxu0 0.0
  %199 = vmatmul.mubr.f32.gmra.mrb[0].mxu0 %v121
  %v200 = vpop.f32.mrb[0].mxu0
  %v201 = vadd.f32 %v115, %v200
  %v202 = vpop.f32.mrb[0].mxu0
  %203 = vmatprep.mubr.f32.mxu0 0.0
  %204 = vmatmul.mubr.f32.gmra.mrb[0].mxu0 %v124
  %v205 = vpop.f32.mrb[0].mxu0
  %v206 = vadd.f32 %v115, %v205
  %v207 = vpop.f32.mrb[0].mxu0
  %208 = vmatprep.mubr.f32.mxu0 0.0
  %209 = vmatmul.mubr.f32.gmra.mrb[0].mxu0 %v127
  %v210 = vpop.f32.mrb[0].mxu0
  %v211 = vadd.f32 %v115, %v210
  %v212 = vpop.f32.mrb[0].mxu0
  %213 = vdwg.mxu0
  %v214 = vmul.f32 %v196, 0.35355338
  %v215 = vmul.f32 %v201, 0.35355338
  %v216 = vmul.f32 %v206, 0.35355338
  %v217 = vmul.f32 %v211, 0.35355338
  %219 = vrot.lane.b32.xlu0 %v196, 96
  %v220 = vpop.permute.xlu0 %219
  %vm221 = vcmask 64512
  %v223 = vsel %vm221, %v214, 0
  %v225 = vsel %vm221, %v220, 0
  %227 = vmatprep.subr.mxu0 0.0
  %228 = vmatpush1.xpose.msra.mxu0 %v225
  %229 = vmatprep.subr.mxu0 0.0
  %230 = vmatpush1.xpose.msra.mxu0 0.0
  %231 = vmatprep.subr.mxu0 0.0
  %232 = vmatpush1.xpose.msra.mxu0 0.0
  %233 = vmatprep.subr.mxu0 0.0
  %234 = vmatpush1.xpose.msra.mxu0 0.0
  %235 = vmatprep.subr.mxu0 0.0
  %236 = vmatpush1.xpose.msra.mxu0 0.0
  %237 = vmatprep.subr.mxu0 0.0
  %238 = vmatpush1.xpose.msra.mxu0 0.0
  %239 = vmatprep.subr.mxu0 0.0
  %240 = vmatpush1.xpose.msra.mxu0 0.0
  %241 = vmatprep.subr.mxu0 0.0
  %242 = vmatpush1.xpose.msra.mxu0 0.0
  %243 = vmatprep.subr.mxu0 0.0
  %244 = vmatpush1.xpose.msra.mxu0 0.0
  %245 = vmatprep.subr.mxu0 0.0
  %246 = vmatpush1.xpose.msra.mxu0 0.0
  %247 = vmatprep.subr.mxu0 0.0
  %248 = vmatpush1.xpose.msra.mxu0 0.0
  %249 = vmatprep.subr.mxu0 0.0
  %250 = vmatpush1.xpose.msra.mxu0 0.0
  %251 = vmatprep.subr.mxu0 0.0
  %252 = vmatpush1.xpose.msra.mxu0 0.0
  %253 = vmatprep.subr.mxu0 0.0
  %254 = vmatpush1.xpose.msra.mxu0 0.0
  %255 = vmatprep.subr.mxu0 0.0
  %256 = vmatpush1.xpose.msra.mxu0 0.0
  %257 = vmatprep.subr.mxu0 0.0
  %258 = vmatpush1.xpose.msra.mxu0 0.0
  %259 = vmatprep.subr.mxu0 0.0
  %260 = vmatpush1.xpose.msra.mxu0 0.0
  %261 = vmatprep.subr.mxu0 0.0
  %262 = vmatpush1.xpose.msra.mxu0 0.0
  %263 = vmatprep.subr.mxu0 0.0
  %264 = vmatpush1.xpose.msra.mxu0 0.0
  %265 = vmatprep.subr.mxu0 0.0
  %266 = vmatpush1.xpose.msra.mxu0 0.0
  %267 = vmatprep.subr.mxu0 0.0
  %268 = vmatpush1.xpose.msra.mxu0 0.0
  %269 = vmatprep.subr.mxu0 0.0
  %270 = vmatpush1.xpose.msra.mxu0 0.0
  %271 = vmatprep.subr.mxu0 0.0
  %272 = vmatpush1.xpose.msra.mxu0 0.0
  %273 = vmatprep.subr.mxu0 0.0
  %274 = vmatpush1.xpose.msra.mxu0 0.0
  %275 = vmatprep.subr.mxu0 0.0
  %276 = vmatpush1.xpose.msra.mxu0 0.0
  %277 = vmatprep.subr.mxu0 0.0
  %278 = vmatpush1.xpose.msra.mxu0 0.0
  %279 = vmatprep.subr.mxu0 0.0
  %280 = vmatpush1.xpose.msra.mxu0 0.0
  %281 = vmatprep.subr.mxu0 0.0
  %282 = vmatpush1.xpose.msra.mxu0 0.0
  %283 = vmatprep.subr.mxu0 0.0
  %284 = vmatpush1.xpose.msra.mxu0 0.0
  %285 = vmatprep.subr.mxu0 0.0
  %286 = vmatpush1.xpose.msra.mxu0 0.0
  %287 = vmatprep.subr.mxu0 0.0
  %288 = vmatpush1.xpose.msra.mxu0 0.0
  %289 = vmatprep.subr.mxu0 0.0
  %290 = vmatpush1.xpose.msra.mxu0 0.0
  %291 = vmatprep.mubr.f32.mxu0 0.0
  %292 = vmatmul.mubr.f32.gmra.mrb[0].mxu0 %v223
  %v293 = vpop.f32.mrb[0].mxu0
  %v294 = vadd.f32 0.0, %v293
  %v295 = vpop.f32.mrb[0].mxu0
  %296 = vdwg.mxu0
  %298 = vrot.lane.b32.xlu0 %v201, 96
  %v299 = vpop.permute.xlu0 %298
  %v301 = vsel %vm221, %v215, 0
  %v303 = vsel %vm221, %v299, 0
  %305 = vmatprep.subr.mxu0 0.0
  %306 = vmatpush1.xpose.msra.mxu0 %v303
  %307 = vmatprep.subr.mxu0 0.0
  %308 = vmatpush1.xpose.msra.mxu0 0.0
  %309 = vmatprep.subr.mxu0 0.0
  %310 = vmatpush1.xpose.msra.mxu0 0.0
  %311 = vmatprep.subr.mxu0 0.0
  %312 = vmatpush1.xpose.msra.mxu0 0.0
  %313 = vmatprep.subr.mxu0 0.0
  %314 = vmatpush1.xpose.msra.mxu0 0.0
  %315 = vmatprep.subr.mxu0 0.0
  %316 = vmatpush1.xpose.msra.mxu0 0.0
  %317 = vmatprep.subr.mxu0 0.0
  %318 = vmatpush1.xpose.msra.mxu0 0.0
  %319 = vmatprep.subr.mxu0 0.0
  %320 = vmatpush1.xpose.msra.mxu0 0.0
  %321 = vmatprep.subr.mxu0 0.0
  %322 = vmatpush1.xpose.msra.mxu0 0.0
  %323 = vmatprep.subr.mxu0 0.0
  %324 = vmatpush1.xpose.msra.mxu0 0.0
  %325 = vmatprep.subr.mxu0 0.0
  %326 = vmatpush1.xpose.msra.mxu0 0.0
  %327 = vmatprep.subr.mxu0 0.0
  %328 = vmatpush1.xpose.msra.mxu0 0.0
  %329 = vmatprep.subr.mxu0 0.0
  %330 = vmatpush1.xpose.msra.mxu0 0.0
  %331 = vmatprep.subr.mxu0 0.0
  %332 = vmatpush1.xpose.msra.mxu0 0.0
  %333 = vmatprep.subr.mxu0 0.0
  %334 = vmatpush1.xpose.msra.mxu0 0.0
  %335 = vmatprep.subr.mxu0 0.0
  %336 = vmatpush1.xpose.msra.mxu0 0.0
  %337 = vmatprep.subr.mxu0 0.0
  %338 = vmatpush1.xpose.msra.mxu0 0.0
  %339 = vmatprep.subr.mxu0 0.0
  %340 = vmatpush1.xpose.msra.mxu0 0.0
  %341 = vmatprep.subr.mxu0 0.0
  %342 = vmatpush1.xpose.msra.mxu0 0.0
  %343 = vmatprep.subr.mxu0 0.0
  %344 = vmatpush1.xpose.msra.mxu0 0.0
  %345 = vmatprep.subr.mxu0 0.0
  %346 = vmatpush1.xpose.msra.mxu0 0.0
  %347 = vmatprep.subr.mxu0 0.0
  %348 = vmatpush1.xpose.msra.mxu0 0.0
  %349 = vmatprep.subr.mxu0 0.0
  %350 = vmatpush1.xpose.msra.mxu0 0.0
  %351 = vmatprep.subr.mxu0 0.0
  %352 = vmatpush1.xpose.msra.mxu0 0.0
  %353 = vmatprep.subr.mxu0 0.0
  %354 = vmatpush1.xpose.msra.mxu0 0.0
  %355 = vmatprep.subr.mxu0 0.0
  %356 = vmatpush1.xpose.msra.mxu0 0.0
  %357 = vmatprep.subr.mxu0 0.0
  %358 = vmatpush1.xpose.msra.mxu0 0.0
  %359 = vmatprep.subr.mxu0 0.0
  %360 = vmatpush1.xpose.msra.mxu0 0.0
  %361 = vmatprep.subr.mxu0 0.0
  %362 = vmatpush1.xpose.msra.mxu0 0.0
  %363 = vmatprep.subr.mxu0 0.0
  %364 = vmatpush1.xpose.msra.mxu0 0.0
  %365 = vmatprep.subr.mxu0 0.0
  %366 = vmatpush1.xpose.msra.mxu0 0.0
  %367 = vmatprep.subr.mxu0 0.0
  %368 = vmatpush1.xpose.msra.mxu0 0.0
  %369 = vmatprep.mubr.f32.mxu0 0.0
  %370 = vmatmul.mubr.f32.gmra.mrb[0].mxu0 %v301
  %v371 = vpop.f32.mrb[0].mxu0
  %v372 = vadd.f32 0.0, %v371
  %v373 = vpop.f32.mrb[0].mxu0
  %374 = vdwg.mxu0
  %376 = vrot.lane.b32.xlu0 %v206, 96
  %v377 = vpop.permute.xlu0 %376
  %v379 = vsel %vm221, %v216, 0
  %v381 = vsel %vm221, %v377, 0
  %383 = vmatprep.subr.mxu0 0.0
  %384 = vmatpush1.xpose.msra.mxu0 %v381
  %385 = vmatprep.subr.mxu0 0.0
  %386 = vmatpush1.xpose.msra.mxu0 0.0
  %387 = vmatprep.subr.mxu0 0.0
  %388 = vmatpush1.xpose.msra.mxu0 0.0
  %389 = vmatprep.subr.mxu0 0.0
  %390 = vmatpush1.xpose.msra.mxu0 0.0
  %391 = vmatprep.subr.mxu0 0.0
  %392 = vmatpush1.xpose.msra.mxu0 0.0
  %393 = vmatprep.subr.mxu0 0.0
  %394 = vmatpush1.xpose.msra.mxu0 0.0
  %395 = vmatprep.subr.mxu0 0.0
  %396 = vmatpush1.xpose.msra.mxu0 0.0
  %397 = vmatprep.subr.mxu0 0.0
  %398 = vmatpush1.xpose.msra.mxu0 0.0
  %399 = vmatprep.subr.mxu0 0.0
  %400 = vmatpush1.xpose.msra.mxu0 0.0
  %401 = vmatprep.subr.mxu0 0.0
  %402 = vmatpush1.xpose.msra.mxu0 0.0
  %403 = vmatprep.subr.mxu0 0.0
  %404 = vmatpush1.xpose.msra.mxu0 0.0
  %405 = vmatprep.subr.mxu0 0.0
  %406 = vmatpush1.xpose.msra.mxu0 0.0
  %407 = vmatprep.subr.mxu0 0.0
  %408 = vmatpush1.xpose.msra.mxu0 0.0
  %409 = vmatprep.subr.mxu0 0.0
  %410 = vmatpush1.xpose.msra.mxu0 0.0
  %411 = vmatprep.subr.mxu0 0.0
  %412 = vmatpush1.xpose.msra.mxu0 0.0
  %413 = vmatprep.subr.mxu0 0.0
  %414 = vmatpush1.xpose.msra.mxu0 0.0
  %415 = vmatprep.subr.mxu0 0.0
  %416 = vmatpush1.xpose.msra.mxu0 0.0
  %417 = vmatprep.subr.mxu0 0.0
  %418 = vmatpush1.xpose.msra.mxu0 0.0
  %419 = vmatprep.subr.mxu0 0.0
  %420 = vmatpush1.xpose.msra.mxu0 0.0
  %421 = vmatprep.subr.mxu0 0.0
  %422 = vmatpush1.xpose.msra.mxu0 0.0
  %423 = vmatprep.subr.mxu0 0.0
  %424 = vmatpush1.xpose.msra.mxu0 0.0
  %425 = vmatprep.subr.mxu0 0.0
  %426 = vmatpush1.xpose.msra.mxu0 0.0
  %427 = vmatprep.subr.mxu0 0.0
  %428 = vmatpush1.xpose.msra.mxu0 0.0
  %429 = vmatprep.subr.mxu0 0.0
  %430 = vmatpush1.xpose.msra.mxu0 0.0
  %431 = vmatprep.subr.mxu0 0.0
  %432 = vmatpush1.xpose.msra.mxu0 0.0
  %433 = vmatprep.subr.mxu0 0.0
  %434 = vmatpush1.xpose.msra.mxu0 0.0
  %435 = vmatprep.subr.mxu0 0.0
  %436 = vmatpush1.xpose.msra.mxu0 0.0
  %437 = vmatprep.subr.mxu0 0.0
  %438 = vmatpush1.xpose.msra.mxu0 0.0
  %439 = vmatprep.subr.mxu0 0.0
  %440 = vmatpush1.xpose.msra.mxu0 0.0
  %441 = vmatprep.subr.mxu0 0.0
  %442 = vmatpush1.xpose.msra.mxu0 0.0
  %443 = vmatprep.subr.mxu0 0.0
  %444 = vmatpush1.xpose.msra.mxu0 0.0
  %445 = vmatprep.subr.mxu0 0.0
  %446 = vmatpush1.xpose.msra.mxu0 0.0
  %447 = vmatprep.mubr.f32.mxu0 0.0
  %448 = vmatmul.mubr.f32.gmra.mrb[0].mxu0 %v379
  %v449 = vpop.f32.mrb[0].mxu0
  %v450 = vadd.f32 0.0, %v449
  %v451 = vpop.f32.mrb[0].mxu0
  %452 = vdwg.mxu0
  %454 = vrot.lane.b32.xlu0 %v211, 96
  %v455 = vpop.permute.xlu0 %454
  %v457 = vsel %vm221, %v217, 0
  %v459 = vsel %vm221, %v455, 0
  %461 = vmatprep.subr.mxu0 0.0
  %462 = vmatpush1.xpose.msra.mxu0 %v459
  %463 = vmatprep.subr.mxu0 0.0
  %464 = vmatpush1.xpose.msra.mxu0 0.0
  %465 = vmatprep.subr.mxu0 0.0
  %466 = vmatpush1.xpose.msra.mxu0 0.0
  %467 = vmatprep.subr.mxu0 0.0
  %468 = vmatpush1.xpose.msra.mxu0 0.0
  %469 = vmatprep.subr.mxu0 0.0
  %470 = vmatpush1.xpose.msra.mxu0 0.0
  %471 = vmatprep.subr.mxu0 0.0
  %472 = vmatpush1.xpose.msra.mxu0 0.0
  %473 = vmatprep.subr.mxu0 0.0
  %474 = vmatpush1.xpose.msra.mxu0 0.0
  %475 = vmatprep.subr.mxu0 0.0
  %476 = vmatpush1.xpose.msra.mxu0 0.0
  %477 = vmatprep.subr.mxu0 0.0
  %478 = vmatpush1.xpose.msra.mxu0 0.0
  %479 = vmatprep.subr.mxu0 0.0
  %480 = vmatpush1.xpose.msra.mxu0 0.0
  %481 = vmatprep.subr.mxu0 0.0
  %482 = vmatpush1.xpose.msra.mxu0 0.0
  %483 = vmatprep.subr.mxu0 0.0
  %484 = vmatpush1.xpose.msra.mxu0 0.0
  %485 = vmatprep.subr.mxu0 0.0
  %486 = vmatpush1.xpose.msra.mxu0 0.0
  %487 = vmatprep.subr.mxu0 0.0
  %488 = vmatpush1.xpose.msra.mxu0 0.0
  %489 = vmatprep.subr.mxu0 0.0
  %490 = vmatpush1.xpose.msra.mxu0 0.0
  %491 = vmatprep.subr.mxu0 0.0
  %492 = vmatpush1.xpose.msra.mxu0 0.0
  %493 = vmatprep.subr.mxu0 0.0
  %494 = vmatpush1.xpose.msra.mxu0 0.0
  %495 = vmatprep.subr.mxu0 0.0
  %496 = vmatpush1.xpose.msra.mxu0 0.0
  %497 = vmatprep.subr.mxu0 0.0
  %498 = vmatpush1.xpose.msra.mxu0 0.0
  %499 = vmatprep.subr.mxu0 0.0
  %500 = vmatpush1.xpose.msra.mxu0 0.0
  %501 = vmatprep.subr.mxu0 0.0
  %502 = vmatpush1.xpose.msra.mxu0 0.0
  %503 = vmatprep.subr.mxu0 0.0
  %504 = vmatpush1.xpose.msra.mxu0 0.0
  %505 = vmatprep.subr.mxu0 0.0
  %506 = vmatpush1.xpose.msra.mxu0 0.0
  %507 = vmatprep.subr.mxu0 0.0
  %508 = vmatpush1.xpose.msra.mxu0 0.0
  %509 = vmatprep.subr.mxu0 0.0
  %510 = vmatpush1.xpose.msra.mxu0 0.0
  %511 = vmatprep.subr.mxu0 0.0
  %512 = vmatpush1.xpose.msra.mxu0 0.0
  %513 = vmatprep.subr.mxu0 0.0
  %514 = vmatpush1.xpose.msra.mxu0 0.0
  %515 = vmatprep.subr.mxu0 0.0
  %516 = vmatpush1.xpose.msra.mxu0 0.0
  %517 = vmatprep.subr.mxu0 0.0
  %518 = vmatpush1.xpose.msra.mxu0 0.0
  %519 = vmatprep.subr.mxu0 0.0
  %520 = vmatpush1.xpose.msra.mxu0 0.0
  %521 = vmatprep.subr.mxu0 0.0
  %522 = vmatpush1.xpose.msra.mxu0 0.0
  %523 = vmatprep.subr.mxu0 0.0
  %524 = vmatpush1.xpose.msra.mxu0 0.0
  %525 = vmatprep.mubr.f32.mxu0 0.0
  %526 = vmatmul.mubr.f32.gmra.mrb[0].mxu0 %v457
  %v527 = vpop.f32.mrb[0].mxu0
  %v528 = vadd.f32 0.0, %v527
  %v529 = vpop.f32.mrb[0].mxu0
  %530 = vdwg.mxu0
  %v531 = vsel %vm221, %v294, -inf
  %532 = vmax.xlane.f32.xlu0 %v531
  %v533 = vpop.xlane.xlu0 %532
  %v534 = vsel %vm221, %v372, -inf
  %535 = vmax.xlane.f32.xlu0 %v534
  %v536 = vpop.xlane.xlu0 %535
  %v537 = vsel %vm221, %v450, -inf
  %538 = vmax.xlane.f32.xlu0 %v537
  %v539 = vpop.xlane.xlu0 %538
  %v540 = vsel %vm221, %v528, -inf
  %541 = vmax.xlane.f32.xlu0 %v540
  %v542 = vpop.xlane.xlu0 %541
  %v543 = vsub.f32 %v294, %v533
  %v544 = vsub.f32 %v372, %v536
  %v545 = vsub.f32 %v450, %v539
  %v546 = vsub.f32 %v528, %v542
  %v547 = vmul.f32 %v543, 1.442695
  %v548 = vpow.pop %v547
  %v549 = vmul.f32 %v544, 1.442695
  %v550 = vpow.pop %v549
  %v551 = vmul.f32 %v545, 1.442695
  %v552 = vpow.pop %v551
  %v553 = vmul.f32 %v546, 1.442695
  %v554 = vpow.pop %v553
  %v555 = vsel %vm221, %v548, 0.0
  %556 = vadd.xlane.f32.xlu0 %v555
  %v557 = vpop.xlane.xlu0 %556
  %v558 = vsel %vm221, %v550, 0.0
  %559 = vadd.xlane.f32.xlu0 %v558
  %v560 = vpop.xlane.xlu0 %559
  %v561 = vsel %vm221, %v552, 0.0
  %562 = vadd.xlane.f32.xlu0 %v561
  %v563 = vpop.xlane.xlu0 %562
  %v564 = vsel %vm221, %v554, 0.0
  %565 = vadd.xlane.f32.xlu0 %v564
  %v566 = vpop.xlane.xlu0 %565
  %v567 = vrcp.pop %v557
  %v568 = vmul.f32 %v548, %v567
  %v569 = vrcp.pop %v560
  %v570 = vmul.f32 %v550, %v569
  %v571 = vrcp.pop %v563
  %v572 = vmul.f32 %v552, %v571
  %v573 = vrcp.pop %v566
  %v574 = vmul.f32 %v554, %v573
  %575 = vrot.lane.b32.xlu0 %v196, 64
  %v576 = vpop.permute.xlu0 %575
  %v579 = vsel %vm221, %v568, 0
  %581 = vmatprep.subr.mxu0 0.0
  %582 = vmatpush1.msra.mxu0 %v576
  %583 = vmatprep.subr.mxu0 0.0
  %584 = vmatpush1.msra.mxu0 0.0
  %585 = vmatprep.subr.mxu0 0.0
  %586 = vmatpush1.msra.mxu0 0.0
  %587 = vmatprep.subr.mxu0 0.0
  %588 = vmatpush1.msra.mxu0 0.0
  %589 = vmatprep.subr.mxu0 0.0
  %590 = vmatpush1.msra.mxu0 0.0
  %591 = vmatprep.subr.mxu0 0.0
  %592 = vmatpush1.msra.mxu0 0.0
  %593 = vmatprep.subr.mxu0 0.0
  %594 = vmatpush1.msra.mxu0 0.0
  %595 = vmatprep.subr.mxu0 0.0
  %596 = vmatpush1.msra.mxu0 0.0
  %597 = vmatprep.subr.mxu0 0.0
  %598 = vmatpush1.msra.mxu0 0.0
  %599 = vmatprep.subr.mxu0 0.0
  %600 = vmatpush1.msra.mxu0 0.0
  %601 = vmatprep.subr.mxu0 0.0
  %602 = vmatpush1.msra.mxu0 0.0
  %603 = vmatprep.subr.mxu0 0.0
  %604 = vmatpush1.msra.mxu0 0.0
  %605 = vmatprep.subr.mxu0 0.0
  %606 = vmatpush1.msra.mxu0 0.0
  %607 = vmatprep.subr.mxu0 0.0
  %608 = vmatpush1.msra.mxu0 0.0
  %609 = vmatprep.subr.mxu0 0.0
  %610 = vmatpush1.msra.mxu0 0.0
  %611 = vmatprep.subr.mxu0 0.0
  %612 = vmatpush1.msra.mxu0 0.0
  %613 = vmatprep.subr.mxu0 0.0
  %614 = vmatpush1.msra.mxu0 0.0
  %615 = vmatprep.subr.mxu0 0.0
  %616 = vmatpush1.msra.mxu0 0.0
  %617 = vmatprep.subr.mxu0 0.0
  %618 = vmatpush1.msra.mxu0 0.0
  %619 = vmatprep.subr.mxu0 0.0
  %620 = vmatpush1.msra.mxu0 0.0
  %621 = vmatprep.subr.mxu0 0.0
  %622 = vmatpush1.msra.mxu0 0.0
  %623 = vmatprep.subr.mxu0 0.0
  %624 = vmatpush1.msra.mxu0 0.0
  %625 = vmatprep.subr.mxu0 0.0
  %626 = vmatpush1.msra.mxu0 0.0
  %627 = vmatprep.subr.mxu0 0.0
  %628 = vmatpush1.msra.mxu0 0.0
  %629 = vmatprep.subr.mxu0 0.0
  %630 = vmatpush1.msra.mxu0 0.0
  %631 = vmatprep.subr.mxu0 0.0
  %632 = vmatpush1.msra.mxu0 0.0
  %633 = vmatprep.subr.mxu0 0.0
  %634 = vmatpush1.msra.mxu0 0.0
  %635 = vmatprep.subr.mxu0 0.0
  %636 = vmatpush1.msra.mxu0 0.0
  %637 = vmatprep.subr.mxu0 0.0
  %638 = vmatpush1.msra.mxu0 0.0
  %639 = vmatprep.subr.mxu0 0.0
  %640 = vmatpush1.msra.mxu0 0.0
  %641 = vmatprep.subr.mxu0 0.0
  %642 = vmatpush1.msra.mxu0 0.0
  %643 = vmatprep.subr.mxu0 0.0
  %644 = vmatpush1.msra.mxu0 0.0
  %645 = vmatprep.mubr.f32.mxu0 0.0
  %646 = vmatmul.mubr.f32.gmra.mrb[0].mxu0 %v579
  %v647 = vpop.f32.mrb[0].mxu0
  %v648 = vadd.f32 0.0, %v647
  %v649 = vpop.f32.mrb[0].mxu0
  %650 = vdwg.mxu0
  %651 = vrot.lane.b32.xlu0 %v201, 64
  %v652 = vpop.permute.xlu0 %651
  %v655 = vsel %vm221, %v570, 0
  %657 = vmatprep.subr.mxu0 0.0
  %658 = vmatpush1.msra.mxu0 %v652
  %659 = vmatprep.subr.mxu0 0.0
  %660 = vmatpush1.msra.mxu0 0.0
  %661 = vmatprep.subr.mxu0 0.0
  %662 = vmatpush1.msra.mxu0 0.0
  %663 = vmatprep.subr.mxu0 0.0
  %664 = vmatpush1.msra.mxu0 0.0
  %665 = vmatprep.subr.mxu0 0.0
  %666 = vmatpush1.msra.mxu0 0.0
  %667 = vmatprep.subr.mxu0 0.0
  %668 = vmatpush1.msra.mxu0 0.0
  %669 = vmatprep.subr.mxu0 0.0
  %670 = vmatpush1.msra.mxu0 0.0
  %671 = vmatprep.subr.mxu0 0.0
  %672 = vmatpush1.msra.mxu0 0.0
  %673 = vmatprep.subr.mxu0 0.0
  %674 = vmatpush1.msra.mxu0 0.0
  %675 = vmatprep.subr.mxu0 0.0
  %676 = vmatpush1.msra.mxu0 0.0
  %677 = vmatprep.subr.mxu0 0.0
  %678 = vmatpush1.msra.mxu0 0.0
  %679 = vmatprep.subr.mxu0 0.0
  %680 = vmatpush1.msra.mxu0 0.0
  %681 = vmatprep.subr.mxu0 0.0
  %682 = vmatpush1.msra.mxu0 0.0
  %683 = vmatprep.subr.mxu0 0.0
  %684 = vmatpush1.msra.mxu0 0.0
  %685 = vmatprep.subr.mxu0 0.0
  %686 = vmatpush1.msra.mxu0 0.0
  %687 = vmatprep.subr.mxu0 0.0
  %688 = vmatpush1.msra.mxu0 0.0
  %689 = vmatprep.subr.mxu0 0.0
  %690 = vmatpush1.msra.mxu0 0.0
  %691 = vmatprep.subr.mxu0 0.0
  %692 = vmatpush1.msra.mxu0 0.0
  %693 = vmatprep.subr.mxu0 0.0
  %694 = vmatpush1.msra.mxu0 0.0
  %695 = vmatprep.subr.mxu0 0.0
  %696 = vmatpush1.msra.mxu0 0.0
  %697 = vmatprep.subr.mxu0 0.0
  %698 = vmatpush1.msra.mxu0 0.0
  %699 = vmatprep.subr.mxu0 0.0
  %700 = vmatpush1.msra.mxu0 0.0
  %701 = vmatprep.subr.mxu0 0.0
  %702 = vmatpush1.msra.mxu0 0.0
  %703 = vmatprep.subr.mxu0 0.0
  %704 = vmatpush1.msra.mxu0 0.0
  %705 = vmatprep.subr.mxu0 0.0
  %706 = vmatpush1.msra.mxu0 0.0
  %707 = vmatprep.subr.mxu0 0.0
  %708 = vmatpush1.msra.mxu0 0.0
  %709 = vmatprep.subr.mxu0 0.0
  %710 = vmatpush1.msra.mxu0 0.0
  %711 = vmatprep.subr.mxu0 0.0
  %712 = vmatpush1.msra.mxu0 0.0
  %713 = vmatprep.subr.mxu0 0.0
  %714 = vmatpush1.msra.mxu0 0.0
  %715 = vmatprep.subr.mxu0 0.0
  %716 = vmatpush1.msra.mxu0 0.0
  %717 = vmatprep.subr.mxu0 0.0
  %718 = vmatpush1.msra.mxu0 0.0
  %719 = vmatprep.subr.mxu0 0.0
  %720 = vmatpush1.msra.mxu0 0.0
  %721 = vmatprep.mubr.f32.mxu0 0.0
  %722 = vmatmul.mubr.f32.gmra.mrb[0].mxu0 %v655
  %v723 = vpop.f32.mrb[0].mxu0
  %v724 = vadd.f32 0.0, %v723
  %v725 = vpop.f32.mrb[0].mxu0
  %726 = vdwg.mxu0
  %727 = vrot.lane.b32.xlu0 %v206, 64
  %v728 = vpop.permute.xlu0 %727
  %v731 = vsel %vm221, %v572, 0
  %733 = vmatprep.subr.mxu0 0.0
  %734 = vmatpush1.msra.mxu0 %v728
  %735 = vmatprep.subr.mxu0 0.0
  %736 = vmatpush1.msra.mxu0 0.0
  %737 = vmatprep.subr.mxu0 0.0
  %738 = vmatpush1.msra.mxu0 0.0
  %739 = vmatprep.subr.mxu0 0.0
  %740 = vmatpush1.msra.mxu0 0.0
  %741 = vmatprep.subr.mxu0 0.0
  %742 = vmatpush1.msra.mxu0 0.0
  %743 = vmatprep.subr.mxu0 0.0
  %744 = vmatpush1.msra.mxu0 0.0
  %745 = vmatprep.subr.mxu0 0.0
  %746 = vmatpush1.msra.mxu0 0.0
  %747 = vmatprep.subr.mxu0 0.0
  %748 = vmatpush1.msra.mxu0 0.0
  %749 = vmatprep.subr.mxu0 0.0
  %750 = vmatpush1.msra.mxu0 0.0
  %751 = vmatprep.subr.mxu0 0.0
  %752 = vmatpush1.msra.mxu0 0.0
  %753 = vmatprep.subr.mxu0 0.0
  %754 = vmatpush1.msra.mxu0 0.0
  %755 = vmatprep.subr.mxu0 0.0
  %756 = vmatpush1.msra.mxu0 0.0
  %757 = vmatprep.subr.mxu0 0.0
  %758 = vmatpush1.msra.mxu0 0.0
  %759 = vmatprep.subr.mxu0 0.0
  %760 = vmatpush1.msra.mxu0 0.0
  %761 = vmatprep.subr.mxu0 0.0
  %762 = vmatpush1.msra.mxu0 0.0
  %763 = vmatprep.subr.mxu0 0.0
  %764 = vmatpush1.msra.mxu0 0.0
  %765 = vmatprep.subr.mxu0 0.0
  %766 = vmatpush1.msra.mxu0 0.0
  %767 = vmatprep.subr.mxu0 0.0
  %768 = vmatpush1.msra.mxu0 0.0
  %769 = vmatprep.subr.mxu0 0.0
  %770 = vmatpush1.msra.mxu0 0.0
  %771 = vmatprep.subr.mxu0 0.0
  %772 = vmatpush1.msra.mxu0 0.0
  %773 = vmatprep.subr.mxu0 0.0
  %774 = vmatpush1.msra.mxu0 0.0
  %775 = vmatprep.subr.mxu0 0.0
  %776 = vmatpush1.msra.mxu0 0.0
  %777 = vmatprep.subr.mxu0 0.0
  %778 = vmatpush1.msra.mxu0 0.0
  %779 = vmatprep.subr.mxu0 0.0
  %780 = vmatpush1.msra.mxu0 0.0
  %781 = vmatprep.subr.mxu0 0.0
  %782 = vmatpush1.msra.mxu0 0.0
  %783 = vmatprep.subr.mxu0 0.0
  %784 = vmatpush1.msra.mxu0 0.0
  %785 = vmatprep.subr.mxu0 0.0
  %786 = vmatpush1.msra.mxu0 0.0
  %787 = vmatprep.subr.mxu0 0.0
  %788 = vmatpush1.msra.mxu0 0.0
  %789 = vmatprep.subr.mxu0 0.0
  %790 = vmatpush1.msra.mxu0 0.0
  %791 = vmatprep.subr.mxu0 0.0
  %792 = vmatpush1.msra.mxu0 0.0
  %793 = vmatprep.subr.mxu0 0.0
  %794 = vmatpush1.msra.mxu0 0.0
  %795 = vmatprep.subr.mxu0 0.0
  %796 = vmatpush1.msra.mxu0 0.0
  %797 = vmatprep.mubr.f32.mxu0 0.0
  %798 = vmatmul.mubr.f32.gmra.mrb[0].mxu0 %v731
  %v799 = vpop.f32.mrb[0].mxu0
  %v800 = vadd.f32 0.0, %v799
  %v801 = vpop.f32.mrb[0].mxu0
  %802 = vdwg.mxu0
  %803 = vrot.lane.b32.xlu0 %v211, 64
  %v804 = vpop.permute.xlu0 %803
  %v807 = vsel %vm221, %v574, 0
  %809 = vmatprep.subr.mxu0 0.0
  %810 = vmatpush1.msra.mxu0 %v804
  %811 = vmatprep.subr.mxu0 0.0
  %812 = vmatpush1.msra.mxu0 0.0
  %813 = vmatprep.subr.mxu0 0.0
  %814 = vmatpush1.msra.mxu0 0.0
  %815 = vmatprep.subr.mxu0 0.0
  %816 = vmatpush1.msra.mxu0 0.0
  %817 = vmatprep.subr.mxu0 0.0
  %818 = vmatpush1.msra.mxu0 0.0
  %819 = vmatprep.subr.mxu0 0.0
  %820 = vmatpush1.msra.mxu0 0.0
  %821 = vmatprep.subr.mxu0 0.0
  %822 = vmatpush1.msra.mxu0 0.0
  %823 = vmatprep.subr.mxu0 0.0
  %824 = vmatpush1.msra.mxu0 0.0
  %825 = vmatprep.subr.mxu0 0.0
  %826 = vmatpush1.msra.mxu0 0.0
  %827 = vmatprep.subr.mxu0 0.0
  %828 = vmatpush1.msra.mxu0 0.0
  %829 = vmatprep.subr.mxu0 0.0
  %830 = vmatpush1.msra.mxu0 0.0
  %831 = vmatprep.subr.mxu0 0.0
  %832 = vmatpush1.msra.mxu0 0.0
  %833 = vmatprep.subr.mxu0 0.0
  %834 = vmatpush1.msra.mxu0 0.0
  %835 = vmatprep.subr.mxu0 0.0
  %836 = vmatpush1.msra.mxu0 0.0
  %837 = vmatprep.subr.mxu0 0.0
  %838 = vmatpush1.msra.mxu0 0.0
  %839 = vmatprep.subr.mxu0 0.0
  %840 = vmatpush1.msra.mxu0 0.0
  %841 = vmatprep.subr.mxu0 0.0
  %842 = vmatpush1.msra.mxu0 0.0
  %843 = vmatprep.subr.mxu0 0.0
  %844 = vmatpush1.msra.mxu0 0.0
  %845 = vmatprep.subr.mxu0 0.0
  %846 = vmatpush1.msra.mxu0 0.0
  %847 = vmatprep.subr.mxu0 0.0
  %848 = vmatpush1.msra.mxu0 0.0
  %849 = vmatprep.subr.mxu0 0.0
  %850 = vmatpush1.msra.mxu0 0.0
  %851 = vmatprep.subr.mxu0 0.0
  %852 = vmatpush1.msra.mxu0 0.0
  %853 = vmatprep.subr.mxu0 0.0
  %854 = vmatpush1.msra.mxu0 0.0
  %855 = vmatprep.subr.mxu0 0.0
  %856 = vmatpush1.msra.mxu0 0.0
  %857 = vmatprep.subr.mxu0 0.0
  %858 = vmatpush1.msra.mxu0 0.0
  %859 = vmatprep.subr.mxu0 0.0
  %860 = vmatpush1.msra.mxu0 0.0
  %861 = vmatprep.subr.mxu0 0.0
  %862 = vmatpush1.msra.mxu0 0.0
  %863 = vmatprep.subr.mxu0 0.0
  %864 = vmatpush1.msra.mxu0 0.0
  %865 = vmatprep.subr.mxu0 0.0
  %866 = vmatpush1.msra.mxu0 0.0
  %867 = vmatprep.subr.mxu0 0.0
  %868 = vmatpush1.msra.mxu0 0.0
  %869 = vmatprep.subr.mxu0 0.0
  %870 = vmatpush1.msra.mxu0 0.0
  %871 = vmatprep.subr.mxu0 0.0
  %872 = vmatpush1.msra.mxu0 0.0
  %873 = vmatprep.mubr.f32.mxu0 0.0
  %874 = vmatmul.mubr.f32.gmra.mrb[0].mxu0 %v807
  %v875 = vpop.f32.mrb[0].mxu0
  %v876 = vadd.f32 0.0, %v875
  %v877 = vpop.f32.mrb[0].mxu0
  %878 = vdwg.mxu0
  %879 = vrot.lane.b32.xlu0 %v214, 120
  %v880 = vpop.permute.xlu0 %879
  %881 = vrot.lane.b32.xlu0 %v196, 88
  %v882 = vpop.permute.xlu0 %881
  %v883 = vsel %vm221, %v880, 0
  %v885 = vsel %vm221, %v882, 0
  %887 = vmatprep.subr.mxu0 0.0
  %888 = vmatpush1.xpose.msra.mxu0 %v885
  %889 = vmatprep.subr.mxu0 0.0
  %890 = vmatpush1.xpose.msra.mxu0 0.0
  %891 = vmatprep.subr.mxu0 0.0
  %892 = vmatpush1.xpose.msra.mxu0 0.0
  %893 = vmatprep.subr.mxu0 0.0
  %894 = vmatpush1.xpose.msra.mxu0 0.0
  %895 = vmatprep.subr.mxu0 0.0
  %896 = vmatpush1.xpose.msra.mxu0 0.0
  %897 = vmatprep.subr.mxu0 0.0
  %898 = vmatpush1.xpose.msra.mxu0 0.0
  %899 = vmatprep.subr.mxu0 0.0
  %900 = vmatpush1.xpose.msra.mxu0 0.0
  %901 = vmatprep.subr.mxu0 0.0
  %902 = vmatpush1.xpose.msra.mxu0 0.0
  %903 = vmatprep.subr.mxu0 0.0
  %904 = vmatpush1.xpose.msra.mxu0 0.0
  %905 = vmatprep.subr.mxu0 0.0
  %906 = vmatpush1.xpose.msra.mxu0 0.0
  %907 = vmatprep.subr.mxu0 0.0
  %908 = vmatpush1.xpose.msra.mxu0 0.0
  %909 = vmatprep.subr.mxu0 0.0
  %910 = vmatpush1.xpose.msra.mxu0 0.0
  %911 = vmatprep.subr.mxu0 0.0
  %912 = vmatpush1.xpose.msra.mxu0 0.0
  %913 = vmatprep.subr.mxu0 0.0
  %914 = vmatpush1.xpose.msra.mxu0 0.0
  %915 = vmatprep.subr.mxu0 0.0
  %916 = vmatpush1.xpose.msra.mxu0 0.0
  %917 = vmatprep.subr.mxu0 0.0
  %918 = vmatpush1.xpose.msra.mxu0 0.0
  %919 = vmatprep.subr.mxu0 0.0
  %920 = vmatpush1.xpose.msra.mxu0 0.0
  %921 = vmatprep.subr.mxu0 0.0
  %922 = vmatpush1.xpose.msra.mxu0 0.0
  %923 = vmatprep.subr.mxu0 0.0
  %924 = vmatpush1.xpose.msra.mxu0 0.0
  %925 = vmatprep.subr.mxu0 0.0
  %926 = vmatpush1.xpose.msra.mxu0 0.0
  %927 = vmatprep.subr.mxu0 0.0
  %928 = vmatpush1.xpose.msra.mxu0 0.0
  %929 = vmatprep.subr.mxu0 0.0
  %930 = vmatpush1.xpose.msra.mxu0 0.0
  %931 = vmatprep.subr.mxu0 0.0
  %932 = vmatpush1.xpose.msra.mxu0 0.0
  %933 = vmatprep.subr.mxu0 0.0
  %934 = vmatpush1.xpose.msra.mxu0 0.0
  %935 = vmatprep.subr.mxu0 0.0
  %936 = vmatpush1.xpose.msra.mxu0 0.0
  %937 = vmatprep.subr.mxu0 0.0
  %938 = vmatpush1.xpose.msra.mxu0 0.0
  %939 = vmatprep.subr.mxu0 0.0
  %940 = vmatpush1.xpose.msra.mxu0 0.0
  %941 = vmatprep.subr.mxu0 0.0
  %942 = vmatpush1.xpose.msra.mxu0 0.0
  %943 = vmatprep.subr.mxu0 0.0
  %944 = vmatpush1.xpose.msra.mxu0 0.0
  %945 = vmatprep.subr.mxu0 0.0
  %946 = vmatpush1.xpose.msra.mxu0 0.0
  %947 = vmatprep.subr.mxu0 0.0
  %948 = vmatpush1.xpose.msra.mxu0 0.0
  %949 = vmatprep.subr.mxu0 0.0
  %950 = vmatpush1.xpose.msra.mxu0 0.0
  %951 = vmatprep.mubr.f32.mxu0 0.0
  %952 = vmatmul.mubr.f32.gmra.mrb[0].mxu0 %v883
  %v953 = vpop.f32.mrb[0].mxu0
  %v954 = vadd.f32 0.0, %v953
  %v955 = vpop.f32.mrb[0].mxu0
  %956 = vdwg.mxu0
  %957 = vrot.lane.b32.xlu0 %v215, 120
  %v958 = vpop.permute.xlu0 %957
  %959 = vrot.lane.b32.xlu0 %v201, 88
  %v960 = vpop.permute.xlu0 %959
  %v961 = vsel %vm221, %v958, 0
  %v963 = vsel %vm221, %v960, 0
  %965 = vmatprep.subr.mxu0 0.0
  %966 = vmatpush1.xpose.msra.mxu0 %v963
  %967 = vmatprep.subr.mxu0 0.0
  %968 = vmatpush1.xpose.msra.mxu0 0.0
  %969 = vmatprep.subr.mxu0 0.0
  %970 = vmatpush1.xpose.msra.mxu0 0.0
  %971 = vmatprep.subr.mxu0 0.0
  %972 = vmatpush1.xpose.msra.mxu0 0.0
  %973 = vmatprep.subr.mxu0 0.0
  %974 = vmatpush1.xpose.msra.mxu0 0.0
  %975 = vmatprep.subr.mxu0 0.0
  %976 = vmatpush1.xpose.msra.mxu0 0.0
  %977 = vmatprep.subr.mxu0 0.0
  %978 = vmatpush1.xpose.msra.mxu0 0.0
  %979 = vmatprep.subr.mxu0 0.0
  %980 = vmatpush1.xpose.msra.mxu0 0.0
  %981 = vmatprep.subr.mxu0 0.0
  %982 = vmatpush1.xpose.msra.mxu0 0.0
  %983 = vmatprep.subr.mxu0 0.0
  %984 = vmatpush1.xpose.msra.mxu0 0.0
  %985 = vmatprep.subr.mxu0 0.0
  %986 = vmatpush1.xpose.msra.mxu0 0.0
  %987 = vmatprep.subr.mxu0 0.0
  %988 = vmatpush1.xpose.msra.mxu0 0.0
  %989 = vmatprep.subr.mxu0 0.0
  %990 = vmatpush1.xpose.msra.mxu0 0.0
  %991 = vmatprep.subr.mxu0 0.0
  %992 = vmatpush1.xpose.msra.mxu0 0.0
  %993 = vmatprep.subr.mxu0 0.0
  %994 = vmatpush1.xpose.msra.mxu0 0.0
  %995 = vmatprep.subr.mxu0 0.0
  %996 = vmatpush1.xpose.msra.mxu0 0.0
  %997 = vmatprep.subr.mxu0 0.0
  %998 = vmatpush1.xpose.msra.mxu0 0.0
  %999 = vmatprep.subr.mxu0 0.0
  %1000 = vmatpush1.xpose.msra.mxu0 0.0
  %1001 = vmatprep.subr.mxu0 0.0
  %1002 = vmatpush1.xpose.msra.mxu0 0.0
  %1003 = vmatprep.subr.mxu0 0.0
  %1004 = vmatpush1.xpose.msra.mxu0 0.0
  %1005 = vmatprep.subr.mxu0 0.0
  %1006 = vmatpush1.xpose.msra.mxu0 0.0
  %1007 = vmatprep.subr.mxu0 0.0
  %1008 = vmatpush1.xpose.msra.mxu0 0.0
  %1009 = vmatprep.subr.mxu0 0.0
  %1010 = vmatpush1.xpose.msra.mxu0 0.0
  %1011 = vmatprep.subr.mxu0 0.0
  %1012 = vmatpush1.xpose.msra.mxu0 0.0
  %1013 = vmatprep.subr.mxu0 0.0
  %1014 = vmatpush1.xpose.msra.mxu0 0.0
  %1015 = vmatprep.subr.mxu0 0.0
  %1016 = vmatpush1.xpose.msra.mxu0 0.0
  %1017 = vmatprep.subr.mxu0 0.0
  %1018 = vmatpush1.xpose.msra.mxu0 0.0
  %1019 = vmatprep.subr.mxu0 0.0
  %1020 = vmatpush1.xpose.msra.mxu0 0.0
  %1021 = vmatprep.subr.mxu0 0.0
  %1022 = vmatpush1.xpose.msra.mxu0 0.0
  %1023 = vmatprep.subr.mxu0 0.0
  %1024 = vmatpush1.xpose.msra.mxu0 0.0
  %1025 = vmatprep.subr.mxu0 0.0
  %1026 = vmatpush1.xpose.msra.mxu0 0.0
  %1027 = vmatprep.subr.mxu0 0.0
  %1028 = vmatpush1.xpose.msra.mxu0 0.0
  %1029 = vmatprep.mubr.f32.mxu0 0.0
  %1030 = vmatmul.mubr.f32.gmra.mrb[0].mxu0 %v961
  %v1031 = vpop.f32.mrb[0].mxu0
  %v1032 = vadd.f32 0.0, %v1031
  %v1033 = vpop.f32.mrb[0].mxu0
  %1034 = vdwg.mxu0
  %1035 = vrot.lane.b32.xlu0 %v216, 120
  %v1036 = vpop.permute.xlu0 %1035
  %1037 = vrot.lane.b32.xlu0 %v206, 88
  %v1038 = vpop.permute.xlu0 %1037
  %v1039 = vsel %vm221, %v1036, 0
  %v1041 = vsel %vm221, %v1038, 0
  %1043 = vmatprep.subr.mxu0 0.0
  %1044 = vmatpush1.xpose.msra.mxu0 %v1041
  %1045 = vmatprep.subr.mxu0 0.0
  %1046 = vmatpush1.xpose.msra.mxu0 0.0
  %1047 = vmatprep.subr.mxu0 0.0
  %1048 = vmatpush1.xpose.msra.mxu0 0.0
  %1049 = vmatprep.subr.mxu0 0.0
  %1050 = vmatpush1.xpose.msra.mxu0 0.0
  %1051 = vmatprep.subr.mxu0 0.0
  %1052 = vmatpush1.xpose.msra.mxu0 0.0
  %1053 = vmatprep.subr.mxu0 0.0
  %1054 = vmatpush1.xpose.msra.mxu0 0.0
  %1055 = vmatprep.subr.mxu0 0.0
  %1056 = vmatpush1.xpose.msra.mxu0 0.0
  %1057 = vmatprep.subr.mxu0 0.0
  %1058 = vmatpush1.xpose.msra.mxu0 0.0
  %1059 = vmatprep.subr.mxu0 0.0
  %1060 = vmatpush1.xpose.msra.mxu0 0.0
  %1061 = vmatprep.subr.mxu0 0.0
  %1062 = vmatpush1.xpose.msra.mxu0 0.0
  %1063 = vmatprep.subr.mxu0 0.0
  %1064 = vmatpush1.xpose.msra.mxu0 0.0
  %1065 = vmatprep.subr.mxu0 0.0
  %1066 = vmatpush1.xpose.msra.mxu0 0.0
  %1067 = vmatprep.subr.mxu0 0.0
  %1068 = vmatpush1.xpose.msra.mxu0 0.0
  %1069 = vmatprep.subr.mxu0 0.0
  %1070 = vmatpush1.xpose.msra.mxu0 0.0
  %1071 = vmatprep.subr.mxu0 0.0
  %1072 = vmatpush1.xpose.msra.mxu0 0.0
  %1073 = vmatprep.subr.mxu0 0.0
  %1074 = vmatpush1.xpose.msra.mxu0 0.0
  %1075 = vmatprep.subr.mxu0 0.0
  %1076 = vmatpush1.xpose.msra.mxu0 0.0
  %1077 = vmatprep.subr.mxu0 0.0
  %1078 = vmatpush1.xpose.msra.mxu0 0.0
  %1079 = vmatprep.subr.mxu0 0.0
  %1080 = vmatpush1.xpose.msra.mxu0 0.0
  %1081 = vmatprep.subr.mxu0 0.0
  %1082 = vmatpush1.xpose.msra.mxu0 0.0
  %1083 = vmatprep.subr.mxu0 0.0
  %1084 = vmatpush1.xpose.msra.mxu0 0.0
  %1085 = vmatprep.subr.mxu0 0.0
  %1086 = vmatpush1.xpose.msra.mxu0 0.0
  %1087 = vmatprep.subr.mxu0 0.0
  %1088 = vmatpush1.xpose.msra.mxu0 0.0
  %1089 = vmatprep.subr.mxu0 0.0
  %1090 = vmatpush1.xpose.msra.mxu0 0.0
  %1091 = vmatprep.subr.mxu0 0.0
  %1092 = vmatpush1.xpose.msra.mxu0 0.0
  %1093 = vmatprep.subr.mxu0 0.0
  %1094 = vmatpush1.xpose.msra.mxu0 0.0
  %1095 = vmatprep.subr.mxu0 0.0
  %1096 = vmatpush1.xpose.msra.mxu0 0.0
  %1097 = vmatprep.subr.mxu0 0.0
  %1098 = vmatpush1.xpose.msra.mxu0 0.0
  %1099 = vmatprep.subr.mxu0 0.0
  %1100 = vmatpush1.xpose.msra.mxu0 0.0
  %1101 = vmatprep.subr.mxu0 0.0
  %1102 = vmatpush1.xpose.msra.mxu0 0.0
  %1103 = vmatprep.subr.mxu0 0.0
  %1104 = vmatpush1.xpose.msra.mxu0 0.0
  %1105 = vmatprep.subr.mxu0 0.0
  %1106 = vmatpush1.xpose.msra.mxu0 0.0
  %1107 = vmatprep.mubr.f32.mxu0 0.0
  %1108 = vmatmul.mubr.f32.gmra.mrb[0].mxu0 %v1039
  %v1109 = vpop.f32.mrb[0].mxu0
  %v1110 = vadd.f32 0.0, %v1109
  %v1111 = vpop.f32.mrb[0].mxu0
  %1112 = vdwg.mxu0
  %1113 = vrot.lane.b32.xlu0 %v217, 120
  %v1114 = vpop.permute.xlu0 %1113
  %1115 = vrot.lane.b32.xlu0 %v211, 88
  %v1116 = vpop.permute.xlu0 %1115
  %v1117 = vsel %vm221, %v1114, 0
  %v1119 = vsel %vm221, %v1116, 0
  %1121 = vmatprep.subr.mxu0 0.0
  %1122 = vmatpush1.xpose.msra.mxu0 %v1119
  %1123 = vmatprep.subr.mxu0 0.0
  %1124 = vmatpush1.xpose.msra.mxu0 0.0
  %1125 = vmatprep.subr.mxu0 0.0
  %1126 = vmatpush1.xpose.msra.mxu0 0.0
  %1127 = vmatprep.subr.mxu0 0.0
  %1128 = vmatpush1.xpose.msra.mxu0 0.0
  %1129 = vmatprep.subr.mxu0 0.0
  %1130 = vmatpush1.xpose.msra.mxu0 0.0
  %1131 = vmatprep.subr.mxu0 0.0
  %1132 = vmatpush1.xpose.msra.mxu0 0.0
  %1133 = vmatprep.subr.mxu0 0.0
  %1134 = vmatpush1.xpose.msra.mxu0 0.0
  %1135 = vmatprep.subr.mxu0 0.0
  %1136 = vmatpush1.xpose.msra.mxu0 0.0
  %1137 = vmatprep.subr.mxu0 0.0
  %1138 = vmatpush1.xpose.msra.mxu0 0.0
  %1139 = vmatprep.subr.mxu0 0.0
  %1140 = vmatpush1.xpose.msra.mxu0 0.0
  %1141 = vmatprep.subr.mxu0 0.0
  %1142 = vmatpush1.xpose.msra.mxu0 0.0
  %1143 = vmatprep.subr.mxu0 0.0
  %1144 = vmatpush1.xpose.msra.mxu0 0.0
  %1145 = vmatprep.subr.mxu0 0.0
  %1146 = vmatpush1.xpose.msra.mxu0 0.0
  %1147 = vmatprep.subr.mxu0 0.0
  %1148 = vmatpush1.xpose.msra.mxu0 0.0
  %1149 = vmatprep.subr.mxu0 0.0
  %1150 = vmatpush1.xpose.msra.mxu0 0.0
  %1151 = vmatprep.subr.mxu0 0.0
  %1152 = vmatpush1.xpose.msra.mxu0 0.0
  %1153 = vmatprep.subr.mxu0 0.0
  %1154 = vmatpush1.xpose.msra.mxu0 0.0
  %1155 = vmatprep.subr.mxu0 0.0
  %1156 = vmatpush1.xpose.msra.mxu0 0.0
  %1157 = vmatprep.subr.mxu0 0.0
  %1158 = vmatpush1.xpose.msra.mxu0 0.0
  %1159 = vmatprep.subr.mxu0 0.0
  %1160 = vmatpush1.xpose.msra.mxu0 0.0
  %1161 = vmatprep.subr.mxu0 0.0
  %1162 = vmatpush1.xpose.msra.mxu0 0.0
  %1163 = vmatprep.subr.mxu0 0.0
  %1164 = vmatpush1.xpose.msra.mxu0 0.0
  %1165 = vmatprep.subr.mxu0 0.0
  %1166 = vmatpush1.xpose.msra.mxu0 0.0
  %1167 = vmatprep.subr.mxu0 0.0
  %1168 = vmatpush1.xpose.msra.mxu0 0.0
  %1169 = vmatprep.subr.mxu0 0.0
  %1170 = vmatpush1.xpose.msra.mxu0 0.0
  %1171 = vmatprep.subr.mxu0 0.0
  %1172 = vmatpush1.xpose.msra.mxu0 0.0
  %1173 = vmatprep.subr.mxu0 0.0
  %1174 = vmatpush1.xpose.msra.mxu0 0.0
  %1175 = vmatprep.subr.mxu0 0.0
  %1176 = vmatpush1.xpose.msra.mxu0 0.0
  %1177 = vmatprep.subr.mxu0 0.0
  %1178 = vmatpush1.xpose.msra.mxu0 0.0
  %1179 = vmatprep.subr.mxu0 0.0
  %1180 = vmatpush1.xpose.msra.mxu0 0.0
  %1181 = vmatprep.subr.mxu0 0.0
  %1182 = vmatpush1.xpose.msra.mxu0 0.0
  %1183 = vmatprep.subr.mxu0 0.0
  %1184 = vmatpush1.xpose.msra.mxu0 0.0
  %1185 = vmatprep.mubr.f32.mxu0 0.0
  %1186 = vmatmul.mubr.f32.gmra.mrb[0].mxu0 %v1117
  %v1187 = vpop.f32.mrb[0].mxu0
  %v1188 = vadd.f32 0.0, %v1187
  %v1189 = vpop.f32.mrb[0].mxu0
  %1190 = vdwg.mxu0
  %v1191 = vsel %vm221, %v954, -inf
  %1192 = vmax.xlane.f32.xlu0 %v1191
  %v1193 = vpop.xlane.xlu0 %1192
  %v1194 = vsel %vm221, %v1032, -inf
  %1195 = vmax.xlane.f32.xlu0 %v1194
  %v1196 = vpop.xlane.xlu0 %1195
  %v1197 = vsel %vm221, %v1110, -inf
  %1198 = vmax.xlane.f32.xlu0 %v1197
  %v1199 = vpop.xlane.xlu0 %1198
  %v1200 = vsel %vm221, %v1188, -inf
  %1201 = vmax.xlane.f32.xlu0 %v1200
  %v1202 = vpop.xlane.xlu0 %1201
  %v1203 = vsub.f32 %v954, %v1193
  %v1204 = vsub.f32 %v1032, %v1196
  %v1205 = vsub.f32 %v1110, %v1199
  %v1206 = vsub.f32 %v1188, %v1202
  %v1207 = vmul.f32 %v1203, 1.442695
  %v1208 = vpow.pop %v1207
  %v1209 = vmul.f32 %v1204, 1.442695
  %v1210 = vpow.pop %v1209
  %v1211 = vmul.f32 %v1205, 1.442695
  %v1212 = vpow.pop %v1211
  %v1213 = vmul.f32 %v1206, 1.442695
  %v1214 = vpow.pop %v1213
  %v1215 = vsel %vm221, %v1208, 0.0
  %1216 = vadd.xlane.f32.xlu0 %v1215
  %v1217 = vpop.xlane.xlu0 %1216
  %v1218 = vsel %vm221, %v1210, 0.0
  %1219 = vadd.xlane.f32.xlu0 %v1218
  %v1220 = vpop.xlane.xlu0 %1219
  %v1221 = vsel %vm221, %v1212, 0.0
  %1222 = vadd.xlane.f32.xlu0 %v1221
  %v1223 = vpop.xlane.xlu0 %1222
  %v1224 = vsel %vm221, %v1214, 0.0
  %1225 = vadd.xlane.f32.xlu0 %v1224
  %v1226 = vpop.xlane.xlu0 %1225
  %v1227 = vrcp.pop %v1217
  %v1228 = vmul.f32 %v1208, %v1227
  %v1229 = vrcp.pop %v1220
  %v1230 = vmul.f32 %v1210, %v1229
  %v1231 = vrcp.pop %v1223
  %v1232 = vmul.f32 %v1212, %v1231
  %v1233 = vrcp.pop %v1226
  %v1234 = vmul.f32 %v1214, %v1233
  %1235 = vrot.lane.b32.xlu0 %v196, 56
  %v1236 = vpop.permute.xlu0 %1235
  %v1239 = vsel %vm221, %v1228, 0
  %1241 = vmatprep.subr.mxu0 0.0
  %1242 = vmatpush1.msra.mxu0 %v1236
  %1243 = vmatprep.subr.mxu0 0.0
  %1244 = vmatpush1.msra.mxu0 0.0
  %1245 = vmatprep.subr.mxu0 0.0
  %1246 = vmatpush1.msra.mxu0 0.0
  %1247 = vmatprep.subr.mxu0 0.0
  %1248 = vmatpush1.msra.mxu0 0.0
  %1249 = vmatprep.subr.mxu0 0.0
  %1250 = vmatpush1.msra.mxu0 0.0
  %1251 = vmatprep.subr.mxu0 0.0
  %1252 = vmatpush1.msra.mxu0 0.0
  %1253 = vmatprep.subr.mxu0 0.0
  %1254 = vmatpush1.msra.mxu0 0.0
  %1255 = vmatprep.subr.mxu0 0.0
  %1256 = vmatpush1.msra.mxu0 0.0
  %1257 = vmatprep.subr.mxu0 0.0
  %1258 = vmatpush1.msra.mxu0 0.0
  %1259 = vmatprep.subr.mxu0 0.0
  %1260 = vmatpush1.msra.mxu0 0.0
  %1261 = vmatprep.subr.mxu0 0.0
  %1262 = vmatpush1.msra.mxu0 0.0
  %1263 = vmatprep.subr.mxu0 0.0
  %1264 = vmatpush1.msra.mxu0 0.0
  %1265 = vmatprep.subr.mxu0 0.0
  %1266 = vmatpush1.msra.mxu0 0.0
  %1267 = vmatprep.subr.mxu0 0.0
  %1268 = vmatpush1.msra.mxu0 0.0
  %1269 = vmatprep.subr.mxu0 0.0
  %1270 = vmatpush1.msra.mxu0 0.0
  %1271 = vmatprep.subr.mxu0 0.0
  %1272 = vmatpush1.msra.mxu0 0.0
  %1273 = vmatprep.subr.mxu0 0.0
  %1274 = vmatpush1.msra.mxu0 0.0
  %1275 = vmatprep.subr.mxu0 0.0
  %1276 = vmatpush1.msra.mxu0 0.0
  %1277 = vmatprep.subr.mxu0 0.0
  %1278 = vmatpush1.msra.mxu0 0.0
  %1279 = vmatprep.subr.mxu0 0.0
  %1280 = vmatpush1.msra.mxu0 0.0
  %1281 = vmatprep.subr.mxu0 0.0
  %1282 = vmatpush1.msra.mxu0 0.0
  %1283 = vmatprep.subr.mxu0 0.0
  %1284 = vmatpush1.msra.mxu0 0.0
  %1285 = vmatprep.subr.mxu0 0.0
  %1286 = vmatpush1.msra.mxu0 0.0
  %1287 = vmatprep.subr.mxu0 0.0
  %1288 = vmatpush1.msra.mxu0 0.0
  %1289 = vmatprep.subr.mxu0 0.0
  %1290 = vmatpush1.msra.mxu0 0.0
  %1291 = vmatprep.subr.mxu0 0.0
  %1292 = vmatpush1.msra.mxu0 0.0
  %1293 = vmatprep.subr.mxu0 0.0
  %1294 = vmatpush1.msra.mxu0 0.0
  %1295 = vmatprep.subr.mxu0 0.0
  %1296 = vmatpush1.msra.mxu0 0.0
  %1297 = vmatprep.subr.mxu0 0.0
  %1298 = vmatpush1.msra.mxu0 0.0
  %1299 = vmatprep.subr.mxu0 0.0
  %1300 = vmatpush1.msra.mxu0 0.0
  %1301 = vmatprep.subr.mxu0 0.0
  %1302 = vmatpush1.msra.mxu0 0.0
  %1303 = vmatprep.subr.mxu0 0.0
  %1304 = vmatpush1.msra.mxu0 0.0
  %1305 = vmatprep.mubr.f32.mxu0 0.0
  %1306 = vmatmul.mubr.f32.gmra.mrb[0].mxu0 %v1239
  %v1307 = vpop.f32.mrb[0].mxu0
  %v1308 = vadd.f32 0.0, %v1307
  %v1309 = vpop.f32.mrb[0].mxu0
  %1310 = vdwg.mxu0
  %1311 = vrot.lane.b32.xlu0 %v201, 56
  %v1312 = vpop.permute.xlu0 %1311
  %v1315 = vsel %vm221, %v1230, 0
  %1317 = vmatprep.subr.mxu0 0.0
  %1318 = vmatpush1.msra.mxu0 %v1312
  %1319 = vmatprep.subr.mxu0 0.0
  %1320 = vmatpush1.msra.mxu0 0.0
  %1321 = vmatprep.subr.mxu0 0.0
  %1322 = vmatpush1.msra.mxu0 0.0
  %1323 = vmatprep.subr.mxu0 0.0
  %1324 = vmatpush1.msra.mxu0 0.0
  %1325 = vmatprep.subr.mxu0 0.0
  %1326 = vmatpush1.msra.mxu0 0.0
  %1327 = vmatprep.subr.mxu0 0.0
  %1328 = vmatpush1.msra.mxu0 0.0
  %1329 = vmatprep.subr.mxu0 0.0
  %1330 = vmatpush1.msra.mxu0 0.0
  %1331 = vmatprep.subr.mxu0 0.0
  %1332 = vmatpush1.msra.mxu0 0.0
  %1333 = vmatprep.subr.mxu0 0.0
  %1334 = vmatpush1.msra.mxu0 0.0
  %1335 = vmatprep.subr.mxu0 0.0
  %1336 = vmatpush1.msra.mxu0 0.0
  %1337 = vmatprep.subr.mxu0 0.0
  %1338 = vmatpush1.msra.mxu0 0.0
  %1339 = vmatprep.subr.mxu0 0.0
  %1340 = vmatpush1.msra.mxu0 0.0
  %1341 = vmatprep.subr.mxu0 0.0
  %1342 = vmatpush1.msra.mxu0 0.0
  %1343 = vmatprep.subr.mxu0 0.0
  %1344 = vmatpush1.msra.mxu0 0.0
  %1345 = vmatprep.subr.mxu0 0.0
  %1346 = vmatpush1.msra.mxu0 0.0
  %1347 = vmatprep.subr.mxu0 0.0
  %1348 = vmatpush1.msra.mxu0 0.0
  %1349 = vmatprep.subr.mxu0 0.0
  %1350 = vmatpush1.msra.mxu0 0.0
  %1351 = vmatprep.subr.mxu0 0.0
  %1352 = vmatpush1.msra.mxu0 0.0
  %1353 = vmatprep.subr.mxu0 0.0
  %1354 = vmatpush1.msra.mxu0 0.0
  %1355 = vmatprep.subr.mxu0 0.0
  %1356 = vmatpush1.msra.mxu0 0.0
  %1357 = vmatprep.subr.mxu0 0.0
  %1358 = vmatpush1.msra.mxu0 0.0
  %1359 = vmatprep.subr.mxu0 0.0
  %1360 = vmatpush1.msra.mxu0 0.0
  %1361 = vmatprep.subr.mxu0 0.0
  %1362 = vmatpush1.msra.mxu0 0.0
  %1363 = vmatprep.subr.mxu0 0.0
  %1364 = vmatpush1.msra.mxu0 0.0
  %1365 = vmatprep.subr.mxu0 0.0
  %1366 = vmatpush1.msra.mxu0 0.0
  %1367 = vmatprep.subr.mxu0 0.0
  %1368 = vmatpush1.msra.mxu0 0.0
  %1369 = vmatprep.subr.mxu0 0.0
  %1370 = vmatpush1.msra.mxu0 0.0
  %1371 = vmatprep.subr.mxu0 0.0
  %1372 = vmatpush1.msra.mxu0 0.0
  %1373 = vmatprep.subr.mxu0 0.0
  %1374 = vmatpush1.msra.mxu0 0.0
  %1375 = vmatprep.subr.mxu0 0.0
  %1376 = vmatpush1.msra.mxu0 0.0
  %1377 = vmatprep.subr.mxu0 0.0
  %1378 = vmatpush1.msra.mxu0 0.0
  %1379 = vmatprep.subr.mxu0 0.0
  %1380 = vmatpush1.msra.mxu0 0.0
  %1381 = vmatprep.mubr.f32.mxu0 0.0
  %1382 = vmatmul.mubr.f32.gmra.mrb[0].mxu0 %v1315
  %v1383 = vpop.f32.mrb[0].mxu0
  %v1384 = vadd.f32 0.0, %v1383
  %v1385 = vpop.f32.mrb[0].mxu0
  %1386 = vdwg.mxu0
  %1387 = vrot.lane.b32.xlu0 %v206, 56
  %v1388 = vpop.permute.xlu0 %1387
  %v1391 = vsel %vm221, %v1232, 0
  %1393 = vmatprep.subr.mxu0 0.0
  %1394 = vmatpush1.msra.mxu0 %v1388
  %1395 = vmatprep.subr.mxu0 0.0
  %1396 = vmatpush1.msra.mxu0 0.0
  %1397 = vmatprep.subr.mxu0 0.0
  %1398 = vmatpush1.msra.mxu0 0.0
  %1399 = vmatprep.subr.mxu0 0.0
  %1400 = vmatpush1.msra.mxu0 0.0
  %1401 = vmatprep.subr.mxu0 0.0
  %1402 = vmatpush1.msra.mxu0 0.0
  %1403 = vmatprep.subr.mxu0 0.0
  %1404 = vmatpush1.msra.mxu0 0.0
  %1405 = vmatprep.subr.mxu0 0.0
  %1406 = vmatpush1.msra.mxu0 0.0
  %1407 = vmatprep.subr.mxu0 0.0
  %1408 = vmatpush1.msra.mxu0 0.0
  %1409 = vmatprep.subr.mxu0 0.0
  %1410 = vmatpush1.msra.mxu0 0.0
  %1411 = vmatprep.subr.mxu0 0.0
  %1412 = vmatpush1.msra.mxu0 0.0
  %1413 = vmatprep.subr.mxu0 0.0
  %1414 = vmatpush1.msra.mxu0 0.0
  %1415 = vmatprep.subr.mxu0 0.0
  %1416 = vmatpush1.msra.mxu0 0.0
  %1417 = vmatprep.subr.mxu0 0.0
  %1418 = vmatpush1.msra.mxu0 0.0
  %1419 = vmatprep.subr.mxu0 0.0
  %1420 = vmatpush1.msra.mxu0 0.0
  %1421 = vmatprep.subr.mxu0 0.0
  %1422 = vmatpush1.msra.mxu0 0.0
  %1423 = vmatprep.subr.mxu0 0.0
  %1424 = vmatpush1.msra.mxu0 0.0
  %1425 = vmatprep.subr.mxu0 0.0
  %1426 = vmatpush1.msra.mxu0 0.0
  %1427 = vmatprep.subr.mxu0 0.0
  %1428 = vmatpush1.msra.mxu0 0.0
  %1429 = vmatprep.subr.mxu0 0.0
  %1430 = vmatpush1.msra.mxu0 0.0
  %1431 = vmatprep.subr.mxu0 0.0
  %1432 = vmatpush1.msra.mxu0 0.0
  %1433 = vmatprep.subr.mxu0 0.0
  %1434 = vmatpush1.msra.mxu0 0.0
  %1435 = vmatprep.subr.mxu0 0.0
  %1436 = vmatpush1.msra.mxu0 0.0
  %1437 = vmatprep.subr.mxu0 0.0
  %1438 = vmatpush1.msra.mxu0 0.0
  %1439 = vmatprep.subr.mxu0 0.0
  %1440 = vmatpush1.msra.mxu0 0.0
  %1441 = vmatprep.subr.mxu0 0.0
  %1442 = vmatpush1.msra.mxu0 0.0
  %1443 = vmatprep.subr.mxu0 0.0
  %1444 = vmatpush1.msra.mxu0 0.0
  %1445 = vmatprep.subr.mxu0 0.0
  %1446 = vmatpush1.msra.mxu0 0.0
  %1447 = vmatprep.subr.mxu0 0.0
  %1448 = vmatpush1.msra.mxu0 0.0
  %1449 = vmatprep.subr.mxu0 0.0
  %1450 = vmatpush1.msra.mxu0 0.0
  %1451 = vmatprep.subr.mxu0 0.0
  %1452 = vmatpush1.msra.mxu0 0.0
  %1453 = vmatprep.subr.mxu0 0.0
  %1454 = vmatpush1.msra.mxu0 0.0
  %1455 = vmatprep.subr.mxu0 0.0
  %1456 = vmatpush1.msra.mxu0 0.0
  %1457 = vmatprep.mubr.f32.mxu0 0.0
  %1458 = vmatmul.mubr.f32.gmra.mrb[0].mxu0 %v1391
  %v1459 = vpop.f32.mrb[0].mxu0
  %v1460 = vadd.f32 0.0, %v1459
  %v1461 = vpop.f32.mrb[0].mxu0
  %1462 = vdwg.mxu0
  %1463 = vrot.lane.b32.xlu0 %v211, 56
  %v1464 = vpop.permute.xlu0 %1463
  %v1467 = vsel %vm221, %v1234, 0
  %1469 = vmatprep.subr.mxu0 0.0
  %1470 = vmatpush1.msra.mxu0 %v1464
  %1471 = vmatprep.subr.mxu0 0.0
  %1472 = vmatpush1.msra.mxu0 0.0
  %1473 = vmatprep.subr.mxu0 0.0
  %1474 = vmatpush1.msra.mxu0 0.0
  %1475 = vmatprep.subr.mxu0 0.0
  %1476 = vmatpush1.msra.mxu0 0.0
  %1477 = vmatprep.subr.mxu0 0.0
  %1478 = vmatpush1.msra.mxu0 0.0
  %1479 = vmatprep.subr.mxu0 0.0
  %1480 = vmatpush1.msra.mxu0 0.0
  %1481 = vmatprep.subr.mxu0 0.0
  %1482 = vmatpush1.msra.mxu0 0.0
  %1483 = vmatprep.subr.mxu0 0.0
  %1484 = vmatpush1.msra.mxu0 0.0
  %1485 = vmatprep.subr.mxu0 0.0
  %1486 = vmatpush1.msra.mxu0 0.0
  %1487 = vmatprep.subr.mxu0 0.0
  %1488 = vmatpush1.msra.mxu0 0.0
  %1489 = vmatprep.subr.mxu0 0.0
  %1490 = vmatpush1.msra.mxu0 0.0
  %1491 = vmatprep.subr.mxu0 0.0
  %1492 = vmatpush1.msra.mxu0 0.0
  %1493 = vmatprep.subr.mxu0 0.0
  %1494 = vmatpush1.msra.mxu0 0.0
  %1495 = vmatprep.subr.mxu0 0.0
  %1496 = vmatpush1.msra.mxu0 0.0
  %1497 = vmatprep.subr.mxu0 0.0
  %1498 = vmatpush1.msra.mxu0 0.0
  %1499 = vmatprep.subr.mxu0 0.0
  %1500 = vmatpush1.msra.mxu0 0.0
  %1501 = vmatprep.subr.mxu0 0.0
  %1502 = vmatpush1.msra.mxu0 0.0
  %1503 = vmatprep.subr.mxu0 0.0
  %1504 = vmatpush1.msra.mxu0 0.0
  %1505 = vmatprep.subr.mxu0 0.0
  %1506 = vmatpush1.msra.mxu0 0.0
  %1507 = vmatprep.subr.mxu0 0.0
  %1508 = vmatpush1.msra.mxu0 0.0
  %1509 = vmatprep.subr.mxu0 0.0
  %1510 = vmatpush1.msra.mxu0 0.0
  %1511 = vmatprep.subr.mxu0 0.0
  %1512 = vmatpush1.msra.mxu0 0.0
  %1513 = vmatprep.subr.mxu0 0.0
  %1514 = vmatpush1.msra.mxu0 0.0
  %1515 = vmatprep.subr.mxu0 0.0
  %1516 = vmatpush1.msra.mxu0 0.0
  %1517 = vmatprep.subr.mxu0 0.0
  %1518 = vmatpush1.msra.mxu0 0.0
  %1519 = vmatprep.subr.mxu0 0.0
  %1520 = vmatpush1.msra.mxu0 0.0
  %1521 = vmatprep.subr.mxu0 0.0
  %1522 = vmatpush1.msra.mxu0 0.0
  %1523 = vmatprep.subr.mxu0 0.0
  %1524 = vmatpush1.msra.mxu0 0.0
  %1525 = vmatprep.subr.mxu0 0.0
  %1526 = vmatpush1.msra.mxu0 0.0
  %1527 = vmatprep.subr.mxu0 0.0
  %1528 = vmatpush1.msra.mxu0 0.0
  %1529 = vmatprep.subr.mxu0 0.0
  %1530 = vmatpush1.msra.mxu0 0.0
  %1531 = vmatprep.subr.mxu0 0.0
  %1532 = vmatpush1.msra.mxu0 0.0
  %1533 = vmatprep.mubr.f32.mxu0 0.0
  %1534 = vmatmul.mubr.f32.gmra.mrb[0].mxu0 %v1467
  %v1535 = vpop.f32.mrb[0].mxu0
  %v1536 = vadd.f32 0.0, %v1535
  %v1537 = vpop.f32.mrb[0].mxu0
  %1538 = vdwg.mxu0
  %1539 = vrot.lane.b32.xlu0 %v214, 112
  %v1540 = vpop.permute.xlu0 %1539
  %1541 = vrot.lane.b32.xlu0 %v196, 80
  %v1542 = vpop.permute.xlu0 %1541
  %v1543 = vsel %vm221, %v1540, 0
  %v1545 = vsel %vm221, %v1542, 0
  %1547 = vmatprep.subr.mxu0 0.0
  %1548 = vmatpush1.xpose.msra.mxu0 %v1545
  %1549 = vmatprep.subr.mxu0 0.0
  %1550 = vmatpush1.xpose.msra.mxu0 0.0
  %1551 = vmatprep.subr.mxu0 0.0
  %1552 = vmatpush1.xpose.msra.mxu0 0.0
  %1553 = vmatprep.subr.mxu0 0.0
  %1554 = vmatpush1.xpose.msra.mxu0 0.0
  %1555 = vmatprep.subr.mxu0 0.0
  %1556 = vmatpush1.xpose.msra.mxu0 0.0
  %1557 = vmatprep.subr.mxu0 0.0
  %1558 = vmatpush1.xpose.msra.mxu0 0.0
  %1559 = vmatprep.subr.mxu0 0.0
  %1560 = vmatpush1.xpose.msra.mxu0 0.0
  %1561 = vmatprep.subr.mxu0 0.0
  %1562 = vmatpush1.xpose.msra.mxu0 0.0
  %1563 = vmatprep.subr.mxu0 0.0
  %1564 = vmatpush1.xpose.msra.mxu0 0.0
  %1565 = vmatprep.subr.mxu0 0.0
  %1566 = vmatpush1.xpose.msra.mxu0 0.0
  %1567 = vmatprep.subr.mxu0 0.0
  %1568 = vmatpush1.xpose.msra.mxu0 0.0
  %1569 = vmatprep.subr.mxu0 0.0
  %1570 = vmatpush1.xpose.msra.mxu0 0.0
  %1571 = vmatprep.subr.mxu0 0.0
  %1572 = vmatpush1.xpose.msra.mxu0 0.0
  %1573 = vmatprep.subr.mxu0 0.0
  %1574 = vmatpush1.xpose.msra.mxu0 0.0
  %1575 = vmatprep.subr.mxu0 0.0
  %1576 = vmatpush1.xpose.msra.mxu0 0.0
  %1577 = vmatprep.subr.mxu0 0.0
  %1578 = vmatpush1.xpose.msra.mxu0 0.0
  %1579 = vmatprep.subr.mxu0 0.0
  %1580 = vmatpush1.xpose.msra.mxu0 0.0
  %1581 = vmatprep.subr.mxu0 0.0
  %1582 = vmatpush1.xpose.msra.mxu0 0.0
  %1583 = vmatprep.subr.mxu0 0.0
  %1584 = vmatpush1.xpose.msra.mxu0 0.0
  %1585 = vmatprep.subr.mxu0 0.0
  %1586 = vmatpush1.xpose.msra.mxu0 0.0
  %1587 = vmatprep.subr.mxu0 0.0
  %1588 = vmatpush1.xpose.msra.mxu0 0.0
  %1589 = vmatprep.subr.mxu0 0.0
  %1590 = vmatpush1.xpose.msra.mxu0 0.0
  %1591 = vmatprep.subr.mxu0 0.0
  %1592 = vmatpush1.xpose.msra.mxu0 0.0
  %1593 = vmatprep.subr.mxu0 0.0
  %1594 = vmatpush1.xpose.msra.mxu0 0.0
  %1595 = vmatprep.subr.mxu0 0.0
  %1596 = vmatpush1.xpose.msra.mxu0 0.0
  %1597 = vmatprep.subr.mxu0 0.0
  %1598 = vmatpush1.xpose.msra.mxu0 0.0
  %1599 = vmatprep.subr.mxu0 0.0
  %1600 = vmatpush1.xpose.msra.mxu0 0.0
  %1601 = vmatprep.subr.mxu0 0.0
  %1602 = vmatpush1.xpose.msra.mxu0 0.0
  %1603 = vmatprep.subr.mxu0 0.0
  %1604 = vmatpush1.xpose.msra.mxu0 0.0
  %1605 = vmatprep.subr.mxu0 0.0
  %1606 = vmatpush1.xpose.msra.mxu0 0.0
  %1607 = vmatprep.subr.mxu0 0.0
  %1608 = vmatpush1.xpose.msra.mxu0 0.0
  %1609 = vmatprep.subr.mxu0 0.0
  %1610 = vmatpush1.xpose.msra.mxu0 0.0
  %1611 = vmatprep.mubr.f32.mxu0 0.0
  %1612 = vmatmul.mubr.f32.gmra.mrb[0].mxu0 %v1543
  %v1613 = vpop.f32.mrb[0].mxu0
  %v1614 = vadd.f32 0.0, %v1613
  %v1615 = vpop.f32.mrb[0].mxu0
  %1616 = vdwg.mxu0
  %1617 = vrot.lane.b32.xlu0 %v215, 112
  %v1618 = vpop.permute.xlu0 %1617
  %1619 = vrot.lane.b32.xlu0 %v201, 80
  %v1620 = vpop.permute.xlu0 %1619
  %v1621 = vsel %vm221, %v1618, 0
  %v1623 = vsel %vm221, %v1620, 0
  %1625 = vmatprep.subr.mxu0 0.0
  %1626 = vmatpush1.xpose.msra.mxu0 %v1623
  %1627 = vmatprep.subr.mxu0 0.0
  %1628 = vmatpush1.xpose.msra.mxu0 0.0
  %1629 = vmatprep.subr.mxu0 0.0
  %1630 = vmatpush1.xpose.msra.mxu0 0.0
  %1631 = vmatprep.subr.mxu0 0.0
  %1632 = vmatpush1.xpose.msra.mxu0 0.0
  %1633 = vmatprep.subr.mxu0 0.0
  %1634 = vmatpush1.xpose.msra.mxu0 0.0
  %1635 = vmatprep.subr.mxu0 0.0
  %1636 = vmatpush1.xpose.msra.mxu0 0.0
  %1637 = vmatprep.subr.mxu0 0.0
  %1638 = vmatpush1.xpose.msra.mxu0 0.0
  %1639 = vmatprep.subr.mxu0 0.0
  %1640 = vmatpush1.xpose.msra.mxu0 0.0
  %1641 = vmatprep.subr.mxu0 0.0
  %1642 = vmatpush1.xpose.msra.mxu0 0.0
  %1643 = vmatprep.subr.mxu0 0.0
  %1644 = vmatpush1.xpose.msra.mxu0 0.0
  %1645 = vmatprep.subr.mxu0 0.0
  %1646 = vmatpush1.xpose.msra.mxu0 0.0
  %1647 = vmatprep.subr.mxu0 0.0
  %1648 = vmatpush1.xpose.msra.mxu0 0.0
  %1649 = vmatprep.subr.mxu0 0.0
  %1650 = vmatpush1.xpose.msra.mxu0 0.0
  %1651 = vmatprep.subr.mxu0 0.0
  %1652 = vmatpush1.xpose.msra.mxu0 0.0
  %1653 = vmatprep.subr.mxu0 0.0
  %1654 = vmatpush1.xpose.msra.mxu0 0.0
  %1655 = vmatprep.subr.mxu0 0.0
  %1656 = vmatpush1.xpose.msra.mxu0 0.0
  %1657 = vmatprep.subr.mxu0 0.0
  %1658 = vmatpush1.xpose.msra.mxu0 0.0
  %1659 = vmatprep.subr.mxu0 0.0
  %1660 = vmatpush1.xpose.msra.mxu0 0.0
  %1661 = vmatprep.subr.mxu0 0.0
  %1662 = vmatpush1.xpose.msra.mxu0 0.0
  %1663 = vmatprep.subr.mxu0 0.0
  %1664 = vmatpush1.xpose.msra.mxu0 0.0
  %1665 = vmatprep.subr.mxu0 0.0
  %1666 = vmatpush1.xpose.msra.mxu0 0.0
  %1667 = vmatprep.subr.mxu0 0.0
  %1668 = vmatpush1.xpose.msra.mxu0 0.0
  %1669 = vmatprep.subr.mxu0 0.0
  %1670 = vmatpush1.xpose.msra.mxu0 0.0
  %1671 = vmatprep.subr.mxu0 0.0
  %1672 = vmatpush1.xpose.msra.mxu0 0.0
  %1673 = vmatprep.subr.mxu0 0.0
  %1674 = vmatpush1.xpose.msra.mxu0 0.0
  %1675 = vmatprep.subr.mxu0 0.0
  %1676 = vmatpush1.xpose.msra.mxu0 0.0
  %1677 = vmatprep.subr.mxu0 0.0
  %1678 = vmatpush1.xpose.msra.mxu0 0.0
  %1679 = vmatprep.subr.mxu0 0.0
  %1680 = vmatpush1.xpose.msra.mxu0 0.0
  %1681 = vmatprep.subr.mxu0 0.0
  %1682 = vmatpush1.xpose.msra.mxu0 0.0
  %1683 = vmatprep.subr.mxu0 0.0
  %1684 = vmatpush1.xpose.msra.mxu0 0.0
  %1685 = vmatprep.subr.mxu0 0.0
  %1686 = vmatpush1.xpose.msra.mxu0 0.0
  %1687 = vmatprep.subr.mxu0 0.0
  %1688 = vmatpush1.xpose.msra.mxu0 0.0
  %1689 = vmatprep.mubr.f32.mxu0 0.0
  %1690 = vmatmul.mubr.f32.gmra.mrb[0].mxu0 %v1621
  %v1691 = vpop.f32.mrb[0].mxu0
  %v1692 = vadd.f32 0.0, %v1691
  %v1693 = vpop.f32.mrb[0].mxu0
  %1694 = vdwg.mxu0
  %1695 = vrot.lane.b32.xlu0 %v216, 112
  %v1696 = vpop.permute.xlu0 %1695
  %1697 = vrot.lane.b32.xlu0 %v206, 80
  %v1698 = vpop.permute.xlu0 %1697
  %v1699 = vsel %vm221, %v1696, 0
  %v1701 = vsel %vm221, %v1698, 0
  %1703 = vmatprep.subr.mxu0 0.0
  %1704 = vmatpush1.xpose.msra.mxu0 %v1701
  %1705 = vmatprep.subr.mxu0 0.0
  %1706 = vmatpush1.xpose.msra.mxu0 0.0
  %1707 = vmatprep.subr.mxu0 0.0
  %1708 = vmatpush1.xpose.msra.mxu0 0.0
  %1709 = vmatprep.subr.mxu0 0.0
  %1710 = vmatpush1.xpose.msra.mxu0 0.0
  %1711 = vmatprep.subr.mxu0 0.0
  %1712 = vmatpush1.xpose.msra.mxu0 0.0
  %1713 = vmatprep.subr.mxu0 0.0
  %1714 = vmatpush1.xpose.msra.mxu0 0.0
  %1715 = vmatprep.subr.mxu0 0.0
  %1716 = vmatpush1.xpose.msra.mxu0 0.0
  %1717 = vmatprep.subr.mxu0 0.0
  %1718 = vmatpush1.xpose.msra.mxu0 0.0
  %1719 = vmatprep.subr.mxu0 0.0
  %1720 = vmatpush1.xpose.msra.mxu0 0.0
  %1721 = vmatprep.subr.mxu0 0.0
  %1722 = vmatpush1.xpose.msra.mxu0 0.0
  %1723 = vmatprep.subr.mxu0 0.0
  %1724 = vmatpush1.xpose.msra.mxu0 0.0
  %1725 = vmatprep.subr.mxu0 0.0
  %1726 = vmatpush1.xpose.msra.mxu0 0.0
  %1727 = vmatprep.subr.mxu0 0.0
  %1728 = vmatpush1.xpose.msra.mxu0 0.0
  %1729 = vmatprep.subr.mxu0 0.0
  %1730 = vmatpush1.xpose.msra.mxu0 0.0
  %1731 = vmatprep.subr.mxu0 0.0
  %1732 = vmatpush1.xpose.msra.mxu0 0.0
  %1733 = vmatprep.subr.mxu0 0.0
  %1734 = vmatpush1.xpose.msra.mxu0 0.0
  %1735 = vmatprep.subr.mxu0 0.0
  %1736 = vmatpush1.xpose.msra.mxu0 0.0
  %1737 = vmatprep.subr.mxu0 0.0
  %1738 = vmatpush1.xpose.msra.mxu0 0.0
  %1739 = vmatprep.subr.mxu0 0.0
  %1740 = vmatpush1.xpose.msra.mxu0 0.0
  %1741 = vmatprep.subr.mxu0 0.0
  %1742 = vmatpush1.xpose.msra.mxu0 0.0
  %1743 = vmatprep.subr.mxu0 0.0
  %1744 = vmatpush1.xpose.msra.mxu0 0.0
  %1745 = vmatprep.subr.mxu0 0.0
  %1746 = vmatpush1.xpose.msra.mxu0 0.0
  %1747 = vmatprep.subr.mxu0 0.0
  %1748 = vmatpush1.xpose.msra.mxu0 0.0
  %1749 = vmatprep.subr.mxu0 0.0
  %1750 = vmatpush1.xpose.msra.mxu0 0.0
  %1751 = vmatprep.subr.mxu0 0.0
  %1752 = vmatpush1.xpose.msra.mxu0 0.0
  %1753 = vmatprep.subr.mxu0 0.0
  %1754 = vmatpush1.xpose.msra.mxu0 0.0
  %1755 = vmatprep.subr.mxu0 0.0
  %1756 = vmatpush1.xpose.msra.mxu0 0.0
  %1757 = vmatprep.subr.mxu0 0.0
  %1758 = vmatpush1.xpose.msra.mxu0 0.0
  %1759 = vmatprep.subr.mxu0 0.0
  %1760 = vmatpush1.xpose.msra.mxu0 0.0
  %1761 = vmatprep.subr.mxu0 0.0
  %1762 = vmatpush1.xpose.msra.mxu0 0.0
  %1763 = vmatprep.subr.mxu0 0.0
  %1764 = vmatpush1.xpose.msra.mxu0 0.0
  %1765 = vmatprep.subr.mxu0 0.0
  %1766 = vmatpush1.xpose.msra.mxu0 0.0
  %1767 = vmatprep.mubr.f32.mxu0 0.0
  %1768 = vmatmul.mubr.f32.gmra.mrb[0].mxu0 %v1699
  %v1769 = vpop.f32.mrb[0].mxu0
  %v1770 = vadd.f32 0.0, %v1769
  %v1771 = vpop.f32.mrb[0].mxu0
  %1772 = vdwg.mxu0
  %1773 = vrot.lane.b32.xlu0 %v217, 112
  %v1774 = vpop.permute.xlu0 %1773
  %1775 = vrot.lane.b32.xlu0 %v211, 80
  %v1776 = vpop.permute.xlu0 %1775
  %v1777 = vsel %vm221, %v1774, 0
  %v1779 = vsel %vm221, %v1776, 0
  %1781 = vmatprep.subr.mxu0 0.0
  %1782 = vmatpush1.xpose.msra.mxu0 %v1779
  %1783 = vmatprep.subr.mxu0 0.0
  %1784 = vmatpush1.xpose.msra.mxu0 0.0
  %1785 = vmatprep.subr.mxu0 0.0
  %1786 = vmatpush1.xpose.msra.mxu0 0.0
  %1787 = vmatprep.subr.mxu0 0.0
  %1788 = vmatpush1.xpose.msra.mxu0 0.0
  %1789 = vmatprep.subr.mxu0 0.0
  %1790 = vmatpush1.xpose.msra.mxu0 0.0
  %1791 = vmatprep.subr.mxu0 0.0
  %1792 = vmatpush1.xpose.msra.mxu0 0.0
  %1793 = vmatprep.subr.mxu0 0.0
  %1794 = vmatpush1.xpose.msra.mxu0 0.0
  %1795 = vmatprep.subr.mxu0 0.0
  %1796 = vmatpush1.xpose.msra.mxu0 0.0
  %1797 = vmatprep.subr.mxu0 0.0
  %1798 = vmatpush1.xpose.msra.mxu0 0.0
  %1799 = vmatprep.subr.mxu0 0.0
  %1800 = vmatpush1.xpose.msra.mxu0 0.0
  %1801 = vmatprep.subr.mxu0 0.0
  %1802 = vmatpush1.xpose.msra.mxu0 0.0
  %1803 = vmatprep.subr.mxu0 0.0
  %1804 = vmatpush1.xpose.msra.mxu0 0.0
  %1805 = vmatprep.subr.mxu0 0.0
  %1806 = vmatpush1.xpose.msra.mxu0 0.0
  %1807 = vmatprep.subr.mxu0 0.0
  %1808 = vmatpush1.xpose.msra.mxu0 0.0
  %1809 = vmatprep.subr.mxu0 0.0
  %1810 = vmatpush1.xpose.msra.mxu0 0.0
  %1811 = vmatprep.subr.mxu0 0.0
  %1812 = vmatpush1.xpose.msra.mxu0 0.0
  %1813 = vmatprep.subr.mxu0 0.0
  %1814 = vmatpush1.xpose.msra.mxu0 0.0
  %1815 = vmatprep.subr.mxu0 0.0
  %1816 = vmatpush1.xpose.msra.mxu0 0.0
  %1817 = vmatprep.subr.mxu0 0.0
  %1818 = vmatpush1.xpose.msra.mxu0 0.0
  %1819 = vmatprep.subr.mxu0 0.0
  %1820 = vmatpush1.xpose.msra.mxu0 0.0
  %1821 = vmatprep.subr.mxu0 0.0
  %1822 = vmatpush1.xpose.msra.mxu0 0.0
  %1823 = vmatprep.subr.mxu0 0.0
  %1824 = vmatpush1.xpose.msra.mxu0 0.0
  %1825 = vmatprep.subr.mxu0 0.0
  %1826 = vmatpush1.xpose.msra.mxu0 0.0
  %1827 = vmatprep.subr.mxu0 0.0
  %1828 = vmatpush1.xpose.msra.mxu0 0.0
  %1829 = vmatprep.subr.mxu0 0.0
  %1830 = vmatpush1.xpose.msra.mxu0 0.0
  %1831 = vmatprep.subr.mxu0 0.0
  %1832 = vmatpush1.xpose.msra.mxu0 0.0
  %1833 = vmatprep.subr.mxu0 0.0
  %1834 = vmatpush1.xpose.msra.mxu0 0.0
  %1835 = vmatprep.subr.mxu0 0.0
  %1836 = vmatpush1.xpose.msra.mxu0 0.0
  %1837 = vmatprep.subr.mxu0 0.0
  %1838 = vmatpush1.xpose.msra.mxu0 0.0
  %1839 = vmatprep.subr.mxu0 0.0
  %1840 = vmatpush1.xpose.msra.mxu0 0.0
  %1841 = vmatprep.subr.mxu0 0.0
  %1842 = vmatpush1.xpose.msra.mxu0 0.0
  %1843 = vmatprep.subr.mxu0 0.0
  %1844 = vmatpush1.xpose.msra.mxu0 0.0
  %1845 = vmatprep.mubr.f32.mxu0 0.0
  %1846 = vmatmul.mubr.f32.gmra.mrb[0].mxu0 %v1777
  %v1847 = vpop.f32.mrb[0].mxu0
  %v1848 = vadd.f32 0.0, %v1847
  %v1849 = vpop.f32.mrb[0].mxu0
  %1850 = vdwg.mxu0
  %v1851 = vsel %vm221, %v1614, -inf
  %1852 = vmax.xlane.f32.xlu0 %v1851
  %v1853 = vpop.xlane.xlu0 %1852
  %v1854 = vsel %vm221, %v1692, -inf
  %1855 = vmax.xlane.f32.xlu0 %v1854
  %v1856 = vpop.xlane.xlu0 %1855
  %v1857 = vsel %vm221, %v1770, -inf
  %1858 = vmax.xlane.f32.xlu0 %v1857
  %v1859 = vpop.xlane.xlu0 %1858
  %v1860 = vsel %vm221, %v1848, -inf
  %1861 = vmax.xlane.f32.xlu0 %v1860
  %v1862 = vpop.xlane.xlu0 %1861
  %v1863 = vsub.f32 %v1614, %v1853
  %v1864 = vsub.f32 %v1692, %v1856
  %v1865 = vsub.f32 %v1770, %v1859
  %v1866 = vsub.f32 %v1848, %v1862
  %v1867 = vmul.f32 %v1863, 1.442695
  %v1868 = vpow.pop %v1867
  %v1869 = vmul.f32 %v1864, 1.442695
  %v1870 = vpow.pop %v1869
  %v1871 = vmul.f32 %v1865, 1.442695
  %v1872 = vpow.pop %v1871
  %v1873 = vmul.f32 %v1866, 1.442695
  %v1874 = vpow.pop %v1873
  %v1875 = vsel %vm221, %v1868, 0.0
  %1876 = vadd.xlane.f32.xlu0 %v1875
  %v1877 = vpop.xlane.xlu0 %1876
  %v1878 = vsel %vm221, %v1870, 0.0
  %1879 = vadd.xlane.f32.xlu0 %v1878
  %v1880 = vpop.xlane.xlu0 %1879
  %v1881 = vsel %vm221, %v1872, 0.0
  %1882 = vadd.xlane.f32.xlu0 %v1881
  %v1883 = vpop.xlane.xlu0 %1882
  %v1884 = vsel %vm221, %v1874, 0.0
  %1885 = vadd.xlane.f32.xlu0 %v1884
  %v1886 = vpop.xlane.xlu0 %1885
  %v1887 = vrcp.pop %v1877
  %v1888 = vmul.f32 %v1868, %v1887
  %v1889 = vrcp.pop %v1880
  %v1890 = vmul.f32 %v1870, %v1889
  %v1891 = vrcp.pop %v1883
  %v1892 = vmul.f32 %v1872, %v1891
  %v1893 = vrcp.pop %v1886
  %v1894 = vmul.f32 %v1874, %v1893
  %1895 = vrot.lane.b32.xlu0 %v196, 48
  %v1896 = vpop.permute.xlu0 %1895
  %v1899 = vsel %vm221, %v1888, 0
  %1901 = vmatprep.subr.mxu0 0.0
  %1902 = vmatpush1.msra.mxu0 %v1896
  %1903 = vmatprep.subr.mxu0 0.0
  %1904 = vmatpush1.msra.mxu0 0.0
  %1905 = vmatprep.subr.mxu0 0.0
  %1906 = vmatpush1.msra.mxu0 0.0
  %1907 = vmatprep.subr.mxu0 0.0
  %1908 = vmatpush1.msra.mxu0 0.0
  %1909 = vmatprep.subr.mxu0 0.0
  %1910 = vmatpush1.msra.mxu0 0.0
  %1911 = vmatprep.subr.mxu0 0.0
  %1912 = vmatpush1.msra.mxu0 0.0
  %1913 = vmatprep.subr.mxu0 0.0
  %1914 = vmatpush1.msra.mxu0 0.0
  %1915 = vmatprep.subr.mxu0 0.0
  %1916 = vmatpush1.msra.mxu0 0.0
  %1917 = vmatprep.subr.mxu0 0.0
  %1918 = vmatpush1.msra.mxu0 0.0
  %1919 = vmatprep.subr.mxu0 0.0
  %1920 = vmatpush1.msra.mxu0 0.0
  %1921 = vmatprep.subr.mxu0 0.0
  %1922 = vmatpush1.msra.mxu0 0.0
  %1923 = vmatprep.subr.mxu0 0.0
  %1924 = vmatpush1.msra.mxu0 0.0
  %1925 = vmatprep.subr.mxu0 0.0
  %1926 = vmatpush1.msra.mxu0 0.0
  %1927 = vmatprep.subr.mxu0 0.0
  %1928 = vmatpush1.msra.mxu0 0.0
  %1929 = vmatprep.subr.mxu0 0.0
  %1930 = vmatpush1.msra.mxu0 0.0
  %1931 = vmatprep.subr.mxu0 0.0
  %1932 = vmatpush1.msra.mxu0 0.0
  %1933 = vmatprep.subr.mxu0 0.0
  %1934 = vmatpush1.msra.mxu0 0.0
  %1935 = vmatprep.subr.mxu0 0.0
  %1936 = vmatpush1.msra.mxu0 0.0
  %1937 = vmatprep.subr.mxu0 0.0
  %1938 = vmatpush1.msra.mxu0 0.0
  %1939 = vmatprep.subr.mxu0 0.0
  %1940 = vmatpush1.msra.mxu0 0.0
  %1941 = vmatprep.subr.mxu0 0.0
  %1942 = vmatpush1.msra.mxu0 0.0
  %1943 = vmatprep.subr.mxu0 0.0
  %1944 = vmatpush1.msra.mxu0 0.0
  %1945 = vmatprep.subr.mxu0 0.0
  %1946 = vmatpush1.msra.mxu0 0.0
  %1947 = vmatprep.subr.mxu0 0.0
  %1948 = vmatpush1.msra.mxu0 0.0
  %1949 = vmatprep.subr.mxu0 0.0
  %1950 = vmatpush1.msra.mxu0 0.0
  %1951 = vmatprep.subr.mxu0 0.0
  %1952 = vmatpush1.msra.mxu0 0.0
  %1953 = vmatprep.subr.mxu0 0.0
  %1954 = vmatpush1.msra.mxu0 0.0
  %1955 = vmatprep.subr.mxu0 0.0
  %1956 = vmatpush1.msra.mxu0 0.0
  %1957 = vmatprep.subr.mxu0 0.0
  %1958 = vmatpush1.msra.mxu0 0.0
  %1959 = vmatprep.subr.mxu0 0.0
  %1960 = vmatpush1.msra.mxu0 0.0
  %1961 = vmatprep.subr.mxu0 0.0
  %1962 = vmatpush1.msra.mxu0 0.0
  %1963 = vmatprep.subr.mxu0 0.0
  %1964 = vmatpush1.msra.mxu0 0.0
  %1965 = vmatprep.mubr.f32.mxu0 0.0
  %1966 = vmatmul.mubr.f32.gmra.mrb[0].mxu0 %v1899
  %v1967 = vpop.f32.mrb[0].mxu0
  %v1968 = vadd.f32 0.0, %v1967
  %v1969 = vpop.f32.mrb[0].mxu0
  %1970 = vdwg.mxu0
  %1971 = vrot.lane.b32.xlu0 %v201, 48
  %v1972 = vpop.permute.xlu0 %1971
  %v1975 = vsel %vm221, %v1890, 0
  %1977 = vmatprep.subr.mxu0 0.0
  %1978 = vmatpush1.msra.mxu0 %v1972
  %1979 = vmatprep.subr.mxu0 0.0
  %1980 = vmatpush1.msra.mxu0 0.0
  %1981 = vmatprep.subr.mxu0 0.0
  %1982 = vmatpush1.msra.mxu0 0.0
  %1983 = vmatprep.subr.mxu0 0.0
  %1984 = vmatpush1.msra.mxu0 0.0
  %1985 = vmatprep.subr.mxu0 0.0
  %1986 = vmatpush1.msra.mxu0 0.0
  %1987 = vmatprep.subr.mxu0 0.0
  %1988 = vmatpush1.msra.mxu0 0.0
  %1989 = vmatprep.subr.mxu0 0.0
  %1990 = vmatpush1.msra.mxu0 0.0
  %1991 = vmatprep.subr.mxu0 0.0
  %1992 = vmatpush1.msra.mxu0 0.0
  %1993 = vmatprep.subr.mxu0 0.0
  %1994 = vmatpush1.msra.mxu0 0.0
  %1995 = vmatprep.subr.mxu0 0.0
  %1996 = vmatpush1.msra.mxu0 0.0
  %1997 = vmatprep.subr.mxu0 0.0
  %1998 = vmatpush1.msra.mxu0 0.0
  %1999 = vmatprep.subr.mxu0 0.0
  %2000 = vmatpush1.msra.mxu0 0.0
  %2001 = vmatprep.subr.mxu0 0.0
  %2002 = vmatpush1.msra.mxu0 0.0
  %2003 = vmatprep.subr.mxu0 0.0
  %2004 = vmatpush1.msra.mxu0 0.0
  %2005 = vmatprep.subr.mxu0 0.0
  %2006 = vmatpush1.msra.mxu0 0.0
  %2007 = vmatprep.subr.mxu0 0.0
  %2008 = vmatpush1.msra.mxu0 0.0
  %2009 = vmatprep.subr.mxu0 0.0
  %2010 = vmatpush1.msra.mxu0 0.0
  %2011 = vmatprep.subr.mxu0 0.0
  %2012 = vmatpush1.msra.mxu0 0.0
  %2013 = vmatprep.subr.mxu0 0.0
  %2014 = vmatpush1.msra.mxu0 0.0
  %2015 = vmatprep.subr.mxu0 0.0
  %2016 = vmatpush1.msra.mxu0 0.0
  %2017 = vmatprep.subr.mxu0 0.0
  %2018 = vmatpush1.msra.mxu0 0.0
  %2019 = vmatprep.subr.mxu0 0.0
  %2020 = vmatpush1.msra.mxu0 0.0
  %2021 = vmatprep.subr.mxu0 0.0
  %2022 = vmatpush1.msra.mxu0 0.0
  %2023 = vmatprep.subr.mxu0 0.0
  %2024 = vmatpush1.msra.mxu0 0.0
  %2025 = vmatprep.subr.mxu0 0.0
  %2026 = vmatpush1.msra.mxu0 0.0
  %2027 = vmatprep.subr.mxu0 0.0
  %2028 = vmatpush1.msra.mxu0 0.0
  %2029 = vmatprep.subr.mxu0 0.0
  %2030 = vmatpush1.msra.mxu0 0.0
  %2031 = vmatprep.subr.mxu0 0.0
  %2032 = vmatpush1.msra.mxu0 0.0
  %2033 = vmatprep.subr.mxu0 0.0
  %2034 = vmatpush1.msra.mxu0 0.0
  %2035 = vmatprep.subr.mxu0 0.0
  %2036 = vmatpush1.msra.mxu0 0.0
  %2037 = vmatprep.subr.mxu0 0.0
  %2038 = vmatpush1.msra.mxu0 0.0
  %2039 = vmatprep.subr.mxu0 0.0
  %2040 = vmatpush1.msra.mxu0 0.0
  %2041 = vmatprep.mubr.f32.mxu0 0.0
  %2042 = vmatmul.mubr.f32.gmra.mrb[0].mxu0 %v1975
  %v2043 = vpop.f32.mrb[0].mxu0
  %v2044 = vadd.f32 0.0, %v2043
  %v2045 = vpop.f32.mrb[0].mxu0
  %2046 = vdwg.mxu0
  %2047 = vrot.lane.b32.xlu0 %v206, 48
  %v2048 = vpop.permute.xlu0 %2047
  %v2051 = vsel %vm221, %v1892, 0
  %2053 = vmatprep.subr.mxu0 0.0
  %2054 = vmatpush1.msra.mxu0 %v2048
  %2055 = vmatprep.subr.mxu0 0.0
  %2056 = vmatpush1.msra.mxu0 0.0
  %2057 = vmatprep.subr.mxu0 0.0
  %2058 = vmatpush1.msra.mxu0 0.0
  %2059 = vmatprep.subr.mxu0 0.0
  %2060 = vmatpush1.msra.mxu0 0.0
  %2061 = vmatprep.subr.mxu0 0.0
  %2062 = vmatpush1.msra.mxu0 0.0
  %2063 = vmatprep.subr.mxu0 0.0
  %2064 = vmatpush1.msra.mxu0 0.0
  %2065 = vmatprep.subr.mxu0 0.0
  %2066 = vmatpush1.msra.mxu0 0.0
  %2067 = vmatprep.subr.mxu0 0.0
  %2068 = vmatpush1.msra.mxu0 0.0
  %2069 = vmatprep.subr.mxu0 0.0
  %2070 = vmatpush1.msra.mxu0 0.0
  %2071 = vmatprep.subr.mxu0 0.0
  %2072 = vmatpush1.msra.mxu0 0.0
  %2073 = vmatprep.subr.mxu0 0.0
  %2074 = vmatpush1.msra.mxu0 0.0
  %2075 = vmatprep.subr.mxu0 0.0
  %2076 = vmatpush1.msra.mxu0 0.0
  %2077 = vmatprep.subr.mxu0 0.0
  %2078 = vmatpush1.msra.mxu0 0.0
  %2079 = vmatprep.subr.mxu0 0.0
  %2080 = vmatpush1.msra.mxu0 0.0
  %2081 = vmatprep.subr.mxu0 0.0
  %2082 = vmatpush1.msra.mxu0 0.0
  %2083 = vmatprep.subr.mxu0 0.0
  %2084 = vmatpush1.msra.mxu0 0.0
  %2085 = vmatprep.subr.mxu0 0.0
  %2086 = vmatpush1.msra.mxu0 0.0
  %2087 = vmatprep.subr.mxu0 0.0
  %2088 = vmatpush1.msra.mxu0 0.0
  %2089 = vmatprep.subr.mxu0 0.0
  %2090 = vmatpush1.msra.mxu0 0.0
  %2091 = vmatprep.subr.mxu0 0.0
  %2092 = vmatpush1.msra.mxu0 0.0
  %2093 = vmatprep.subr.mxu0 0.0
  %2094 = vmatpush1.msra.mxu0 0.0
  %2095 = vmatprep.subr.mxu0 0.0
  %2096 = vmatpush1.msra.mxu0 0.0
  %2097 = vmatprep.subr.mxu0 0.0
  %2098 = vmatpush1.msra.mxu0 0.0
  %2099 = vmatprep.subr.mxu0 0.0
  %2100 = vmatpush1.msra.mxu0 0.0
  %2101 = vmatprep.subr.mxu0 0.0
  %2102 = vmatpush1.msra.mxu0 0.0
  %2103 = vmatprep.subr.mxu0 0.0
  %2104 = vmatpush1.msra.mxu0 0.0
  %2105 = vmatprep.subr.mxu0 0.0
  %2106 = vmatpush1.msra.mxu0 0.0
  %2107 = vmatprep.subr.mxu0 0.0
  %2108 = vmatpush1.msra.mxu0 0.0
  %2109 = vmatprep.subr.mxu0 0.0
  %2110 = vmatpush1.msra.mxu0 0.0
  %2111 = vmatprep.subr.mxu0 0.0
  %2112 = vmatpush1.msra.mxu0 0.0
  %2113 = vmatprep.subr.mxu0 0.0
  %2114 = vmatpush1.msra.mxu0 0.0
  %2115 = vmatprep.subr.mxu0 0.0
  %2116 = vmatpush1.msra.mxu0 0.0
  %2117 = vmatprep.mubr.f32.mxu0 0.0
  %2118 = vmatmul.mubr.f32.gmra.mrb[0].mxu0 %v2051
  %v2119 = vpop.f32.mrb[0].mxu0
  %v2120 = vadd.f32 0.0, %v2119
  %v2121 = vpop.f32.mrb[0].mxu0
  %2122 = vdwg.mxu0
  %2123 = vrot.lane.b32.xlu0 %v211, 48
  %v2124 = vpop.permute.xlu0 %2123
  %v2127 = vsel %vm221, %v1894, 0
  %2129 = vmatprep.subr.mxu0 0.0
  %2130 = vmatpush1.msra.mxu0 %v2124
  %2131 = vmatprep.subr.mxu0 0.0
  %2132 = vmatpush1.msra.mxu0 0.0
  %2133 = vmatprep.subr.mxu0 0.0
  %2134 = vmatpush1.msra.mxu0 0.0
  %2135 = vmatprep.subr.mxu0 0.0
  %2136 = vmatpush1.msra.mxu0 0.0
  %2137 = vmatprep.subr.mxu0 0.0
  %2138 = vmatpush1.msra.mxu0 0.0
  %2139 = vmatprep.subr.mxu0 0.0
  %2140 = vmatpush1.msra.mxu0 0.0
  %2141 = vmatprep.subr.mxu0 0.0
  %2142 = vmatpush1.msra.mxu0 0.0
  %2143 = vmatprep.subr.mxu0 0.0
  %2144 = vmatpush1.msra.mxu0 0.0
  %2145 = vmatprep.subr.mxu0 0.0
  %2146 = vmatpush1.msra.mxu0 0.0
  %2147 = vmatprep.subr.mxu0 0.0
  %2148 = vmatpush1.msra.mxu0 0.0
  %2149 = vmatprep.subr.mxu0 0.0
  %2150 = vmatpush1.msra.mxu0 0.0
  %2151 = vmatprep.subr.mxu0 0.0
  %2152 = vmatpush1.msra.mxu0 0.0
  %2153 = vmatprep.subr.mxu0 0.0
  %2154 = vmatpush1.msra.mxu0 0.0
  %2155 = vmatprep.subr.mxu0 0.0
  %2156 = vmatpush1.msra.mxu0 0.0
  %2157 = vmatprep.subr.mxu0 0.0
  %2158 = vmatpush1.msra.mxu0 0.0
  %2159 = vmatprep.subr.mxu0 0.0
  %2160 = vmatpush1.msra.mxu0 0.0
  %2161 = vmatprep.subr.mxu0 0.0
  %2162 = vmatpush1.msra.mxu0 0.0
  %2163 = vmatprep.subr.mxu0 0.0
  %2164 = vmatpush1.msra.mxu0 0.0
  %2165 = vmatprep.subr.mxu0 0.0
  %2166 = vmatpush1.msra.mxu0 0.0
  %2167 = vmatprep.subr.mxu0 0.0
  %2168 = vmatpush1.msra.mxu0 0.0
  %2169 = vmatprep.subr.mxu0 0.0
  %2170 = vmatpush1.msra.mxu0 0.0
  %2171 = vmatprep.subr.mxu0 0.0
  %2172 = vmatpush1.msra.mxu0 0.0
  %2173 = vmatprep.subr.mxu0 0.0
  %2174 = vmatpush1.msra.mxu0 0.0
  %2175 = vmatprep.subr.mxu0 0.0
  %2176 = vmatpush1.msra.mxu0 0.0
  %2177 = vmatprep.subr.mxu0 0.0
  %2178 = vmatpush1.msra.mxu0 0.0
  %2179 = vmatprep.subr.mxu0 0.0
  %2180 = vmatpush1.msra.mxu0 0.0
  %2181 = vmatprep.subr.mxu0 0.0
  %2182 = vmatpush1.msra.mxu0 0.0
  %2183 = vmatprep.subr.mxu0 0.0
  %2184 = vmatpush1.msra.mxu0 0.0
  %2185 = vmatprep.subr.mxu0 0.0
  %2186 = vmatpush1.msra.mxu0 0.0
  %2187 = vmatprep.subr.mxu0 0.0
  %2188 = vmatpush1.msra.mxu0 0.0
  %2189 = vmatprep.subr.mxu0 0.0
  %2190 = vmatpush1.msra.mxu0 0.0
  %2191 = vmatprep.subr.mxu0 0.0
  %2192 = vmatpush1.msra.mxu0 0.0
  %2193 = vmatprep.mubr.f32.mxu0 0.0
  %2194 = vmatmul.mubr.f32.gmra.mrb[0].mxu0 %v2127
  %v2195 = vpop.f32.mrb[0].mxu0
  %v2196 = vadd.f32 0.0, %v2195
  %v2197 = vpop.f32.mrb[0].mxu0
  %2198 = vdwg.mxu0
  %2199 = vrot.lane.b32.xlu0 %v214, 104
  %v2200 = vpop.permute.xlu0 %2199
  %2201 = vrot.lane.b32.xlu0 %v196, 72
  %v2202 = vpop.permute.xlu0 %2201
  %v2203 = vsel %vm221, %v2200, 0
  %v2205 = vsel %vm221, %v2202, 0
  %2207 = vmatprep.subr.mxu0 0.0
  %2208 = vmatpush1.xpose.msra.mxu0 %v2205
  %2209 = vmatprep.subr.mxu0 0.0
  %2210 = vmatpush1.xpose.msra.mxu0 0.0
  %2211 = vmatprep.subr.mxu0 0.0
  %2212 = vmatpush1.xpose.msra.mxu0 0.0
  %2213 = vmatprep.subr.mxu0 0.0
  %2214 = vmatpush1.xpose.msra.mxu0 0.0
  %2215 = vmatprep.subr.mxu0 0.0
  %2216 = vmatpush1.xpose.msra.mxu0 0.0
  %2217 = vmatprep.subr.mxu0 0.0
  %2218 = vmatpush1.xpose.msra.mxu0 0.0
  %2219 = vmatprep.subr.mxu0 0.0
  %2220 = vmatpush1.xpose.msra.mxu0 0.0
  %2221 = vmatprep.subr.mxu0 0.0
  %2222 = vmatpush1.xpose.msra.mxu0 0.0
  %2223 = vmatprep.subr.mxu0 0.0
  %2224 = vmatpush1.xpose.msra.mxu0 0.0
  %2225 = vmatprep.subr.mxu0 0.0
  %2226 = vmatpush1.xpose.msra.mxu0 0.0
  %2227 = vmatprep.subr.mxu0 0.0
  %2228 = vmatpush1.xpose.msra.mxu0 0.0
  %2229 = vmatprep.subr.mxu0 0.0
  %2230 = vmatpush1.xpose.msra.mxu0 0.0
  %2231 = vmatprep.subr.mxu0 0.0
  %2232 = vmatpush1.xpose.msra.mxu0 0.0
  %2233 = vmatprep.subr.mxu0 0.0
  %2234 = vmatpush1.xpose.msra.mxu0 0.0
  %2235 = vmatprep.subr.mxu0 0.0
  %2236 = vmatpush1.xpose.msra.mxu0 0.0
  %2237 = vmatprep.subr.mxu0 0.0
  %2238 = vmatpush1.xpose.msra.mxu0 0.0
  %2239 = vmatprep.subr.mxu0 0.0
  %2240 = vmatpush1.xpose.msra.mxu0 0.0
  %2241 = vmatprep.subr.mxu0 0.0
  %2242 = vmatpush1.xpose.msra.mxu0 0.0
  %2243 = vmatprep.subr.mxu0 0.0
  %2244 = vmatpush1.xpose.msra.mxu0 0.0
  %2245 = vmatprep.subr.mxu0 0.0
  %2246 = vmatpush1.xpose.msra.mxu0 0.0
  %2247 = vmatprep.subr.mxu0 0.0
  %2248 = vmatpush1.xpose.msra.mxu0 0.0
  %2249 = vmatprep.subr.mxu0 0.0
  %2250 = vmatpush1.xpose.msra.mxu0 0.0
  %2251 = vmatprep.subr.mxu0 0.0
  %2252 = vmatpush1.xpose.msra.mxu0 0.0
  %2253 = vmatprep.subr.mxu0 0.0
  %2254 = vmatpush1.xpose.msra.mxu0 0.0
  %2255 = vmatprep.subr.mxu0 0.0
  %2256 = vmatpush1.xpose.msra.mxu0 0.0
  %2257 = vmatprep.subr.mxu0 0.0
  %2258 = vmatpush1.xpose.msra.mxu0 0.0
  %2259 = vmatprep.subr.mxu0 0.0
  %2260 = vmatpush1.xpose.msra.mxu0 0.0
  %2261 = vmatprep.subr.mxu0 0.0
  %2262 = vmatpush1.xpose.msra.mxu0 0.0
  %2263 = vmatprep.subr.mxu0 0.0
  %2264 = vmatpush1.xpose.msra.mxu0 0.0
  %2265 = vmatprep.subr.mxu0 0.0
  %2266 = vmatpush1.xpose.msra.mxu0 0.0
  %2267 = vmatprep.subr.mxu0 0.0
  %2268 = vmatpush1.xpose.msra.mxu0 0.0
  %2269 = vmatprep.subr.mxu0 0.0
  %2270 = vmatpush1.xpose.msra.mxu0 0.0
  %2271 = vmatprep.mubr.f32.mxu0 0.0
  %2272 = vmatmul.mubr.f32.gmra.mrb[0].mxu0 %v2203
  %v2273 = vpop.f32.mrb[0].mxu0
  %v2274 = vadd.f32 0.0, %v2273
  %v2275 = vpop.f32.mrb[0].mxu0
  %2276 = vdwg.mxu0
  %2277 = vrot.lane.b32.xlu0 %v215, 104
  %v2278 = vpop.permute.xlu0 %2277
  %2279 = vrot.lane.b32.xlu0 %v201, 72
  %v2280 = vpop.permute.xlu0 %2279
  %v2281 = vsel %vm221, %v2278, 0
  %v2283 = vsel %vm221, %v2280, 0
  %2285 = vmatprep.subr.mxu0 0.0
  %2286 = vmatpush1.xpose.msra.mxu0 %v2283
  %2287 = vmatprep.subr.mxu0 0.0
  %2288 = vmatpush1.xpose.msra.mxu0 0.0
  %2289 = vmatprep.subr.mxu0 0.0
  %2290 = vmatpush1.xpose.msra.mxu0 0.0
  %2291 = vmatprep.subr.mxu0 0.0
  %2292 = vmatpush1.xpose.msra.mxu0 0.0
  %2293 = vmatprep.subr.mxu0 0.0
  %2294 = vmatpush1.xpose.msra.mxu0 0.0
  %2295 = vmatprep.subr.mxu0 0.0
  %2296 = vmatpush1.xpose.msra.mxu0 0.0
  %2297 = vmatprep.subr.mxu0 0.0
  %2298 = vmatpush1.xpose.msra.mxu0 0.0
  %2299 = vmatprep.subr.mxu0 0.0
  %2300 = vmatpush1.xpose.msra.mxu0 0.0
  %2301 = vmatprep.subr.mxu0 0.0
  %2302 = vmatpush1.xpose.msra.mxu0 0.0
  %2303 = vmatprep.subr.mxu0 0.0
  %2304 = vmatpush1.xpose.msra.mxu0 0.0
  %2305 = vmatprep.subr.mxu0 0.0
  %2306 = vmatpush1.xpose.msra.mxu0 0.0
  %2307 = vmatprep.subr.mxu0 0.0
  %2308 = vmatpush1.xpose.msra.mxu0 0.0
  %2309 = vmatprep.subr.mxu0 0.0
  %2310 = vmatpush1.xpose.msra.mxu0 0.0
  %2311 = vmatprep.subr.mxu0 0.0
  %2312 = vmatpush1.xpose.msra.mxu0 0.0
  %2313 = vmatprep.subr.mxu0 0.0
  %2314 = vmatpush1.xpose.msra.mxu0 0.0
  %2315 = vmatprep.subr.mxu0 0.0
  %2316 = vmatpush1.xpose.msra.mxu0 0.0
  %2317 = vmatprep.subr.mxu0 0.0
  %2318 = vmatpush1.xpose.msra.mxu0 0.0
  %2319 = vmatprep.subr.mxu0 0.0
  %2320 = vmatpush1.xpose.msra.mxu0 0.0
  %2321 = vmatprep.subr.mxu0 0.0
  %2322 = vmatpush1.xpose.msra.mxu0 0.0
  %2323 = vmatprep.subr.mxu0 0.0
  %2324 = vmatpush1.xpose.msra.mxu0 0.0
  %2325 = vmatprep.subr.mxu0 0.0
  %2326 = vmatpush1.xpose.msra.mxu0 0.0
  %2327 = vmatprep.subr.mxu0 0.0
  %2328 = vmatpush1.xpose.msra.mxu0 0.0
  %2329 = vmatprep.subr.mxu0 0.0
  %2330 = vmatpush1.xpose.msra.mxu0 0.0
  %2331 = vmatprep.subr.mxu0 0.0
  %2332 = vmatpush1.xpose.msra.mxu0 0.0
  %2333 = vmatprep.subr.mxu0 0.0
  %2334 = vmatpush1.xpose.msra.mxu0 0.0
  %2335 = vmatprep.subr.mxu0 0.0
  %2336 = vmatpush1.xpose.msra.mxu0 0.0
  %2337 = vmatprep.subr.mxu0 0.0
  %2338 = vmatpush1.xpose.msra.mxu0 0.0
  %2339 = vmatprep.subr.mxu0 0.0
  %2340 = vmatpush1.xpose.msra.mxu0 0.0
  %2341 = vmatprep.subr.mxu0 0.0
  %2342 = vmatpush1.xpose.msra.mxu0 0.0
  %2343 = vmatprep.subr.mxu0 0.0
  %2344 = vmatpush1.xpose.msra.mxu0 0.0
  %2345 = vmatprep.subr.mxu0 0.0
  %2346 = vmatpush1.xpose.msra.mxu0 0.0
  %2347 = vmatprep.subr.mxu0 0.0
  %2348 = vmatpush1.xpose.msra.mxu0 0.0
  %2349 = vmatprep.mubr.f32.mxu0 0.0
  %2350 = vmatmul.mubr.f32.gmra.mrb[0].mxu0 %v2281
  %v2351 = vpop.f32.mrb[0].mxu0
  %v2352 = vadd.f32 0.0, %v2351
  %v2353 = vpop.f32.mrb[0].mxu0
  %2354 = vdwg.mxu0
  %2355 = vrot.lane.b32.xlu0 %v216, 104
  %v2356 = vpop.permute.xlu0 %2355
  %2357 = vrot.lane.b32.xlu0 %v206, 72
  %v2358 = vpop.permute.xlu0 %2357
  %v2359 = vsel %vm221, %v2356, 0
  %v2361 = vsel %vm221, %v2358, 0
  %2363 = vmatprep.subr.mxu0 0.0
  %2364 = vmatpush1.xpose.msra.mxu0 %v2361
  %2365 = vmatprep.subr.mxu0 0.0
  %2366 = vmatpush1.xpose.msra.mxu0 0.0
  %2367 = vmatprep.subr.mxu0 0.0
  %2368 = vmatpush1.xpose.msra.mxu0 0.0
  %2369 = vmatprep.subr.mxu0 0.0
  %2370 = vmatpush1.xpose.msra.mxu0 0.0
  %2371 = vmatprep.subr.mxu0 0.0
  %2372 = vmatpush1.xpose.msra.mxu0 0.0
  %2373 = vmatprep.subr.mxu0 0.0
  %2374 = vmatpush1.xpose.msra.mxu0 0.0
  %2375 = vmatprep.subr.mxu0 0.0
  %2376 = vmatpush1.xpose.msra.mxu0 0.0
  %2377 = vmatprep.subr.mxu0 0.0
  %2378 = vmatpush1.xpose.msra.mxu0 0.0
  %2379 = vmatprep.subr.mxu0 0.0
  %2380 = vmatpush1.xpose.msra.mxu0 0.0
  %2381 = vmatprep.subr.mxu0 0.0
  %2382 = vmatpush1.xpose.msra.mxu0 0.0
  %2383 = vmatprep.subr.mxu0 0.0
  %2384 = vmatpush1.xpose.msra.mxu0 0.0
  %2385 = vmatprep.subr.mxu0 0.0
  %2386 = vmatpush1.xpose.msra.mxu0 0.0
  %2387 = vmatprep.subr.mxu0 0.0
  %2388 = vmatpush1.xpose.msra.mxu0 0.0
  %2389 = vmatprep.subr.mxu0 0.0
  %2390 = vmatpush1.xpose.msra.mxu0 0.0
  %2391 = vmatprep.subr.mxu0 0.0
  %2392 = vmatpush1.xpose.msra.mxu0 0.0
  %2393 = vmatprep.subr.mxu0 0.0
  %2394 = vmatpush1.xpose.msra.mxu0 0.0
  %2395 = vmatprep.subr.mxu0 0.0
  %2396 = vmatpush1.xpose.msra.mxu0 0.0
  %2397 = vmatprep.subr.mxu0 0.0
  %2398 = vmatpush1.xpose.msra.mxu0 0.0
  %2399 = vmatprep.subr.mxu0 0.0
  %2400 = vmatpush1.xpose.msra.mxu0 0.0
  %2401 = vmatprep.subr.mxu0 0.0
  %2402 = vmatpush1.xpose.msra.mxu0 0.0
  %2403 = vmatprep.subr.mxu0 0.0
  %2404 = vmatpush1.xpose.msra.mxu0 0.0
  %2405 = vmatprep.subr.mxu0 0.0
  %2406 = vmatpush1.xpose.msra.mxu0 0.0
  %2407 = vmatprep.subr.mxu0 0.0
  %2408 = vmatpush1.xpose.msra.mxu0 0.0
  %2409 = vmatprep.subr.mxu0 0.0
  %2410 = vmatpush1.xpose.msra.mxu0 0.0
  %2411 = vmatprep.subr.mxu0 0.0
  %2412 = vmatpush1.xpose.msra.mxu0 0.0
  %2413 = vmatprep.subr.mxu0 0.0
  %2414 = vmatpush1.xpose.msra.mxu0 0.0
  %2415 = vmatprep.subr.mxu0 0.0
  %2416 = vmatpush1.xpose.msra.mxu0 0.0
  %2417 = vmatprep.subr.mxu0 0.0
  %2418 = vmatpush1.xpose.msra.mxu0 0.0
  %2419 = vmatprep.subr.mxu0 0.0
  %2420 = vmatpush1.xpose.msra.mxu0 0.0
  %2421 = vmatprep.subr.mxu0 0.0
  %2422 = vmatpush1.xpose.msra.mxu0 0.0
  %2423 = vmatprep.subr.mxu0 0.0
  %2424 = vmatpush1.xpose.msra.mxu0 0.0
  %2425 = vmatprep.subr.mxu0 0.0
  %2426 = vmatpush1.xpose.msra.mxu0 0.0
  %2427 = vmatprep.mubr.f32.mxu0 0.0
  %2428 = vmatmul.mubr.f32.gmra.mrb[0].mxu0 %v2359
  %v2429 = vpop.f32.mrb[0].mxu0
  %v2430 = vadd.f32 0.0, %v2429
  %v2431 = vpop.f32.mrb[0].mxu0
  %2432 = vdwg.mxu0
  %2433 = vrot.lane.b32.xlu0 %v217, 104
  %v2434 = vpop.permute.xlu0 %2433
  %2435 = vrot.lane.b32.xlu0 %v211, 72
  %v2436 = vpop.permute.xlu0 %2435
  %v2437 = vsel %vm221, %v2434, 0
  %v2439 = vsel %vm221, %v2436, 0
  %2441 = vmatprep.subr.mxu0 0.0
  %2442 = vmatpush1.xpose.msra.mxu0 %v2439
  %2443 = vmatprep.subr.mxu0 0.0
  %2444 = vmatpush1.xpose.msra.mxu0 0.0
  %2445 = vmatprep.subr.mxu0 0.0
  %2446 = vmatpush1.xpose.msra.mxu0 0.0
  %2447 = vmatprep.subr.mxu0 0.0
  %2448 = vmatpush1.xpose.msra.mxu0 0.0
  %2449 = vmatprep.subr.mxu0 0.0
  %2450 = vmatpush1.xpose.msra.mxu0 0.0
  %2451 = vmatprep.subr.mxu0 0.0
  %2452 = vmatpush1.xpose.msra.mxu0 0.0
  %2453 = vmatprep.subr.mxu0 0.0
  %2454 = vmatpush1.xpose.msra.mxu0 0.0
  %2455 = vmatprep.subr.mxu0 0.0
  %2456 = vmatpush1.xpose.msra.mxu0 0.0
  %2457 = vmatprep.subr.mxu0 0.0
  %2458 = vmatpush1.xpose.msra.mxu0 0.0
  %2459 = vmatprep.subr.mxu0 0.0
  %2460 = vmatpush1.xpose.msra.mxu0 0.0
  %2461 = vmatprep.subr.mxu0 0.0
  %2462 = vmatpush1.xpose.msra.mxu0 0.0
  %2463 = vmatprep.subr.mxu0 0.0
  %2464 = vmatpush1.xpose.msra.mxu0 0.0
  %2465 = vmatprep.subr.mxu0 0.0
  %2466 = vmatpush1.xpose.msra.mxu0 0.0
  %2467 = vmatprep.subr.mxu0 0.0
  %2468 = vmatpush1.xpose.msra.mxu0 0.0
  %2469 = vmatprep.subr.mxu0 0.0
  %2470 = vmatpush1.xpose.msra.mxu0 0.0
  %2471 = vmatprep.subr.mxu0 0.0
  %2472 = vmatpush1.xpose.msra.mxu0 0.0
  %2473 = vmatprep.subr.mxu0 0.0
  %2474 = vmatpush1.xpose.msra.mxu0 0.0
  %2475 = vmatprep.subr.mxu0 0.0
  %2476 = vmatpush1.xpose.msra.mxu0 0.0
  %2477 = vmatprep.subr.mxu0 0.0
  %2478 = vmatpush1.xpose.msra.mxu0 0.0
  %2479 = vmatprep.subr.mxu0 0.0
  %2480 = vmatpush1.xpose.msra.mxu0 0.0
  %2481 = vmatprep.subr.mxu0 0.0
  %2482 = vmatpush1.xpose.msra.mxu0 0.0
  %2483 = vmatprep.subr.mxu0 0.0
  %2484 = vmatpush1.xpose.msra.mxu0 0.0
  %2485 = vmatprep.subr.mxu0 0.0
  %2486 = vmatpush1.xpose.msra.mxu0 0.0
  %2487 = vmatprep.subr.mxu0 0.0
  %2488 = vmatpush1.xpose.msra.mxu0 0.0
  %2489 = vmatprep.subr.mxu0 0.0
  %2490 = vmatpush1.xpose.msra.mxu0 0.0
  %2491 = vmatprep.subr.mxu0 0.0
  %2492 = vmatpush1.xpose.msra.mxu0 0.0
  %2493 = vmatprep.subr.mxu0 0.0
  %2494 = vmatpush1.xpose.msra.mxu0 0.0
  %2495 = vmatprep.subr.mxu0 0.0
  %2496 = vmatpush1.xpose.msra.mxu0 0.0
  %2497 = vmatprep.subr.mxu0 0.0
  %2498 = vmatpush1.xpose.msra.mxu0 0.0
  %2499 = vmatprep.subr.mxu0 0.0
  %2500 = vmatpush1.xpose.msra.mxu0 0.0
  %2501 = vmatprep.subr.mxu0 0.0
  %2502 = vmatpush1.xpose.msra.mxu0 0.0
  %2503 = vmatprep.subr.mxu0 0.0
  %2504 = vmatpush1.xpose.msra.mxu0 0.0
  %2505 = vmatprep.mubr.f32.mxu0 0.0
  %2506 = vmatmul.mubr.f32.gmra.mrb[0].mxu0 %v2437
  %v2507 = vpop.f32.mrb[0].mxu0
  %v2508 = vadd.f32 0.0, %v2507
  %v2509 = vpop.f32.mrb[0].mxu0
  %2510 = vdwg.mxu0
  %v2511 = vsel %vm221, %v2274, -inf
  %2512 = vmax.xlane.f32.xlu0 %v2511
  %v2513 = vpop.xlane.xlu0 %2512
  %v2514 = vsel %vm221, %v2352, -inf
  %2515 = vmax.xlane.f32.xlu0 %v2514
  %v2516 = vpop.xlane.xlu0 %2515
  %v2517 = vsel %vm221, %v2430, -inf
  %2518 = vmax.xlane.f32.xlu0 %v2517
  %v2519 = vpop.xlane.xlu0 %2518
  %v2520 = vsel %vm221, %v2508, -inf
  %2521 = vmax.xlane.f32.xlu0 %v2520
  %v2522 = vpop.xlane.xlu0 %2521
  %v2523 = vsub.f32 %v2274, %v2513
  %v2524 = vsub.f32 %v2352, %v2516
  %v2525 = vsub.f32 %v2430, %v2519
  %v2526 = vsub.f32 %v2508, %v2522
  %v2527 = vmul.f32 %v2523, 1.442695
  %v2528 = vpow.pop %v2527
  %v2529 = vmul.f32 %v2524, 1.442695
  %v2530 = vpow.pop %v2529
  %v2531 = vmul.f32 %v2525, 1.442695
  %v2532 = vpow.pop %v2531
  %v2533 = vmul.f32 %v2526, 1.442695
  %v2534 = vpow.pop %v2533
  %v2535 = vsel %vm221, %v2528, 0.0
  %2536 = vadd.xlane.f32.xlu0 %v2535
  %v2537 = vpop.xlane.xlu0 %2536
  %v2538 = vsel %vm221, %v2530, 0.0
  %2539 = vadd.xlane.f32.xlu0 %v2538
  %v2540 = vpop.xlane.xlu0 %2539
  %v2541 = vsel %vm221, %v2532, 0.0
  %2542 = vadd.xlane.f32.xlu0 %v2541
  %v2543 = vpop.xlane.xlu0 %2542
  %v2544 = vsel %vm221, %v2534, 0.0
  %2545 = vadd.xlane.f32.xlu0 %v2544
  %v2546 = vpop.xlane.xlu0 %2545
  %v2547 = vrcp.pop %v2537
  %v2548 = vmul.f32 %v2528, %v2547
  %v2549 = vrcp.pop %v2540
  %v2550 = vmul.f32 %v2530, %v2549
  %v2551 = vrcp.pop %v2543
  %v2552 = vmul.f32 %v2532, %v2551
  %v2553 = vrcp.pop %v2546
  %v2554 = vmul.f32 %v2534, %v2553
  %2555 = vrot.lane.b32.xlu0 %v196, 40
  %v2556 = vpop.permute.xlu0 %2555
  %v2559 = vsel %vm221, %v2548, 0
  %2561 = vmatprep.subr.mxu0 0.0
  %2562 = vmatpush1.msra.mxu0 %v2556
  %2563 = vmatprep.subr.mxu0 0.0
  %2564 = vmatpush1.msra.mxu0 0.0
  %2565 = vmatprep.subr.mxu0 0.0
  %2566 = vmatpush1.msra.mxu0 0.0
  %2567 = vmatprep.subr.mxu0 0.0
  %2568 = vmatpush1.msra.mxu0 0.0
  %2569 = vmatprep.subr.mxu0 0.0
  %2570 = vmatpush1.msra.mxu0 0.0
  %2571 = vmatprep.subr.mxu0 0.0
  %2572 = vmatpush1.msra.mxu0 0.0
  %2573 = vmatprep.subr.mxu0 0.0
  %2574 = vmatpush1.msra.mxu0 0.0
  %2575 = vmatprep.subr.mxu0 0.0
  %2576 = vmatpush1.msra.mxu0 0.0
  %2577 = vmatprep.subr.mxu0 0.0
  %2578 = vmatpush1.msra.mxu0 0.0
  %2579 = vmatprep.subr.mxu0 0.0
  %2580 = vmatpush1.msra.mxu0 0.0
  %2581 = vmatprep.subr.mxu0 0.0
  %2582 = vmatpush1.msra.mxu0 0.0
  %2583 = vmatprep.subr.mxu0 0.0
  %2584 = vmatpush1.msra.mxu0 0.0
  %2585 = vmatprep.subr.mxu0 0.0
  %2586 = vmatpush1.msra.mxu0 0.0
  %2587 = vmatprep.subr.mxu0 0.0
  %2588 = vmatpush1.msra.mxu0 0.0
  %2589 = vmatprep.subr.mxu0 0.0
  %2590 = vmatpush1.msra.mxu0 0.0
  %2591 = vmatprep.subr.mxu0 0.0
  %2592 = vmatpush1.msra.mxu0 0.0
  %2593 = vmatprep.subr.mxu0 0.0
  %2594 = vmatpush1.msra.mxu0 0.0
  %2595 = vmatprep.subr.mxu0 0.0
  %2596 = vmatpush1.msra.mxu0 0.0
  %2597 = vmatprep.subr.mxu0 0.0
  %2598 = vmatpush1.msra.mxu0 0.0
  %2599 = vmatprep.subr.mxu0 0.0
  %2600 = vmatpush1.msra.mxu0 0.0
  %2601 = vmatprep.subr.mxu0 0.0
  %2602 = vmatpush1.msra.mxu0 0.0
  %2603 = vmatprep.subr.mxu0 0.0
  %2604 = vmatpush1.msra.mxu0 0.0
  %2605 = vmatprep.subr.mxu0 0.0
  %2606 = vmatpush1.msra.mxu0 0.0
  %2607 = vmatprep.subr.mxu0 0.0
  %2608 = vmatpush1.msra.mxu0 0.0
  %2609 = vmatprep.subr.mxu0 0.0
  %2610 = vmatpush1.msra.mxu0 0.0
  %2611 = vmatprep.subr.mxu0 0.0
  %2612 = vmatpush1.msra.mxu0 0.0
  %2613 = vmatprep.subr.mxu0 0.0
  %2614 = vmatpush1.msra.mxu0 0.0
  %2615 = vmatprep.subr.mxu0 0.0
  %2616 = vmatpush1.msra.mxu0 0.0
  %2617 = vmatprep.subr.mxu0 0.0
  %2618 = vmatpush1.msra.mxu0 0.0
  %2619 = vmatprep.subr.mxu0 0.0
  %2620 = vmatpush1.msra.mxu0 0.0
  %2621 = vmatprep.subr.mxu0 0.0
  %2622 = vmatpush1.msra.mxu0 0.0
  %2623 = vmatprep.subr.mxu0 0.0
  %2624 = vmatpush1.msra.mxu0 0.0
  %2625 = vmatprep.mubr.f32.mxu0 0.0
  %2626 = vmatmul.mubr.f32.gmra.mrb[0].mxu0 %v2559
  %v2627 = vpop.f32.mrb[0].mxu0
  %v2628 = vadd.f32 0.0, %v2627
  %v2629 = vpop.f32.mrb[0].mxu0
  %2630 = vdwg.mxu0
  %2631 = vrot.lane.b32.xlu0 %v201, 40
  %v2632 = vpop.permute.xlu0 %2631
  %v2635 = vsel %vm221, %v2550, 0
  %2637 = vmatprep.subr.mxu0 0.0
  %2638 = vmatpush1.msra.mxu0 %v2632
  %2639 = vmatprep.subr.mxu0 0.0
  %2640 = vmatpush1.msra.mxu0 0.0
  %2641 = vmatprep.subr.mxu0 0.0
  %2642 = vmatpush1.msra.mxu0 0.0
  %2643 = vmatprep.subr.mxu0 0.0
  %2644 = vmatpush1.msra.mxu0 0.0
  %2645 = vmatprep.subr.mxu0 0.0
  %2646 = vmatpush1.msra.mxu0 0.0
  %2647 = vmatprep.subr.mxu0 0.0
  %2648 = vmatpush1.msra.mxu0 0.0
  %2649 = vmatprep.subr.mxu0 0.0
  %2650 = vmatpush1.msra.mxu0 0.0
  %2651 = vmatprep.subr.mxu0 0.0
  %2652 = vmatpush1.msra.mxu0 0.0
  %2653 = vmatprep.subr.mxu0 0.0
  %2654 = vmatpush1.msra.mxu0 0.0
  %2655 = vmatprep.subr.mxu0 0.0
  %2656 = vmatpush1.msra.mxu0 0.0
  %2657 = vmatprep.subr.mxu0 0.0
  %2658 = vmatpush1.msra.mxu0 0.0
  %2659 = vmatprep.subr.mxu0 0.0
  %2660 = vmatpush1.msra.mxu0 0.0
  %2661 = vmatprep.subr.mxu0 0.0
  %2662 = vmatpush1.msra.mxu0 0.0
  %2663 = vmatprep.subr.mxu0 0.0
  %2664 = vmatpush1.msra.mxu0 0.0
  %2665 = vmatprep.subr.mxu0 0.0
  %2666 = vmatpush1.msra.mxu0 0.0
  %2667 = vmatprep.subr.mxu0 0.0
  %2668 = vmatpush1.msra.mxu0 0.0
  %2669 = vmatprep.subr.mxu0 0.0
  %2670 = vmatpush1.msra.mxu0 0.0
  %2671 = vmatprep.subr.mxu0 0.0
  %2672 = vmatpush1.msra.mxu0 0.0
  %2673 = vmatprep.subr.mxu0 0.0
  %2674 = vmatpush1.msra.mxu0 0.0
  %2675 = vmatprep.subr.mxu0 0.0
  %2676 = vmatpush1.msra.mxu0 0.0
  %2677 = vmatprep.subr.mxu0 0.0
  %2678 = vmatpush1.msra.mxu0 0.0
  %2679 = vmatprep.subr.mxu0 0.0
  %2680 = vmatpush1.msra.mxu0 0.0
  %2681 = vmatprep.subr.mxu0 0.0
  %2682 = vmatpush1.msra.mxu0 0.0
  %2683 = vmatprep.subr.mxu0 0.0
  %2684 = vmatpush1.msra.mxu0 0.0
  %2685 = vmatprep.subr.mxu0 0.0
  %2686 = vmatpush1.msra.mxu0 0.0
  %2687 = vmatprep.subr.mxu0 0.0
  %2688 = vmatpush1.msra.mxu0 0.0
  %2689 = vmatprep.subr.mxu0 0.0
  %2690 = vmatpush1.msra.mxu0 0.0
  %2691 = vmatprep.subr.mxu0 0.0
  %2692 = vmatpush1.msra.mxu0 0.0
  %2693 = vmatprep.subr.mxu0 0.0
  %2694 = vmatpush1.msra.mxu0 0.0
  %2695 = vmatprep.subr.mxu0 0.0
  %2696 = vmatpush1.msra.mxu0 0.0
  %2697 = vmatprep.subr.mxu0 0.0
  %2698 = vmatpush1.msra.mxu0 0.0
  %2699 = vmatprep.subr.mxu0 0.0
  %2700 = vmatpush1.msra.mxu0 0.0
  %2701 = vmatprep.mubr.f32.mxu0 0.0
  %2702 = vmatmul.mubr.f32.gmra.mrb[0].mxu0 %v2635
  %v2703 = vpop.f32.mrb[0].mxu0
  %v2704 = vadd.f32 0.0, %v2703
  %v2705 = vpop.f32.mrb[0].mxu0
  %2706 = vdwg.mxu0
  %2707 = vrot.lane.b32.xlu0 %v206, 40
  %v2708 = vpop.permute.xlu0 %2707
  %v2711 = vsel %vm221, %v2552, 0
  %2713 = vmatprep.subr.mxu0 0.0
  %2714 = vmatpush1.msra.mxu0 %v2708
  %2715 = vmatprep.subr.mxu0 0.0
  %2716 = vmatpush1.msra.mxu0 0.0
  %2717 = vmatprep.subr.mxu0 0.0
  %2718 = vmatpush1.msra.mxu0 0.0
  %2719 = vmatprep.subr.mxu0 0.0
  %2720 = vmatpush1.msra.mxu0 0.0
  %2721 = vmatprep.subr.mxu0 0.0
  %2722 = vmatpush1.msra.mxu0 0.0
  %2723 = vmatprep.subr.mxu0 0.0
  %2724 = vmatpush1.msra.mxu0 0.0
  %2725 = vmatprep.subr.mxu0 0.0
  %2726 = vmatpush1.msra.mxu0 0.0
  %2727 = vmatprep.subr.mxu0 0.0
  %2728 = vmatpush1.msra.mxu0 0.0
  %2729 = vmatprep.subr.mxu0 0.0
  %2730 = vmatpush1.msra.mxu0 0.0
  %2731 = vmatprep.subr.mxu0 0.0
  %2732 = vmatpush1.msra.mxu0 0.0
  %2733 = vmatprep.subr.mxu0 0.0
  %2734 = vmatpush1.msra.mxu0 0.0
  %2735 = vmatprep.subr.mxu0 0.0
  %2736 = vmatpush1.msra.mxu0 0.0
  %2737 = vmatprep.subr.mxu0 0.0
  %2738 = vmatpush1.msra.mxu0 0.0
  %2739 = vmatprep.subr.mxu0 0.0
  %2740 = vmatpush1.msra.mxu0 0.0
  %2741 = vmatprep.subr.mxu0 0.0
  %2742 = vmatpush1.msra.mxu0 0.0
  %2743 = vmatprep.subr.mxu0 0.0
  %2744 = vmatpush1.msra.mxu0 0.0
  %2745 = vmatprep.subr.mxu0 0.0
  %2746 = vmatpush1.msra.mxu0 0.0
  %2747 = vmatprep.subr.mxu0 0.0
  %2748 = vmatpush1.msra.mxu0 0.0
  %2749 = vmatprep.subr.mxu0 0.0
  %2750 = vmatpush1.msra.mxu0 0.0
  %2751 = vmatprep.subr.mxu0 0.0
  %2752 = vmatpush1.msra.mxu0 0.0
  %2753 = vmatprep.subr.mxu0 0.0
  %2754 = vmatpush1.msra.mxu0 0.0
  %2755 = vmatprep.subr.mxu0 0.0
  %2756 = vmatpush1.msra.mxu0 0.0
  %2757 = vmatprep.subr.mxu0 0.0
  %2758 = vmatpush1.msra.mxu0 0.0
  %2759 = vmatprep.subr.mxu0 0.0
  %2760 = vmatpush1.msra.mxu0 0.0
  %2761 = vmatprep.subr.mxu0 0.0
  %2762 = vmatpush1.msra.mxu0 0.0
  %2763 = vmatprep.subr.mxu0 0.0
  %2764 = vmatpush1.msra.mxu0 0.0
  %2765 = vmatprep.subr.mxu0 0.0
  %2766 = vmatpush1.msra.mxu0 0.0
  %2767 = vmatprep.subr.mxu0 0.0
  %2768 = vmatpush1.msra.mxu0 0.0
  %2769 = vmatprep.subr.mxu0 0.0
  %2770 = vmatpush1.msra.mxu0 0.0
  %2771 = vmatprep.subr.mxu0 0.0
  %2772 = vmatpush1.msra.mxu0 0.0
  %2773 = vmatprep.subr.mxu0 0.0
  %2774 = vmatpush1.msra.mxu0 0.0
  %2775 = vmatprep.subr.mxu0 0.0
  %2776 = vmatpush1.msra.mxu0 0.0
  %2777 = vmatprep.mubr.f32.mxu0 0.0
  %2778 = vmatmul.mubr.f32.gmra.mrb[0].mxu0 %v2711
  %v2779 = vpop.f32.mrb[0].mxu0
  %v2780 = vadd.f32 0.0, %v2779
  %v2781 = vpop.f32.mrb[0].mxu0
  %2782 = vdwg.mxu0
  %2783 = vrot.lane.b32.xlu0 %v211, 40
  %v2784 = vpop.permute.xlu0 %2783
  %v2787 = vsel %vm221, %v2554, 0
  %2789 = vmatprep.subr.mxu0 0.0
  %2790 = vmatpush1.msra.mxu0 %v2784
  %2791 = vmatprep.subr.mxu0 0.0
  %2792 = vmatpush1.msra.mxu0 0.0
  %2793 = vmatprep.subr.mxu0 0.0
  %2794 = vmatpush1.msra.mxu0 0.0
  %2795 = vmatprep.subr.mxu0 0.0
  %2796 = vmatpush1.msra.mxu0 0.0
  %2797 = vmatprep.subr.mxu0 0.0
  %2798 = vmatpush1.msra.mxu0 0.0
  %2799 = vmatprep.subr.mxu0 0.0
  %2800 = vmatpush1.msra.mxu0 0.0
  %2801 = vmatprep.subr.mxu0 0.0
  %2802 = vmatpush1.msra.mxu0 0.0
  %2803 = vmatprep.subr.mxu0 0.0
  %2804 = vmatpush1.msra.mxu0 0.0
  %2805 = vmatprep.subr.mxu0 0.0
  %2806 = vmatpush1.msra.mxu0 0.0
  %2807 = vmatprep.subr.mxu0 0.0
  %2808 = vmatpush1.msra.mxu0 0.0
  %2809 = vmatprep.subr.mxu0 0.0
  %2810 = vmatpush1.msra.mxu0 0.0
  %2811 = vmatprep.subr.mxu0 0.0
  %2812 = vmatpush1.msra.mxu0 0.0
  %2813 = vmatprep.subr.mxu0 0.0
  %2814 = vmatpush1.msra.mxu0 0.0
  %2815 = vmatprep.subr.mxu0 0.0
  %2816 = vmatpush1.msra.mxu0 0.0
  %2817 = vmatprep.subr.mxu0 0.0
  %2818 = vmatpush1.msra.mxu0 0.0
  %2819 = vmatprep.subr.mxu0 0.0
  %2820 = vmatpush1.msra.mxu0 0.0
  %2821 = vmatprep.subr.mxu0 0.0
  %2822 = vmatpush1.msra.mxu0 0.0
  %2823 = vmatprep.subr.mxu0 0.0
  %2824 = vmatpush1.msra.mxu0 0.0
  %2825 = vmatprep.subr.mxu0 0.0
  %2826 = vmatpush1.msra.mxu0 0.0
  %2827 = vmatprep.subr.mxu0 0.0
  %2828 = vmatpush1.msra.mxu0 0.0
  %2829 = vmatprep.subr.mxu0 0.0
  %2830 = vmatpush1.msra.mxu0 0.0
  %2831 = vmatprep.subr.mxu0 0.0
  %2832 = vmatpush1.msra.mxu0 0.0
  %2833 = vmatprep.subr.mxu0 0.0
  %2834 = vmatpush1.msra.mxu0 0.0
  %2835 = vmatprep.subr.mxu0 0.0
  %2836 = vmatpush1.msra.mxu0 0.0
  %2837 = vmatprep.subr.mxu0 0.0
  %2838 = vmatpush1.msra.mxu0 0.0
  %2839 = vmatprep.subr.mxu0 0.0
  %2840 = vmatpush1.msra.mxu0 0.0
  %2841 = vmatprep.subr.mxu0 0.0
  %2842 = vmatpush1.msra.mxu0 0.0
  %2843 = vmatprep.subr.mxu0 0.0
  %2844 = vmatpush1.msra.mxu0 0.0
  %2845 = vmatprep.subr.mxu0 0.0
  %2846 = vmatpush1.msra.mxu0 0.0
  %2847 = vmatprep.subr.mxu0 0.0
  %2848 = vmatpush1.msra.mxu0 0.0
  %2849 = vmatprep.subr.mxu0 0.0
  %2850 = vmatpush1.msra.mxu0 0.0
  %2851 = vmatprep.subr.mxu0 0.0
  %2852 = vmatpush1.msra.mxu0 0.0
  %2853 = vmatprep.mubr.f32.mxu0 0.0
  %2854 = vmatmul.mubr.f32.gmra.mrb[0].mxu0 %v2787
  %v2855 = vpop.f32.mrb[0].mxu0
  %v2856 = vadd.f32 0.0, %v2855
  %v2857 = vpop.f32.mrb[0].mxu0
  %2858 = vdwg.mxu0
  %2863 = vrot.lane.b32.xlu0 %v1308, 8
  %v2864 = vpop.permute.xlu0 %2863
  %2865 = vrot.lane.b32.xlu0 %v1384, 8
  %v2866 = vpop.permute.xlu0 %2865
  %2867 = vrot.lane.b32.xlu0 %v1460, 8
  %v2868 = vpop.permute.xlu0 %2867
  %2869 = vrot.lane.b32.xlu0 %v1536, 8
  %v2870 = vpop.permute.xlu0 %2869
  %2879 = vrot.lane.b32.xlu0 %v1968, 16
  %v2880 = vpop.permute.xlu0 %2879
  %2881 = vrot.lane.b32.xlu0 %v2044, 16
  %v2882 = vpop.permute.xlu0 %2881
  %2883 = vrot.lane.b32.xlu0 %v2120, 16
  %v2884 = vpop.permute.xlu0 %2883
  %2885 = vrot.lane.b32.xlu0 %v2196, 16
  %v2886 = vpop.permute.xlu0 %2885
  %2895 = vrot.lane.b32.xlu0 %v2628, 24
  %v2896 = vpop.permute.xlu0 %2895
  %2897 = vrot.lane.b32.xlu0 %v2704, 24
  %v2898 = vpop.permute.xlu0 %2897
  %2899 = vrot.lane.b32.xlu0 %v2780, 24
  %v2900 = vpop.permute.xlu0 %2899
  %2901 = vrot.lane.b32.xlu0 %v2856, 24
  %v2902 = vpop.permute.xlu0 %2901
  %v2907 = vsel %vm221, %v648, %v2864
  %v2908 = vsel %vm221, %v724, %v2866
  %v2909 = vsel %vm221, %v800, %v2868
  %v2910 = vsel %vm221, %v876, %v2870
  %vm2911 = vcmask 130048
  %v2912 = vsel %vm2911, %v2907, %v2880
  %v2913 = vsel %vm2911, %v2908, %v2882
  %v2914 = vsel %vm2911, %v2909, %v2884
  %v2915 = vsel %vm2911, %v2910, %v2886
  %vm2916 = vcmask 195584
  %v2917 = vsel %vm2916, %v2912, %v2896
  %v2918 = vsel %vm2916, %v2913, %v2898
  %v2919 = vsel %vm2916, %v2914, %v2900
  %v2920 = vsel %vm2916, %v2915, %v2902
  %v2921 = vld [vmem:[%s5] sm:$0xff]
  %v2922 = vld [vmem:[%s5 + $0x8] sm:$0xff]
  %v2923 = vld [vmem:[%s5 + $0x10] sm:$0xff]
  %v2924 = vld [vmem:[%s5 + $0x18] sm:$0xff]
  %v2925 = vld [vmem:[%s6] sm:$0x1]
  %v2927 = vlaneseq
  %v2928 = vshrl.u32 %v2927, 7
  %v2929 = vsub.s32 0, %v2928
  %v2930 = vrot.slane %v2925, %v2929
  %v2933 = vsel %vm32, %v2917, 0
  %v2936 = vsel %vm32, %v2918, 0
  %v2939 = vsel %vm32, %v2919, 0
  %v2942 = vsel %vm32, %v2920, 0
  %2944 = vmatprep.subr.mxu0 0.0
  %2945 = vmatpush1.msra.mxu0 %v2921
  %2946 = vmatprep.subr.mxu0 0.0
  %2947 = vmatpush1.msra.mxu0 %v2922
  %2948 = vmatprep.subr.mxu0 0.0
  %2949 = vmatpush1.msra.mxu0 %v2923
  %2950 = vmatprep.subr.mxu0 0.0
  %2951 = vmatpush1.msra.mxu0 %v2924
  %2952 = vmatprep.subr.mxu0 0.0
  %2953 = vmatpush1.msra.mxu0 0.0
  %2954 = vmatprep.subr.mxu0 0.0
  %2955 = vmatpush1.msra.mxu0 0.0
  %2956 = vmatprep.subr.mxu0 0.0
  %2957 = vmatpush1.msra.mxu0 0.0
  %2958 = vmatprep.subr.mxu0 0.0
  %2959 = vmatpush1.msra.mxu0 0.0
  %2960 = vmatprep.subr.mxu0 0.0
  %2961 = vmatpush1.msra.mxu0 0.0
  %2962 = vmatprep.subr.mxu0 0.0
  %2963 = vmatpush1.msra.mxu0 0.0
  %2964 = vmatprep.subr.mxu0 0.0
  %2965 = vmatpush1.msra.mxu0 0.0
  %2966 = vmatprep.subr.mxu0 0.0
  %2967 = vmatpush1.msra.mxu0 0.0
  %2968 = vmatprep.subr.mxu0 0.0
  %2969 = vmatpush1.msra.mxu0 0.0
  %2970 = vmatprep.subr.mxu0 0.0
  %2971 = vmatpush1.msra.mxu0 0.0
  %2972 = vmatprep.subr.mxu0 0.0
  %2973 = vmatpush1.msra.mxu0 0.0
  %2974 = vmatprep.subr.mxu0 0.0
  %2975 = vmatpush1.msra.mxu0 0.0
  %2976 = vmatprep.subr.mxu0 0.0
  %2977 = vmatpush1.msra.mxu0 0.0
  %2978 = vmatprep.subr.mxu0 0.0
  %2979 = vmatpush1.msra.mxu0 0.0
  %2980 = vmatprep.subr.mxu0 0.0
  %2981 = vmatpush1.msra.mxu0 0.0
  %2982 = vmatprep.subr.mxu0 0.0
  %2983 = vmatpush1.msra.mxu0 0.0
  %2984 = vmatprep.subr.mxu0 0.0
  %2985 = vmatpush1.msra.mxu0 0.0
  %2986 = vmatprep.subr.mxu0 0.0
  %2987 = vmatpush1.msra.mxu0 0.0
  %2988 = vmatprep.subr.mxu0 0.0
  %2989 = vmatpush1.msra.mxu0 0.0
  %2990 = vmatprep.subr.mxu0 0.0
  %2991 = vmatpush1.msra.mxu0 0.0
  %2992 = vmatprep.subr.mxu0 0.0
  %2993 = vmatpush1.msra.mxu0 0.0
  %2994 = vmatprep.subr.mxu0 0.0
  %2995 = vmatpush1.msra.mxu0 0.0
  %2996 = vmatprep.subr.mxu0 0.0
  %2997 = vmatpush1.msra.mxu0 0.0
  %2998 = vmatprep.subr.mxu0 0.0
  %2999 = vmatpush1.msra.mxu0 0.0
  %3000 = vmatprep.subr.mxu0 0.0
  %3001 = vmatpush1.msra.mxu0 0.0
  %3002 = vmatprep.subr.mxu0 0.0
  %3003 = vmatpush1.msra.mxu0 0.0
  %3004 = vmatprep.subr.mxu0 0.0
  %3005 = vmatpush1.msra.mxu0 0.0
  %3006 = vmatprep.subr.mxu0 0.0
  %3007 = vmatpush1.msra.mxu0 0.0
  %3008 = vmatprep.mubr.f32.mxu0 0.0
  %3009 = vmatmul.mubr.f32.gmra.mrb[0].mxu0 %v2933
  %v3010 = vpop.f32.mrb[0].mxu0
  %v3011 = vadd.f32 %v2930, %v3010
  %v3012 = vpop.f32.mrb[0].mxu0
  %3013 = vmatprep.mubr.f32.mxu0 0.0
  %3014 = vmatmul.mubr.f32.gmra.mrb[0].mxu0 %v2936
  %v3015 = vpop.f32.mrb[0].mxu0
  %v3016 = vadd.f32 %v2930, %v3015
  %v3017 = vpop.f32.mrb[0].mxu0
  %3018 = vmatprep.mubr.f32.mxu0 0.0
  %3019 = vmatmul.mubr.f32.gmra.mrb[0].mxu0 %v2939
  %v3020 = vpop.f32.mrb[0].mxu0
  %v3021 = vadd.f32 %v2930, %v3020
  %v3022 = vpop.f32.mrb[0].mxu0
  %3023 = vmatprep.mubr.f32.mxu0 0.0
  %3024 = vmatmul.mubr.f32.gmra.mrb[0].mxu0 %v2942
  %v3025 = vpop.f32.mrb[0].mxu0
  %v3026 = vadd.f32 %v2930, %v3025
  %v3027 = vpop.f32.mrb[0].mxu0
  %3028 = vdwg.mxu0
  %v3029 = vadd.f32 %v26, %v3011
  %v3030 = vadd.f32 %v27, %v3016
  %v3031 = vadd.f32 %v28, %v3021
  %v3032 = vadd.f32 %v29, %v3026
  %3033 = vst.msk [vmem:[%s7] sm:$0xff] %vm32, %v3029
  %3034 = vst.msk [vmem:[%s7 + $0x8] sm:$0xff] %vm32, %v3030
  %3035 = vst.msk [vmem:[%s7 + $0x10] sm:$0xff] %vm32, %v3031
  %3036 = vst.msk [vmem:[%s7 + $0x18] sm:$0xff] %vm32, %v3032
  // Predicated region
  $region30: #{clip_layer_attn_time.1} parent=0 // pred_check
    _
  $region31: #{clip_layer_attn_time.1} parent=0 // pred_check_branch
    %3038 = sbr.rel (0) target = $region33
  $region32: #{clip_layer_attn_time.1} parent=0 // pred_region
    _
  $region33: #{clip_layer_attn_time.1} parent=0 // pred_fallthru
    _
  // Predicated region
  $region34: #{clip_layer_attn_time.1} parent=0 // pred_check
    _
  $region35: #{clip_layer_attn_time.1} parent=0 // pred_check_branch
    %3040 = sbr.rel (0) target = $region37
  $region36: #{clip_layer_attn_time.1} parent=0 // pred_region
    _
  $region37: #{clip_layer_attn_time.1} parent=0 // pred_fallthru
    _

</llo_original>
